<compile_context>
chip_gen: v6e
topology: v6e:2x2x1
jax: 0.10.0
libtpu: 0.0.40
codegen_flags: <defaults>
</compile_context>

<pallas_src>
import numpy as np
import jax
import jax.numpy as jnp
from jax.experimental import pallas as pl
from jax.experimental.pallas import tpu as pltpu

ACTIVE_DIM = 4


def sympnet_kernel(z_ref,
                   w1t_ref, b1_ref,
                   w2t_ref, w2_ref, b2_ref,
                   w3t_ref, w3_ref, b3_ref,
                   w4t_ref, w4_ref, b4_ref,
                   w5_ref, w1pc_ref, mI_ref,
                   o_ref, zbuf):
    """H_net forward + analytic tanh backward + folded symplectic step.

    Grid = (batch_blocks [parallel], num_steps [arbitrary]).  Weights are
    VMEM-resident across all steps; z is carried step-to-step in `zbuf`.
    """
    step = pl.program_id(1)

    @pl.when(step == 0)
    def _():
        zbuf[...] = z_ref[...]

    z = zbuf[...]                                                    # (bm, D) f32

    def mm(a, w_ref):
        # MXU matmul; operands optionally bf16 (ref dtype), accumulation f32.
        return jnp.dot(a.astype(w_ref.dtype), w_ref[...],
                       preferred_element_type=jnp.float32)

    # ---- H_net forward (W^T layout: contraction on RHS sublane dim) ----
    h1 = jnp.tanh(mm(z,  w1t_ref) + b1_ref[...])
    h2 = jnp.tanh(mm(h1, w2t_ref) + b2_ref[...])
    h3 = jnp.tanh(mm(h2, w3t_ref) + b3_ref[...])
    h4 = jnp.tanh(mm(h3, w4t_ref) + b4_ref[...])
    # (layer-5 value never used -- only its gradient -- so its forward is skipped)

    # ---- analytic backward: grad of sum(H_net(z)) w.r.t. z (chain of tanh') ----
    g4 = (1.0 - h4 * h4) * w5_ref[...]                               # (bm, H) f32
    g3 = (1.0 - h3 * h3) * mm(g4, w4_ref)
    g2 = (1.0 - h2 * h2) * mm(g3, w3_ref)
    g1 = (1.0 - h1 * h1) * mm(g2, w2_ref)

    # ---- folded symplectic update: o = z @ (I + dt*m) + g1 @ (W1 @ dt*pc) ----
    z_new = (jnp.dot(z, mI_ref[...], preferred_element_type=jnp.float32)
             + mm(g1, w1pc_ref))
    zbuf[...] = z_new

    @pl.when(step == pl.num_programs(1) - 1)
    def _():
        o_ref[...] = z_new.astype(o_ref.dtype)


def extended_sympnet_forward(z, params, dt=0.1, num_steps=1,
                             batch_block=128, use_bf16=False):
    """Apply `num_steps` fused ExtendedSympNet steps to z (B, latent_dim)."""
    B, D = z.shape
    H = params["w1"].shape[0]
    dtf = jnp.float32(dt)

    bm = min(batch_block, B)
    assert B % bm == 0 and (bm % 8 == 0 or bm == B), "batch block must tile B"

    # ---- host-side folding of the tiny symplectic post-processing ----
    Sa = params["S"] - params["S"].T
    dt_q = params["dt_q"][0]
    dt_p = params["dt_p"][0]
    alpha = params["alpha"]

    # grad_z @ pc -> [dHdz2*dt_q (cols 0,1), -dHdz1*dt_p (cols 2,3), 0 ...]
    pc = jnp.zeros((D, D), jnp.float32)
    pc = pc.at[2, 0].set(dt_q).at[3, 1].set(dt_q)
    pc = pc.at[0, 2].set(-dt_p).at[1, 3].set(-dt_p)
    # z @ m -> [alpha*(z_act @ Sa^T)[:, :2], alpha*(z_act @ Sa)[:, 2:4], 0 ...]
    m = jnp.zeros((D, D), jnp.float32)
    m = m.at[:ACTIVE_DIM, 0:2].set(alpha * Sa.T[:, 0:2])
    m = m.at[:ACTIVE_DIM, 2:ACTIVE_DIM].set(alpha * Sa[:, 2:ACTIVE_DIM])

    w1pc = params["w1"] @ (dtf * pc)                 # (H, D) f32
    mI = dtf * m + jnp.eye(D, dtype=jnp.float32)     # (D, D) f32

    # ---- weight layouts: W^T for forward (no XLU transpose), W for backward ----
    mm_dtype = jnp.bfloat16 if use_bf16 else jnp.float32
    w1t = params["w1"].T.astype(mm_dtype)            # (D, H)
    w2t = params["w2"].T.astype(mm_dtype)            # (H, H)
    w3t = params["w3"].T.astype(mm_dtype)
    w4t = params["w4"].T.astype(mm_dtype)
    w2 = params["w2"].astype(mm_dtype)               # (H, H) for backward
    w3 = params["w3"].astype(mm_dtype)
    w4 = params["w4"].astype(mm_dtype)
    # elementwise operands stay f32 (v5e VPU/EUP have no bf16)
    b1, b2, b3, b4 = params["b1"], params["b2"], params["b3"], params["b4"]
    w5 = params["w5"]                                # (1, H) f32

    grid = (B // bm, num_steps)

    def const_spec(shape):
        return pl.BlockSpec(shape, lambda i, s: (0,) * len(shape))

    z_spec = pl.BlockSpec((bm, D), lambda i, s: (i, 0))

    return pl.pallas_call(
        sympnet_kernel,
        out_shape=jax.ShapeDtypeStruct((B, D), jnp.float32),
        grid=grid,
        in_specs=[
            z_spec,
            const_spec((D, H)), const_spec((1, H)),            # w1t, b1
            const_spec((H, H)), const_spec((H, H)), const_spec((1, H)),  # w2t, w2, b2
            const_spec((H, H)), const_spec((H, H)), const_spec((1, H)),  # w3t, w3, b3
            const_spec((H, H)), const_spec((H, H)), const_spec((1, H)),  # w4t, w4, b4
            const_spec((1, H)),                                 # w5
            const_spec((H, D)),                                 # w1 @ dt*pc
            const_spec((D, D)),                                 # I + dt*m
        ],
        out_specs=z_spec,
        scratch_shapes=[pltpu.VMEM((bm, D), jnp.float32)],
        compiler_params=pltpu.CompilerParams(
            dimension_semantics=("parallel", "arbitrary")),
    )(z,
      w1t, b1, w2t, w2, b2, w3t, w3, b3, w4t, w4, b4,
      w5, w1pc, mI)


def init_params(key, latent_dim, hidden_dim):
    """Deterministic synthetic parameters matching the module's shapes."""
    layer_dims = [(hidden_dim, latent_dim), (hidden_dim, hidden_dim),
                  (hidden_dim, hidden_dim), (hidden_dim, hidden_dim),
                  (1, hidden_dim)]
    params = {}
    for i, (out_d, in_d) in enumerate(layer_dims, start=1):
        key, kw, kb = jax.random.split(key, 3)
        bound = 1.0 / np.sqrt(in_d)
        params[f"w{i}"] = jax.random.uniform(kw, (out_d, in_d), jnp.float32, -bound, bound)
        params[f"b{i}"] = jax.random.uniform(kb, (1, out_d), jnp.float32, -bound, bound)
    key, ks, kq, kp = jax.random.split(key, 4)
    params["S"] = 0.1 * jax.random.normal(ks, (ACTIVE_DIM, ACTIVE_DIM), jnp.float32)
    params["dt_q"] = 0.1 * jax.random.normal(kq, (1,), jnp.float32) + 0.5
    params["dt_p"] = 0.1 * jax.random.normal(kp, (1,), jnp.float32) + 0.5
    params["alpha"] = jnp.float32(0.01)
    return params


def reference_forward(z, params, dt=0.1):
    """Pure-JAX reference mirroring the PyTorch forward (uses jax.grad)."""
    w1, b1 = params["w1"], params["b1"]
    w2, b2 = params["w2"], params["b2"]
    w3, b3 = params["w3"], params["b3"]
    w4, b4 = params["w4"], params["b4"]
    w5 = params["w5"]

    def hnet(x):
        h = jnp.tanh(x @ w1.T + b1)
        h = jnp.tanh(h @ w2.T + b2)
        h = jnp.tanh(h @ w3.T + b3)
        h = jnp.tanh(h @ w4.T + b4)
        return h @ w5.T  # final bias does not affect the gradient

    grad = jax.grad(lambda x: jnp.sum(hnet(x)))(z)
    dHdz1 = grad[:, :2]
    dHdz2 = grad[:, 2:ACTIVE_DIM]
    Sa = params["S"] - params["S"].T
    z_active = z[:, :ACTIVE_DIM]
    z_aux = z[:, ACTIVE_DIM:]
    dz1 = dHdz2 * params["dt_q"] + params["alpha"] * (z_active @ Sa.T)[:, :2]
    dz2 = -dHdz1 * params["dt_p"] + params["alpha"] * (z_active @ Sa)[:, 2:]
    z_active_new = z_active + dt * jnp.concatenate([dz1, dz2], axis=1)
    return jnp.concatenate([z_active_new, z_aux], axis=1)


if __name__ == "__main__":
    # latent_dim=8 (active_dim=4 + 4 auxiliary), hidden_dim=256 as in the module.
    # B=256 gives two 128-row batch blocks (fills MXU rows; 'parallel' on v7x).
    B, LATENT_DIM, HIDDEN_DIM = 256, 8, 256
    key = jax.random.PRNGKey(0)
    kz, kparams = jax.random.split(key)
    z = jax.random.normal(kz, (B, LATENT_DIM), jnp.float32)
    params = init_params(kparams, LATENT_DIM, HIDDEN_DIM)

    # single step, f32 matmuls
    out1 = jax.block_until_ready(extended_sympnet_forward(z, params, dt=0.1, num_steps=1))
    ref1 = reference_forward(z, params, dt=0.1)
    np.testing.assert_allclose(np.asarray(out1), np.asarray(ref1), rtol=2e-3, atol=2e-3)

    # four timesteps fused in one pallas_call (weights loaded once)
    out4 = jax.block_until_ready(extended_sympnet_forward(z, params, dt=0.1, num_steps=4))
    ref4 = z
    for _ in range(4):
        ref4 = reference_forward(ref4, params, dt=0.1)
    np.testing.assert_allclose(np.asarray(out4), np.asarray(ref4), rtol=2e-3, atol=2e-3)

    # bf16 matmul operands (v6e/v7x MXU fast path), f32 accumulation & elementwise
    out_bf = jax.block_until_ready(
        extended_sympnet_forward(z, params, dt=0.1, num_steps=1, use_bf16=True))
    np.testing.assert_allclose(np.asarray(out_bf), np.asarray(ref1), rtol=5e-2, atol=5e-2)

    print("KERNEL_OK")
</pallas_src>

<mosaic_0001>
module attributes {stable_mosaic.version = 11 : i64} {
  func.func @sympnet_kernel(%arg0: i32, %arg1: i32, %arg2: memref<128x8xf32, #tpu.memory_space<vmem>>, %arg3: memref<8x256xf32, #tpu.memory_space<vmem>>, %arg4: memref<1x256xf32, #tpu.memory_space<vmem>>, %arg5: memref<256x256xf32, #tpu.memory_space<vmem>>, %arg6: memref<256x256xf32, #tpu.memory_space<vmem>>, %arg7: memref<1x256xf32, #tpu.memory_space<vmem>>, %arg8: memref<256x256xf32, #tpu.memory_space<vmem>>, %arg9: memref<256x256xf32, #tpu.memory_space<vmem>>, %arg10: memref<1x256xf32, #tpu.memory_space<vmem>>, %arg11: memref<256x256xf32, #tpu.memory_space<vmem>>, %arg12: memref<256x256xf32, #tpu.memory_space<vmem>>, %arg13: memref<1x256xf32, #tpu.memory_space<vmem>>, %arg14: memref<1x256xf32, #tpu.memory_space<vmem>>, %arg15: memref<256x8xf32, #tpu.memory_space<vmem>>, %arg16: memref<8x8xf32, #tpu.memory_space<vmem>>, %arg17: memref<128x8xf32, #tpu.memory_space<vmem>>, %arg18: memref<128x8xf32, #tpu.memory_space<vmem>>) attributes {dimension_semantics = [#tpu.dimension_semantics<parallel>, #tpu.dimension_semantics<arbitrary>], iteration_bounds = array<i64: 2, 1>, scalar_prefetch = 0 : i64, scratch_operands = 1 : i64, tpu.core_type = #tpu.core_type<tc>, window_params = [{transform_indices = @transform_0, window_bounds = array<i64: 128, 8>}, {pipeline_mode = #tpu.pipeline_mode<synchronous>, transform_indices = @transform_1, window_bounds = array<i64: 8, 256>}, {pipeline_mode = #tpu.pipeline_mode<synchronous>, transform_indices = @transform_2, window_bounds = array<i64: 1, 256>}, {pipeline_mode = #tpu.pipeline_mode<synchronous>, transform_indices = @transform_3, window_bounds = array<i64: 256, 256>}, {pipeline_mode = #tpu.pipeline_mode<synchronous>, transform_indices = @transform_4, window_bounds = array<i64: 256, 256>}, {pipeline_mode = #tpu.pipeline_mode<synchronous>, transform_indices = @transform_5, window_bounds = array<i64: 1, 256>}, {pipeline_mode = #tpu.pipeline_mode<synchronous>, transform_indices = @transform_6, window_bounds = array<i64: 256, 256>}, {pipeline_mode = #tpu.pipeline_mode<synchronous>, transform_indices = @transform_7, window_bounds = array<i64: 256, 256>}, {pipeline_mode = #tpu.pipeline_mode<synchronous>, transform_indices = @transform_8, window_bounds = array<i64: 1, 256>}, {pipeline_mode = #tpu.pipeline_mode<synchronous>, transform_indices = @transform_9, window_bounds = array<i64: 256, 256>}, {pipeline_mode = #tpu.pipeline_mode<synchronous>, transform_indices = @transform_10, window_bounds = array<i64: 256, 256>}, {pipeline_mode = #tpu.pipeline_mode<synchronous>, transform_indices = @transform_11, window_bounds = array<i64: 1, 256>}, {pipeline_mode = #tpu.pipeline_mode<synchronous>, transform_indices = @transform_12, window_bounds = array<i64: 1, 256>}, {pipeline_mode = #tpu.pipeline_mode<synchronous>, transform_indices = @transform_13, window_bounds = array<i64: 256, 8>}, {pipeline_mode = #tpu.pipeline_mode<synchronous>, transform_indices = @transform_14, window_bounds = array<i64: 8, 8>}, {transform_indices = @transform_15, window_bounds = array<i64: 128, 8>}]} {
    %c0_i32 = arith.constant 0 : i32
    %0 = arith.cmpi eq, %arg1, %c0_i32 : i32
    %1 = arith.extui %0 : i1 to i32
    %c0_i32_0 = arith.constant 0 : i32
    %2 = arith.cmpi ne, %1, %c0_i32_0 : i32
    scf.if %2 {
      %c0_46 = arith.constant 0 : index
      %c0_47 = arith.constant 0 : index
      %61 = vector.load %arg2[%c0_46, %c0_47] : memref<128x8xf32, #tpu.memory_space<vmem>>, vector<128x8xf32>
      %c0_48 = arith.constant 0 : index
      %c0_49 = arith.constant 0 : index
      %62 = vector.load %arg18[%c0_48, %c0_49] : memref<128x8xf32, #tpu.memory_space<vmem>>, vector<128x8xf32>
      tpu.vector_store %arg18[%c0_48, %c0_49], %61 {strides = array<i32>} : memref<128x8xf32, #tpu.memory_space<vmem>>, vector<128x8xf32>,
    } else {
    }
    %c0 = arith.constant 0 : index
    %c0_1 = arith.constant 0 : index
    %3 = vector.load %arg18[%c0, %c0_1] : memref<128x8xf32, #tpu.memory_space<vmem>>, vector<128x8xf32>
    %c0_2 = arith.constant 0 : index
    %c0_3 = arith.constant 0 : index
    %4 = vector.load %arg3[%c0_2, %c0_3] : memref<8x256xf32, #tpu.memory_space<vmem>>, vector<8x256xf32>
    %cst = arith.constant dense<0.000000e+00> : vector<128x256xf32>
    %5 = tpu.matmul %3, %4, %cst {dimension_numbers = #tpu.dot_dimension_numbers<[1], [0], [0], [1], [0, 0, 1, 1], [], []>} : vector<128x8xf32>, vector<8x256xf32>, vector<128x256xf32> -> vector<128x256xf32>
    %c0_4 = arith.constant 0 : index
    %c0_5 = arith.constant 0 : index
    %6 = vector.load %arg4[%c0_4, %c0_5] : memref<1x256xf32, #tpu.memory_space<vmem>>, vector<1x256xf32>
    %7 = vector.broadcast %6 : vector<1x256xf32> to vector<128x256xf32>
    %8 = arith.addf %5, %7 : vector<128x256xf32>
    %9 = math.tanh %8 : vector<128x256xf32>
    %c0_6 = arith.constant 0 : index
    %c0_7 = arith.constant 0 : index
    %10 = vector.load %arg5[%c0_6, %c0_7] : memref<256x256xf32, #tpu.memory_space<vmem>>, vector<256x256xf32>
    %cst_8 = arith.constant dense<0.000000e+00> : vector<128x256xf32>
    %11 = tpu.matmul %9, %10, %cst_8 {dimension_numbers = #tpu.dot_dimension_numbers<[1], [0], [0], [1], [0, 0, 1, 1], [], []>} : vector<128x256xf32>, vector<256x256xf32>, vector<128x256xf32> -> vector<128x256xf32>
    %c0_9 = arith.constant 0 : index
    %c0_10 = arith.constant 0 : index
    %12 = vector.load %arg7[%c0_9, %c0_10] : memref<1x256xf32, #tpu.memory_space<vmem>>, vector<1x256xf32>
    %13 = vector.broadcast %12 : vector<1x256xf32> to vector<128x256xf32>
    %14 = arith.addf %11, %13 : vector<128x256xf32>
    %15 = math.tanh %14 : vector<128x256xf32>
    %c0_11 = arith.constant 0 : index
    %c0_12 = arith.constant 0 : index
    %16 = vector.load %arg8[%c0_11, %c0_12] : memref<256x256xf32, #tpu.memory_space<vmem>>, vector<256x256xf32>
    %cst_13 = arith.constant dense<0.000000e+00> : vector<128x256xf32>
    %17 = tpu.matmul %15, %16, %cst_13 {dimension_numbers = #tpu.dot_dimension_numbers<[1], [0], [0], [1], [0, 0, 1, 1], [], []>} : vector<128x256xf32>, vector<256x256xf32>, vector<128x256xf32> -> vector<128x256xf32>
    %c0_14 = arith.constant 0 : index
    %c0_15 = arith.constant 0 : index
    %18 = vector.load %arg10[%c0_14, %c0_15] : memref<1x256xf32, #tpu.memory_space<vmem>>, vector<1x256xf32>
    %19 = vector.broadcast %18 : vector<1x256xf32> to vector<128x256xf32>
    %20 = arith.addf %17, %19 : vector<128x256xf32>
    %21 = math.tanh %20 : vector<128x256xf32>
    %c0_16 = arith.constant 0 : index
    %c0_17 = arith.constant 0 : index
    %22 = vector.load %arg11[%c0_16, %c0_17] : memref<256x256xf32, #tpu.memory_space<vmem>>, vector<256x256xf32>
    %cst_18 = arith.constant dense<0.000000e+00> : vector<128x256xf32>
    %23 = tpu.matmul %21, %22, %cst_18 {dimension_numbers = #tpu.dot_dimension_numbers<[1], [0], [0], [1], [0, 0, 1, 1], [], []>} : vector<128x256xf32>, vector<256x256xf32>, vector<128x256xf32> -> vector<128x256xf32>
    %c0_19 = arith.constant 0 : index
    %c0_20 = arith.constant 0 : index
    %24 = vector.load %arg13[%c0_19, %c0_20] : memref<1x256xf32, #tpu.memory_space<vmem>>, vector<1x256xf32>
    %25 = vector.broadcast %24 : vector<1x256xf32> to vector<128x256xf32>
    %26 = arith.addf %23, %25 : vector<128x256xf32>
    %27 = math.tanh %26 : vector<128x256xf32>
    %28 = arith.mulf %27, %27 : vector<128x256xf32>
    %cst_21 = arith.constant 1.000000e+00 : f32
    %29 = vector.broadcast %cst_21 : f32 to vector<128x256xf32>
    %30 = arith.subf %29, %28 : vector<128x256xf32>
    %c0_22 = arith.constant 0 : index
    %c0_23 = arith.constant 0 : index
    %31 = vector.load %arg14[%c0_22, %c0_23] : memref<1x256xf32, #tpu.memory_space<vmem>>, vector<1x256xf32>
    %32 = vector.broadcast %31 : vector<1x256xf32> to vector<128x256xf32>
    %33 = arith.mulf %30, %32 : vector<128x256xf32>
    %34 = arith.mulf %21, %21 : vector<128x256xf32>
    %cst_24 = arith.constant 1.000000e+00 : f32
    %35 = vector.broadcast %cst_24 : f32 to vector<128x256xf32>
    %36 = arith.subf %35, %34 : vector<128x256xf32>
    %c0_25 = arith.constant 0 : index
    %c0_26 = arith.constant 0 : index
    %37 = vector.load %arg12[%c0_25, %c0_26] : memref<256x256xf32, #tpu.memory_space<vmem>>, vector<256x256xf32>
    %cst_27 = arith.constant dense<0.000000e+00> : vector<128x256xf32>
    %38 = tpu.matmul %33, %37, %cst_27 {dimension_numbers = #tpu.dot_dimension_numbers<[1], [0], [0], [1], [0, 0, 1, 1], [], []>} : vector<128x256xf32>, vector<256x256xf32>, vector<128x256xf32> -> vector<128x256xf32>
    %39 = arith.mulf %36, %38 : vector<128x256xf32>
    %40 = arith.mulf %15, %15 : vector<128x256xf32>
    %cst_28 = arith.constant 1.000000e+00 : f32
    %41 = vector.broadcast %cst_28 : f32 to vector<128x256xf32>
    %42 = arith.subf %41, %40 : vector<128x256xf32>
    %c0_29 = arith.constant 0 : index
    %c0_30 = arith.constant 0 : index
    %43 = vector.load %arg9[%c0_29, %c0_30] : memref<256x256xf32, #tpu.memory_space<vmem>>, vector<256x256xf32>
    %cst_31 = arith.constant dense<0.000000e+00> : vector<128x256xf32>
    %44 = tpu.matmul %39, %43, %cst_31 {dimension_numbers = #tpu.dot_dimension_numbers<[1], [0], [0], [1], [0, 0, 1, 1], [], []>} : vector<128x256xf32>, vector<256x256xf32>, vector<128x256xf32> -> vector<128x256xf32>
    %45 = arith.mulf %42, %44 : vector<128x256xf32>
    %46 = arith.mulf %9, %9 : vector<128x256xf32>
    %cst_32 = arith.constant 1.000000e+00 : f32
    %47 = vector.broadcast %cst_32 : f32 to vector<128x256xf32>
    %48 = arith.subf %47, %46 : vector<128x256xf32>
    %c0_33 = arith.constant 0 : index
    %c0_34 = arith.constant 0 : index
    %49 = vector.load %arg6[%c0_33, %c0_34] : memref<256x256xf32, #tpu.memory_space<vmem>>, vector<256x256xf32>
    %cst_35 = arith.constant dense<0.000000e+00> : vector<128x256xf32>
    %50 = tpu.matmul %45, %49, %cst_35 {dimension_numbers = #tpu.dot_dimension_numbers<[1], [0], [0], [1], [0, 0, 1, 1], [], []>} : vector<128x256xf32>, vector<256x256xf32>, vector<128x256xf32> -> vector<128x256xf32>
    %51 = arith.mulf %48, %50 : vector<128x256xf32>
    %c0_36 = arith.constant 0 : index
    %c0_37 = arith.constant 0 : index
    %52 = vector.load %arg16[%c0_36, %c0_37] : memref<8x8xf32, #tpu.memory_space<vmem>>, vector<8x8xf32>
    %cst_38 = arith.constant dense<0.000000e+00> : vector<128x8xf32>
    %53 = tpu.matmul %3, %52, %cst_38 {dimension_numbers = #tpu.dot_dimension_numbers<[1], [0], [0], [1], [0, 0, 1, 1], [], []>} : vector<128x8xf32>, vector<8x8xf32>, vector<128x8xf32> -> vector<128x8xf32>
    %c0_39 = arith.constant 0 : index
    %c0_40 = arith.constant 0 : index
    %54 = vector.load %arg15[%c0_39, %c0_40] : memref<256x8xf32, #tpu.memory_space<vmem>>, vector<256x8xf32>
    %cst_41 = arith.constant dense<0.000000e+00> : vector<128x8xf32>
    %55 = tpu.matmul %51, %54, %cst_41 {dimension_numbers = #tpu.dot_dimension_numbers<[1], [0], [0], [1], [0, 0, 1, 1], [], []>} : vector<128x256xf32>, vector<256x8xf32>, vector<128x8xf32> -> vector<128x8xf32>
    %56 = arith.addf %53, %55 : vector<128x8xf32>
    %c0_42 = arith.constant 0 : index
    %c0_43 = arith.constant 0 : index
    %57 = vector.load %arg18[%c0_42, %c0_43] : memref<128x8xf32, #tpu.memory_space<vmem>>, vector<128x8xf32>
    tpu.vector_store %arg18[%c0_42, %c0_43], %56 {strides = array<i32>} : memref<128x8xf32, #tpu.memory_space<vmem>>, vector<128x8xf32>,
    %c0_i32_44 = arith.constant 0 : i32
    %58 = arith.cmpi eq, %arg1, %c0_i32_44 : i32
    %59 = arith.extui %58 : i1 to i32
    %c0_i32_45 = arith.constant 0 : i32
    %60 = arith.cmpi ne, %59, %c0_i32_45 : i32
    scf.if %60 {
      %c0_46 = arith.constant 0 : index
      %c0_47 = arith.constant 0 : index
      %61 = vector.load %arg17[%c0_46, %c0_47] : memref<128x8xf32, #tpu.memory_space<vmem>>, vector<128x8xf32>
      tpu.vector_store %arg17[%c0_46, %c0_47], %56 {strides = array<i32>} : memref<128x8xf32, #tpu.memory_space<vmem>>, vector<128x8xf32>,
    } else {
    }
    return
  }
  func.func @transform_0(%arg0: i32, %arg1: i32) -> (i32, i32) {
    %c0_i32 = arith.constant 0 : i32
    %c0_i32_0 = arith.constant 0 : i32
    return %arg0, %c0_i32 : i32, i32
  }
  func.func @transform_1(%arg0: i32, %arg1: i32) -> (i32, i32) {
    %c0_i32 = arith.constant 0 : i32
    %c0_i32_0 = arith.constant 0 : i32
    %c0_i32_1 = arith.constant 0 : i32
    return %c0_i32, %c0_i32_0 : i32, i32
  }
  func.func @transform_2(%arg0: i32, %arg1: i32) -> (i32, i32) {
    %c0_i32 = arith.constant 0 : i32
    %c0_i32_0 = arith.constant 0 : i32
    %c0_i32_1 = arith.constant 0 : i32
    return %c0_i32, %c0_i32_0 : i32, i32
  }
  func.func @transform_3(%arg0: i32, %arg1: i32) -> (i32, i32) {
    %c0_i32 = arith.constant 0 : i32
    %c0_i32_0 = arith.constant 0 : i32
    %c0_i32_1 = arith.constant 0 : i32
    return %c0_i32, %c0_i32_0 : i32, i32
  }
  func.func @transform_4(%arg0: i32, %arg1: i32) -> (i32, i32) {
    %c0_i32 = arith.constant 0 : i32
    %c0_i32_0 = arith.constant 0 : i32
    %c0_i32_1 = arith.constant 0 : i32
    return %c0_i32, %c0_i32_0 : i32, i32
  }
  func.func @transform_5(%arg0: i32, %arg1: i32) -> (i32, i32) {
    %c0_i32 = arith.constant 0 : i32
    %c0_i32_0 = arith.constant 0 : i32
    %c0_i32_1 = arith.constant 0 : i32
    return %c0_i32, %c0_i32_0 : i32, i32
  }
  func.func @transform_6(%arg0: i32, %arg1: i32) -> (i32, i32) {
    %c0_i32 = arith.constant 0 : i32
    %c0_i32_0 = arith.constant 0 : i32
    %c0_i32_1 = arith.constant 0 : i32
    return %c0_i32, %c0_i32_0 : i32, i32
  }
  func.func @transform_7(%arg0: i32, %arg1: i32) -> (i32, i32) {
    %c0_i32 = arith.constant 0 : i32
    %c0_i32_0 = arith.constant 0 : i32
    %c0_i32_1 = arith.constant 0 : i32
    return %c0_i32, %c0_i32_0 : i32, i32
  }
  func.func @transform_8(%arg0: i32, %arg1: i32) -> (i32, i32) {
    %c0_i32 = arith.constant 0 : i32
    %c0_i32_0 = arith.constant 0 : i32
    %c0_i32_1 = arith.constant 0 : i32
    return %c0_i32, %c0_i32_0 : i32, i32
  }
  func.func @transform_9(%arg0: i32, %arg1: i32) -> (i32, i32) {
    %c0_i32 = arith.constant 0 : i32
    %c0_i32_0 = arith.constant 0 : i32
    %c0_i32_1 = arith.constant 0 : i32
    return %c0_i32, %c0_i32_0 : i32, i32
  }
  func.func @transform_10(%arg0: i32, %arg1: i32) -> (i32, i32) {
    %c0_i32 = arith.constant 0 : i32
    %c0_i32_0 = arith.constant 0 : i32
    %c0_i32_1 = arith.constant 0 : i32
    return %c0_i32, %c0_i32_0 : i32, i32
  }
  func.func @transform_11(%arg0: i32, %arg1: i32) -> (i32, i32) {
    %c0_i32 = arith.constant 0 : i32
    %c0_i32_0 = arith.constant 0 : i32
    %c0_i32_1 = arith.constant 0 : i32
    return %c0_i32, %c0_i32_0 : i32, i32
  }
  func.func @transform_12(%arg0: i32, %arg1: i32) -> (i32, i32) {
    %c0_i32 = arith.constant 0 : i32
    %c0_i32_0 = arith.constant 0 : i32
    %c0_i32_1 = arith.constant 0 : i32
    return %c0_i32, %c0_i32_0 : i32, i32
  }
  func.func @transform_13(%arg0: i32, %arg1: i32) -> (i32, i32) {
    %c0_i32 = arith.constant 0 : i32
    %c0_i32_0 = arith.constant 0 : i32
    %c0_i32_1 = arith.constant 0 : i32
    return %c0_i32, %c0_i32_0 : i32, i32
  }
  func.func @transform_14(%arg0: i32, %arg1: i32) -> (i32, i32) {
    %c0_i32 = arith.constant 0 : i32
    %c0_i32_0 = arith.constant 0 : i32
    %c0_i32_1 = arith.constant 0 : i32
    return %c0_i32, %c0_i32_0 : i32, i32
  }
  func.func @transform_15(%arg0: i32, %arg1: i32) -> (i32, i32) {
    %c0_i32 = arith.constant 0 : i32
    %c0_i32_0 = arith.constant 0 : i32
    return %arg0, %c0_i32 : i32, i32
  }
}

</mosaic_0001>

<llo_original>
// kernel: tpu_custom_call.1
$region0: #{tpu_custom_call.1}
  #allocation0 [shape = 'u32[]', space=smem, size = 0x4, offset = 0x4, fixed_abs, tag = 'smem constant byte address 0x4 - core index']
  #allocation1 [shape = 'u32[144,128]{1,0:T(1,128)}', space=vmem, size = 0x12000, scoped, tag = 'internal scratch']
  #allocation2 [shape = 'f32[128,8]{1,0:T(8,128)}', space=vmem, size = 0x10000, scoped, tag = 'scratch operand']
  %s0 = inlined_call_operand.vmem [shape: f32[256,8], index: 0, kind: input, shape index: {}]
  %s1 = inlined_call_operand.vmem [shape: f32[8,256], index: 1, kind: input, shape index: {}]
  %s2 = inlined_call_operand.vmem [shape: f32[1,256], index: 2, kind: input, shape index: {}]
  %s3 = inlined_call_operand.vmem [shape: f32[256,256], index: 3, kind: input, shape index: {}]
  %s4 = inlined_call_operand.hbm [shape: f32[256,256], index: 4, kind: input, shape index: {}]
  %s5 = inlined_call_operand.vmem [shape: f32[1,256], index: 5, kind: input, shape index: {}]
  %s6 = inlined_call_operand.hbm [shape: f32[256,256], index: 6, kind: input, shape index: {}]
  %s7 = inlined_call_operand.hbm [shape: f32[256,256], index: 7, kind: input, shape index: {}]
  %s8 = inlined_call_operand.vmem [shape: f32[1,256], index: 8, kind: input, shape index: {}]
  %s9 = inlined_call_operand.hbm [shape: f32[256,256], index: 9, kind: input, shape index: {}]
  %s10 = inlined_call_operand.hbm [shape: f32[256,256], index: 10, kind: input, shape index: {}]
  %s11 = inlined_call_operand.hbm [shape: f32[1,256], index: 11, kind: input, shape index: {}]
  %s12 = inlined_call_operand.vmem [shape: f32[1,256], index: 12, kind: input, shape index: {}]
  %s13 = inlined_call_operand.vmem [shape: f32[256,8], index: 13, kind: input, shape index: {}]
  %s14 = inlined_call_operand.vmem [shape: f32[8,8], index: 14, kind: input, shape index: {}]
  %s15 = inlined_call_operand.vmem [shape: f32[256,8], index: 15, kind: output, shape index: {}]
  %s16 = sld [smem:[#allocation0]]
  $region125: #{tpu_custom_call.1} parent=0
    _
  %s18 = ssub.s32 1, %s16
  %s19 = scalar_select 0, %s18, %s16
  $region1: #{tpu_custom_call.1} parent=0
    #allocation3 [shape = 'u8[262144]{0}', space=vmem, size = 0x40000, scoped, tag = 'input window, operand 4, single buffered']
    #allocation4 [shape = 's32[2]{0}', space=sflag, size = 0x8, scoped, tag = 'scoped memory for tpu_custom_call.1']
    #allocation5 [shape = 'u8[262144]{0}', space=vmem, size = 0x40000, scoped, tag = 'input window, operand 6, single buffered']
    #allocation6 [shape = 's32[1]{0}', space=sflag, size = 0x4, scoped, tag = 'scoped memory for tpu_custom_call.1']
    #allocation7 [shape = 'u8[262144]{0}', space=vmem, size = 0x40000, scoped, tag = 'input window, operand 7, single buffered']
    #allocation8 [shape = 'u8[262144]{0}', space=vmem, size = 0x40000, scoped, tag = 'input window, operand 9, single buffered']
    #allocation9 [shape = 's32[1]{0}', space=sflag, size = 0x4, scoped, tag = 'scoped memory for tpu_custom_call.1']
    #allocation10 [shape = 'u8[262144]{0}', space=vmem, size = 0x40000, scoped, tag = 'input window, operand 10, single buffered']
    #allocation11 [shape = 'u8[1024]{0}', space=vmem, size = 0x400, scoped, tag = 'input window, operand 11, single buffered']
    #allocation12 [shape = 's32[1]{0}', space=sflag, size = 0x4, scoped, tag = 'scoped memory for tpu_custom_call.1']
    %20 = vsyncpa [#allocation4], 0
    %21 = vsyncpa [#allocation6], 0
    %22 = vsyncpa [#allocation9], 0
    %23 = vsyncpa [#allocation12], 0
    loop: start=0, step=1, limit=4
    $region2: #{tpu_custom_call.1} parent=1 // loop_pre_header
      _
    $region3: #{tpu_custom_call.1} parent=1 // loop_header
      %s25 = sphi 0, %s29
      %p26 = scmp.ge.s32.totalorder %s25, 4
      %s32 = sphi 0, %s44
      %s33 = sphi 0, %s40
      %s34 = sphi 0, %s32
      %s35 = sphi 0, %s33
      %s36 = sphi 0, %s34
      %s37 = sphi 0, %s35
      %s47 = sphi 0, %s49
      %s50 = sphi 0, %s47
      %s51 = sphi 0, %s50
      %s67 = sphi 0, %s51
      %s71 = sphi 0, %s71
      %s73 = sphi 0, %s71
      %s74 = sphi 0, %s73
      %s88 = sphi 0, %s74
      %s92 = sphi 0, %s92
      %s94 = sphi 0, %s92
      %s95 = sphi 0, %s94
      %s109 = sphi 0, %s95
      %s113 = sphi 0, %s113
      %s115 = sphi 0, %s113
      %s116 = sphi 0, %s115
      %s130 = sphi 0, %s116
      %s134 = sphi 0, %s134
      %s136 = sphi 0, %s134
      %s137 = sphi 0, %s136
      %s151 = sphi 0, %s137
      %s155 = sphi 0, %s155
      %s157 = sphi 0, %s155
      %s158 = sphi 0, %s157
      %s172 = sphi 0, %s158
      %s176 = sphi 0, %s176
      %s178 = sphi 0, %s176
      %s179 = sphi 0, %s178
      %s193 = sphi 0, %s179
      %s197 = sphi 0, %s197
      %s199 = sphi 0, %s197
      %s200 = sphi 0, %s199
      %s214 = sphi 0, %s200
      %s218 = sphi 0, %s218
      %s220 = sphi 0, %s218
      %s221 = sphi 0, %s220
      %s235 = sphi 0, %s221
      %s239 = sphi 0, %s239
      %s241 = sphi 0, %s239
      %s242 = sphi 0, %s241
      %s256 = sphi 0, %s242
      %s260 = sphi 0, %s260
      %s262 = sphi 0, %s260
      %s263 = sphi 0, %s262
      %s277 = sphi 0, %s263
      %s281 = sphi 0, %s281
      %s283 = sphi 0, %s281
      %s284 = sphi 0, %s283
      %s298 = sphi 0, %s284
      %s302 = sphi 0, %s302
      %s304 = sphi 0, %s302
      %s305 = sphi 0, %s304
      %s319 = sphi 0, %s305
      %s323 = sphi 0, %s323
      %s325 = sphi 0, %s323
      %s326 = sphi 0, %s325
      %s340 = sphi 0, %s326
      %s344 = sphi 0, %s344
      %s346 = sphi 0, %s344
      %s347 = sphi 0, %s346
      %s361 = sphi 0, %s347
      %s367 = sphi 0, %s369
      %s370 = sphi 0, %s367
      %s371 = sphi 0, %s370
      %s387 = sphi 0, %s371
    $region4: #{tpu_custom_call.1} parent=1 // loop_header_branch
      %28 = sbr.rel (%p26) target = $region8
    $region5: #{tpu_custom_call.1} parent=1 // loop_body
      %s30 = ssub.s32 %s25, 1
      %s31 = ssub.s32 %s25, 2
      %s38 = sadd.s32 1, %s33
      %p39 = scmp.ge.s32.totalorder %s38, 1
      %s40 = scalar_select %p39, 0, %s38
      %s41 = sadd.s32 1, %s32
      %s42 = scalar_select %p39, %s41, %s32
      %p43 = scmp.ge.s32.totalorder %s42, 2
      %s44 = scalar_select %p43, 0, %s42
      %s45 = ssub.s32 %s32, %s44
      %p46 = scmp.eq.s32.totalorder %s45, 0
      %s48 = sadd.s32 %s47, 1
      %s49 = scalar_select %p46, %s47, %s48
      %p52 = pneg %p46
      %p53 = scmp.eq.s32.totalorder %s25, 1
      %p54 = por %p52, %p53
      %p55 = scmp.ne.s32.totalorder %s47, %s50
      %p56 = scmp.eq.s32.totalorder %s25, 0
      %p57 = por %p55, %p56
      %p58 = scmp.ne.s32.totalorder %s47, %s50
      %p59 = scmp.eq.s32.totalorder %s30, 1
      %p60 = por %p58, %p59
      %p61 = scmp.ne.s32.totalorder %s50, %s51
      %p62 = scmp.eq.s32.totalorder %s30, 0
      %p63 = por %p61, %p62
      %p64 = scmp.ne.s32.totalorder %s50, %s51
      %p65 = scmp.eq.s32.totalorder %s31, 1
      %p66 = por %p64, %p65
      %p68 = scmp.ne.s32.totalorder %s51, %s67
      %p69 = scmp.eq.s32.totalorder %s31, 0
      %p70 = por %p68, %p69
      %s72 = sadd.s32 %s71, 1
      %p75 = scmp.eq.s32.totalorder %s25, 1
      %p76 = scmp.ne.s32.totalorder %s71, %s73
      %p77 = scmp.eq.s32.totalorder %s25, 0
      %p78 = por %p76, %p77
      %p79 = scmp.ne.s32.totalorder %s71, %s73
      %p80 = scmp.eq.s32.totalorder %s30, 1
      %p81 = por %p79, %p80
      %p82 = scmp.ne.s32.totalorder %s73, %s74
      %p83 = scmp.eq.s32.totalorder %s30, 0
      %p84 = por %p82, %p83
      %p85 = scmp.ne.s32.totalorder %s73, %s74
      %p86 = scmp.eq.s32.totalorder %s31, 1
      %p87 = por %p85, %p86
      %p89 = scmp.ne.s32.totalorder %s74, %s88
      %p90 = scmp.eq.s32.totalorder %s31, 0
      %p91 = por %p89, %p90
      %s93 = sadd.s32 %s92, 1
      %p96 = scmp.eq.s32.totalorder %s25, 1
      %p97 = scmp.ne.s32.totalorder %s92, %s94
      %p98 = scmp.eq.s32.totalorder %s25, 0
      %p99 = por %p97, %p98
      %p100 = scmp.ne.s32.totalorder %s92, %s94
      %p101 = scmp.eq.s32.totalorder %s30, 1
      %p102 = por %p100, %p101
      %p103 = scmp.ne.s32.totalorder %s94, %s95
      %p104 = scmp.eq.s32.totalorder %s30, 0
      %p105 = por %p103, %p104
      %p106 = scmp.ne.s32.totalorder %s94, %s95
      %p107 = scmp.eq.s32.totalorder %s31, 1
      %p108 = por %p106, %p107
      %p110 = scmp.ne.s32.totalorder %s95, %s109
      %p111 = scmp.eq.s32.totalorder %s31, 0
      %p112 = por %p110, %p111
      %s114 = sadd.s32 %s113, 1
      %p117 = scmp.eq.s32.totalorder %s25, 1
      %p118 = scmp.ne.s32.totalorder %s113, %s115
      %p119 = scmp.eq.s32.totalorder %s25, 0
      %p120 = por %p118, %p119
      %p121 = scmp.ne.s32.totalorder %s113, %s115
      %p122 = scmp.eq.s32.totalorder %s30, 1
      %p123 = por %p121, %p122
      %p124 = scmp.ne.s32.totalorder %s115, %s116
      %p125 = scmp.eq.s32.totalorder %s30, 0
      %p126 = por %p124, %p125
      %p127 = scmp.ne.s32.totalorder %s115, %s116
      %p128 = scmp.eq.s32.totalorder %s31, 1
      %p129 = por %p127, %p128
      %p131 = scmp.ne.s32.totalorder %s116, %s130
      %p132 = scmp.eq.s32.totalorder %s31, 0
      %p133 = por %p131, %p132
      %s135 = sadd.s32 %s134, 1
      %p138 = scmp.eq.s32.totalorder %s25, 1
      %p139 = scmp.ne.s32.totalorder %s134, %s136
      %p140 = scmp.eq.s32.totalorder %s25, 0
      %p141 = por %p139, %p140
      %p142 = scmp.ne.s32.totalorder %s134, %s136
      %p143 = scmp.eq.s32.totalorder %s30, 1
      %p144 = por %p142, %p143
      %p145 = scmp.ne.s32.totalorder %s136, %s137
      %p146 = scmp.eq.s32.totalorder %s30, 0
      %p147 = por %p145, %p146
      %p148 = scmp.ne.s32.totalorder %s136, %s137
      %p149 = scmp.eq.s32.totalorder %s31, 1
      %p150 = por %p148, %p149
      %p152 = scmp.ne.s32.totalorder %s137, %s151
      %p153 = scmp.eq.s32.totalorder %s31, 0
      %p154 = por %p152, %p153
      %s156 = sadd.s32 %s155, 1
      %p159 = scmp.eq.s32.totalorder %s25, 1
      %p160 = scmp.ne.s32.totalorder %s155, %s157
      %p161 = scmp.eq.s32.totalorder %s25, 0
      %p162 = por %p160, %p161
      %p163 = scmp.ne.s32.totalorder %s155, %s157
      %p164 = scmp.eq.s32.totalorder %s30, 1
      %p165 = por %p163, %p164
      %p166 = scmp.ne.s32.totalorder %s157, %s158
      %p167 = scmp.eq.s32.totalorder %s30, 0
      %p168 = por %p166, %p167
      %p169 = scmp.ne.s32.totalorder %s157, %s158
      %p170 = scmp.eq.s32.totalorder %s31, 1
      %p171 = por %p169, %p170
      %p173 = scmp.ne.s32.totalorder %s158, %s172
      %p174 = scmp.eq.s32.totalorder %s31, 0
      %p175 = por %p173, %p174
      %s177 = sadd.s32 %s176, 1
      %p180 = scmp.eq.s32.totalorder %s25, 1
      %p181 = scmp.ne.s32.totalorder %s176, %s178
      %p182 = scmp.eq.s32.totalorder %s25, 0
      %p183 = por %p181, %p182
      %p184 = scmp.ne.s32.totalorder %s176, %s178
      %p185 = scmp.eq.s32.totalorder %s30, 1
      %p186 = por %p184, %p185
      %p187 = scmp.ne.s32.totalorder %s178, %s179
      %p188 = scmp.eq.s32.totalorder %s30, 0
      %p189 = por %p187, %p188
      %p190 = scmp.ne.s32.totalorder %s178, %s179
      %p191 = scmp.eq.s32.totalorder %s31, 1
      %p192 = por %p190, %p191
      %p194 = scmp.ne.s32.totalorder %s179, %s193
      %p195 = scmp.eq.s32.totalorder %s31, 0
      %p196 = por %p194, %p195
      %s198 = sadd.s32 %s197, 1
      %p201 = scmp.eq.s32.totalorder %s25, 1
      %p202 = scmp.ne.s32.totalorder %s197, %s199
      %p203 = scmp.eq.s32.totalorder %s25, 0
      %p204 = por %p202, %p203
      %p205 = scmp.ne.s32.totalorder %s197, %s199
      %p206 = scmp.eq.s32.totalorder %s30, 1
      %p207 = por %p205, %p206
      %p208 = scmp.ne.s32.totalorder %s199, %s200
      %p209 = scmp.eq.s32.totalorder %s30, 0
      %p210 = por %p208, %p209
      %p211 = scmp.ne.s32.totalorder %s199, %s200
      %p212 = scmp.eq.s32.totalorder %s31, 1
      %p213 = por %p211, %p212
      %p215 = scmp.ne.s32.totalorder %s200, %s214
      %p216 = scmp.eq.s32.totalorder %s31, 0
      %p217 = por %p215, %p216
      %s219 = sadd.s32 %s218, 1
      %p222 = scmp.eq.s32.totalorder %s25, 1
      %p223 = scmp.ne.s32.totalorder %s218, %s220
      %p224 = scmp.eq.s32.totalorder %s25, 0
      %p225 = por %p223, %p224
      %p226 = scmp.ne.s32.totalorder %s218, %s220
      %p227 = scmp.eq.s32.totalorder %s30, 1
      %p228 = por %p226, %p227
      %p229 = scmp.ne.s32.totalorder %s220, %s221
      %p230 = scmp.eq.s32.totalorder %s30, 0
      %p231 = por %p229, %p230
      %p232 = scmp.ne.s32.totalorder %s220, %s221
      %p233 = scmp.eq.s32.totalorder %s31, 1
      %p234 = por %p232, %p233
      %p236 = scmp.ne.s32.totalorder %s221, %s235
      %p237 = scmp.eq.s32.totalorder %s31, 0
      %p238 = por %p236, %p237
      %s240 = sadd.s32 %s239, 1
      %p243 = scmp.eq.s32.totalorder %s25, 1
      %p244 = scmp.ne.s32.totalorder %s239, %s241
      %p245 = scmp.eq.s32.totalorder %s25, 0
      %p246 = por %p244, %p245
      %p247 = scmp.ne.s32.totalorder %s239, %s241
      %p248 = scmp.eq.s32.totalorder %s30, 1
      %p249 = por %p247, %p248
      %p250 = scmp.ne.s32.totalorder %s241, %s242
      %p251 = scmp.eq.s32.totalorder %s30, 0
      %p252 = por %p250, %p251
      %p253 = scmp.ne.s32.totalorder %s241, %s242
      %p254 = scmp.eq.s32.totalorder %s31, 1
      %p255 = por %p253, %p254
      %p257 = scmp.ne.s32.totalorder %s242, %s256
      %p258 = scmp.eq.s32.totalorder %s31, 0
      %p259 = por %p257, %p258
      %s261 = sadd.s32 %s260, 1
      %p264 = scmp.eq.s32.totalorder %s25, 1
      %p265 = scmp.ne.s32.totalorder %s260, %s262
      %p266 = scmp.eq.s32.totalorder %s25, 0
      %p267 = por %p265, %p266
      %p268 = scmp.ne.s32.totalorder %s260, %s262
      %p269 = scmp.eq.s32.totalorder %s30, 1
      %p270 = por %p268, %p269
      %p271 = scmp.ne.s32.totalorder %s262, %s263
      %p272 = scmp.eq.s32.totalorder %s30, 0
      %p273 = por %p271, %p272
      %p274 = scmp.ne.s32.totalorder %s262, %s263
      %p275 = scmp.eq.s32.totalorder %s31, 1
      %p276 = por %p274, %p275
      %p278 = scmp.ne.s32.totalorder %s263, %s277
      %p279 = scmp.eq.s32.totalorder %s31, 0
      %p280 = por %p278, %p279
      %s282 = sadd.s32 %s281, 1
      %p285 = scmp.eq.s32.totalorder %s25, 1
      %p286 = scmp.ne.s32.totalorder %s281, %s283
      %p287 = scmp.eq.s32.totalorder %s25, 0
      %p288 = por %p286, %p287
      %p289 = scmp.ne.s32.totalorder %s281, %s283
      %p290 = scmp.eq.s32.totalorder %s30, 1
      %p291 = por %p289, %p290
      %p292 = scmp.ne.s32.totalorder %s283, %s284
      %p293 = scmp.eq.s32.totalorder %s30, 0
      %p294 = por %p292, %p293
      %p295 = scmp.ne.s32.totalorder %s283, %s284
      %p296 = scmp.eq.s32.totalorder %s31, 1
      %p297 = por %p295, %p296
      %p299 = scmp.ne.s32.totalorder %s284, %s298
      %p300 = scmp.eq.s32.totalorder %s31, 0
      %p301 = por %p299, %p300
      %s303 = sadd.s32 %s302, 1
      %p306 = scmp.eq.s32.totalorder %s25, 1
      %p307 = scmp.ne.s32.totalorder %s302, %s304
      %p308 = scmp.eq.s32.totalorder %s25, 0
      %p309 = por %p307, %p308
      %p310 = scmp.ne.s32.totalorder %s302, %s304
      %p311 = scmp.eq.s32.totalorder %s30, 1
      %p312 = por %p310, %p311
      %p313 = scmp.ne.s32.totalorder %s304, %s305
      %p314 = scmp.eq.s32.totalorder %s30, 0
      %p315 = por %p313, %p314
      %p316 = scmp.ne.s32.totalorder %s304, %s305
      %p317 = scmp.eq.s32.totalorder %s31, 1
      %p318 = por %p316, %p317
      %p320 = scmp.ne.s32.totalorder %s305, %s319
      %p321 = scmp.eq.s32.totalorder %s31, 0
      %p322 = por %p320, %p321
      %s324 = sadd.s32 %s323, 1
      %p327 = scmp.eq.s32.totalorder %s25, 1
      %p328 = scmp.ne.s32.totalorder %s323, %s325
      %p329 = scmp.eq.s32.totalorder %s25, 0
      %p330 = por %p328, %p329
      %p331 = scmp.ne.s32.totalorder %s323, %s325
      %p332 = scmp.eq.s32.totalorder %s30, 1
      %p333 = por %p331, %p332
      %p334 = scmp.ne.s32.totalorder %s325, %s326
      %p335 = scmp.eq.s32.totalorder %s30, 0
      %p336 = por %p334, %p335
      %p337 = scmp.ne.s32.totalorder %s325, %s326
      %p338 = scmp.eq.s32.totalorder %s31, 1
      %p339 = por %p337, %p338
      %p341 = scmp.ne.s32.totalorder %s326, %s340
      %p342 = scmp.eq.s32.totalorder %s31, 0
      %p343 = por %p341, %p342
      %s345 = sadd.s32 %s344, 1
      %p348 = scmp.eq.s32.totalorder %s25, 1
      %p349 = scmp.ne.s32.totalorder %s344, %s346
      %p350 = scmp.eq.s32.totalorder %s25, 0
      %p351 = por %p349, %p350
      %p352 = scmp.ne.s32.totalorder %s344, %s346
      %p353 = scmp.eq.s32.totalorder %s30, 1
      %p354 = por %p352, %p353
      %p355 = scmp.ne.s32.totalorder %s346, %s347
      %p356 = scmp.eq.s32.totalorder %s30, 0
      %p357 = por %p355, %p356
      %p358 = scmp.ne.s32.totalorder %s346, %s347
      %p359 = scmp.eq.s32.totalorder %s31, 1
      %p360 = por %p358, %p359
      %p362 = scmp.ne.s32.totalorder %s347, %s361
      %p363 = scmp.eq.s32.totalorder %s31, 0
      %p364 = por %p362, %p363
      %s365 = ssub.s32 %s32, %s44
      %p366 = scmp.eq.s32.totalorder %s365, 0
      %s368 = sadd.s32 %s367, 1
      %s369 = scalar_select %p366, %s367, %s368
      %p372 = pneg %p366
      %p373 = scmp.eq.s32.totalorder %s25, 1
      %p374 = por %p372, %p373
      %p375 = scmp.ne.s32.totalorder %s367, %s370
      %p376 = scmp.eq.s32.totalorder %s25, 0
      %p377 = por %p375, %p376
      %p378 = scmp.ne.s32.totalorder %s367, %s370
      %p379 = scmp.eq.s32.totalorder %s30, 1
      %p380 = por %p378, %p379
      %p381 = scmp.ne.s32.totalorder %s370, %s371
      %p382 = scmp.eq.s32.totalorder %s30, 0
      %p383 = por %p381, %p382
      %p384 = scmp.ne.s32.totalorder %s370, %s371
      %p385 = scmp.eq.s32.totalorder %s31, 1
      %p386 = por %p384, %p385
      %p388 = scmp.ne.s32.totalorder %s371, %s387
      %p389 = scmp.eq.s32.totalorder %s31, 0
      %p390 = por %p388, %p389
      %p391 = scmp.le.s32.totalorder 1, %s25
      %p392 = scmp.lt.s32.totalorder %s25, 3
      %p393 = pnand %p391, %p392
      %p394 = pneg %p393
      // Predicated region
      $region9: #{tpu_custom_call.1} parent=5 // pred_check
        _
      $region10: #{tpu_custom_call.1} parent=5 // pred_check_branch
        %396 = sbr.rel (%p393) target = $region12
      $region11: #{tpu_custom_call.1} parent=5 // pred_region
        %s397 = ssub.s32 %s25, 1
        // Predicated region
        $region13: #{tpu_custom_call.1} parent=11 // pred_check
          %p398 = pneg %p84
        $region14: #{tpu_custom_call.1} parent=11 // pred_check_branch
          %400 = sbr.rel (%p398) target = $region16
        $region15: #{tpu_custom_call.1} parent=11 // pred_region
          _
        $region16: #{tpu_custom_call.1} parent=11 // pred_fallthru
          _
        // Predicated region
        $region17: #{tpu_custom_call.1} parent=11 // pred_check
          %p401 = pneg %p105
        $region18: #{tpu_custom_call.1} parent=11 // pred_check_branch
          %403 = sbr.rel (%p401) target = $region20
        $region19: #{tpu_custom_call.1} parent=11 // pred_region
          _
        $region20: #{tpu_custom_call.1} parent=11 // pred_fallthru
          _
        // Predicated region
        $region21: #{tpu_custom_call.1} parent=11 // pred_check
          %p404 = pneg %p126
        $region22: #{tpu_custom_call.1} parent=11 // pred_check_branch
          %406 = sbr.rel (%p404) target = $region24
        $region23: #{tpu_custom_call.1} parent=11 // pred_region
          _
        $region24: #{tpu_custom_call.1} parent=11 // pred_fallthru
          _
        // Predicated region
        $region25: #{tpu_custom_call.1} parent=11 // pred_check
          %p407 = pneg %p147
        $region26: #{tpu_custom_call.1} parent=11 // pred_check_branch
          %409 = sbr.rel (%p407) target = $region28
        $region27: #{tpu_custom_call.1} parent=11 // pred_region
          %s411 = ssub.s32 8192, 8192
          %412 = vsyncadd [#allocation4], %s411
          %s413 = sshll.u32 [#allocation3], 4
          %s414 = int_to_ptr.vmem [resolvable:$true] %s413
          %419 = dma.hbm_to_vmem [thread:$0]  %s4, 8192, %s414, [#allocation4], 256, 256, 16
        $region28: #{tpu_custom_call.1} parent=11 // pred_fallthru
          _
        // Predicated region
        $region29: #{tpu_custom_call.1} parent=11 // pred_check
          %p420 = pneg %p168
        $region30: #{tpu_custom_call.1} parent=11 // pred_check_branch
          %422 = sbr.rel (%p420) target = $region32
        $region31: #{tpu_custom_call.1} parent=11 // pred_region
          _
        $region32: #{tpu_custom_call.1} parent=11 // pred_fallthru
          _
        // Predicated region
        $region33: #{tpu_custom_call.1} parent=11 // pred_check
          %p423 = pneg %p189
        $region34: #{tpu_custom_call.1} parent=11 // pred_check_branch
          %425 = sbr.rel (%p423) target = $region36
        $region35: #{tpu_custom_call.1} parent=11 // pred_region
          %s427 = ssub.s32 8192, 8192
          %428 = vsyncadd [#allocation6], %s427
          %s429 = sshll.u32 [#allocation5], 4
          %s430 = int_to_ptr.vmem [resolvable:$true] %s429
          %435 = dma.hbm_to_vmem [thread:$0]  %s6, 8192, %s430, [#allocation6], 256, 256, 16
        $region36: #{tpu_custom_call.1} parent=11 // pred_fallthru
          _
        // Predicated region
        $region37: #{tpu_custom_call.1} parent=11 // pred_check
          %p436 = pneg %p210
        $region38: #{tpu_custom_call.1} parent=11 // pred_check_branch
          %438 = sbr.rel (%p436) target = $region40
        $region39: #{tpu_custom_call.1} parent=11 // pred_region
          %s440 = ssub.s32 8192, 8192
          %441 = vsyncadd [#allocation6], %s440
          %s442 = sshll.u32 [#allocation7], 4
          %s443 = int_to_ptr.vmem [resolvable:$true] %s442
          %448 = dma.hbm_to_vmem [thread:$0]  %s7, 8192, %s443, [#allocation6], 256, 256, 16
        $region40: #{tpu_custom_call.1} parent=11 // pred_fallthru
          _
        // Predicated region
        $region41: #{tpu_custom_call.1} parent=11 // pred_check
          %p449 = pneg %p231
        $region42: #{tpu_custom_call.1} parent=11 // pred_check_branch
          %451 = sbr.rel (%p449) target = $region44
        $region43: #{tpu_custom_call.1} parent=11 // pred_region
          _
        $region44: #{tpu_custom_call.1} parent=11 // pred_fallthru
          _
        // Predicated region
        $region45: #{tpu_custom_call.1} parent=11 // pred_check
          %p452 = pneg %p252
        $region46: #{tpu_custom_call.1} parent=11 // pred_check_branch
          %454 = sbr.rel (%p452) target = $region48
        $region47: #{tpu_custom_call.1} parent=11 // pred_region
          %s456 = ssub.s32 8192, 8192
          %457 = vsyncadd [#allocation9], %s456
          %s458 = sshll.u32 [#allocation8], 4
          %s459 = int_to_ptr.vmem [resolvable:$true] %s458
          %464 = dma.hbm_to_vmem [thread:$0]  %s9, 8192, %s459, [#allocation9], 256, 256, 16
        $region48: #{tpu_custom_call.1} parent=11 // pred_fallthru
          _
        // Predicated region
        $region49: #{tpu_custom_call.1} parent=11 // pred_check
          %p465 = pneg %p273
        $region50: #{tpu_custom_call.1} parent=11 // pred_check_branch
          %467 = sbr.rel (%p465) target = $region52
        $region51: #{tpu_custom_call.1} parent=11 // pred_region
          %s469 = ssub.s32 8192, 8192
          %470 = vsyncadd [#allocation9], %s469
          %s471 = sshll.u32 [#allocation10], 4
          %s472 = int_to_ptr.vmem [resolvable:$true] %s471
          %477 = dma.hbm_to_vmem [thread:$0]  %s10, 8192, %s472, [#allocation9], 256, 256, 16
        $region52: #{tpu_custom_call.1} parent=11 // pred_fallthru
          _
        // Predicated region
        $region53: #{tpu_custom_call.1} parent=11 // pred_check
          %p478 = pneg %p294
        $region54: #{tpu_custom_call.1} parent=11 // pred_check_branch
          %480 = sbr.rel (%p478) target = $region56
        $region55: #{tpu_custom_call.1} parent=11 // pred_region
          %s482 = ssub.s32 32, 32
          %483 = vsyncadd [#allocation12], %s482
          %s485 = sshll.u32 [#allocation11], 4
          %s486 = int_to_ptr.vmem [resolvable:$true] %s485
          %488 = dma.hbm_to_vmem [thread:$0]  %s11, 32, %s486, [#allocation12]
        $region56: #{tpu_custom_call.1} parent=11 // pred_fallthru
          _
        // Predicated region
        $region57: #{tpu_custom_call.1} parent=11 // pred_check
          %p489 = pneg %p315
        $region58: #{tpu_custom_call.1} parent=11 // pred_check_branch
          %491 = sbr.rel (%p489) target = $region60
        $region59: #{tpu_custom_call.1} parent=11 // pred_region
          _
        $region60: #{tpu_custom_call.1} parent=11 // pred_fallthru
          _
        // Predicated region
        $region61: #{tpu_custom_call.1} parent=11 // pred_check
          %p492 = pneg %p336
        $region62: #{tpu_custom_call.1} parent=11 // pred_check_branch
          %494 = sbr.rel (%p492) target = $region64
        $region63: #{tpu_custom_call.1} parent=11 // pred_region
          _
        $region64: #{tpu_custom_call.1} parent=11 // pred_fallthru
          _
        // Predicated region
        $region65: #{tpu_custom_call.1} parent=11 // pred_check
          %p495 = pneg %p357
        $region66: #{tpu_custom_call.1} parent=11 // pred_check_branch
          %497 = sbr.rel (%p495) target = $region68
        $region67: #{tpu_custom_call.1} parent=11 // pred_region
          _
        $region68: #{tpu_custom_call.1} parent=11 // pred_fallthru
          _
      $region12: #{tpu_custom_call.1} parent=5 // pred_fallthru
        _
      %p498 = scmp.lt.s32.totalorder %s25, 2
      // Predicated region
      $region69: #{tpu_custom_call.1} parent=5 // pred_check
        %p499 = pneg %p498
      $region70: #{tpu_custom_call.1} parent=5 // pred_check_branch
        %501 = sbr.rel (%p499) target = $region72
      $region71: #{tpu_custom_call.1} parent=5 // pred_region
        // Predicated region
        $region73: #{tpu_custom_call.1} parent=71 // pred_check
          %p502 = pneg %p57
        $region74: #{tpu_custom_call.1} parent=71 // pred_check_branch
          %504 = sbr.rel (%p502) target = $region76
        $region75: #{tpu_custom_call.1} parent=71 // pred_region
          %s505 = smul.u32 16, %s32
          %p506 = scmp.lt.s32.totalorder %s505, 31
          %s507 = scalar_select %p506, %s505, 31
          %s508 = smul.addr %s507, 8
          %s509 = scalar_lea.vmem %s0, %s508
          %s510 = smul.u32 16, %s32
        $region76: #{tpu_custom_call.1} parent=71 // pred_fallthru
          _
      $region72: #{tpu_custom_call.1} parent=5 // pred_fallthru
        _
      %p511 = scmp.le.s32.totalorder 1, %s25
      %p512 = scmp.lt.s32.totalorder %s25, 3
      %p513 = pnand %p511, %p512
      %p514 = pneg %p513
      // Predicated region
      $region77: #{tpu_custom_call.1} parent=5 // pred_check
        _
      $region78: #{tpu_custom_call.1} parent=5 // pred_check_branch
        %516 = sbr.rel (%p513) target = $region80
      $region79: #{tpu_custom_call.1} parent=5 // pred_region
        %s517 = ssub.s32 %s25, 1
        // Predicated region
        $region81: #{tpu_custom_call.1} parent=79 // pred_check
          %p518 = pneg %p147
        $region82: #{tpu_custom_call.1} parent=79 // pred_check_branch
          %520 = sbr.rel (%p518) target = $region84
        $region83: #{tpu_custom_call.1} parent=79 // pred_region
          %521 = dma.done [#allocation4], 8192
        $region84: #{tpu_custom_call.1} parent=79 // pred_fallthru
          _
        // Predicated region
        $region85: #{tpu_custom_call.1} parent=79 // pred_check
          %p522 = pneg %p189
        $region86: #{tpu_custom_call.1} parent=79 // pred_check_branch
          %524 = sbr.rel (%p522) target = $region88
        $region87: #{tpu_custom_call.1} parent=79 // pred_region
          %525 = dma.done [#allocation6], 8192
        $region88: #{tpu_custom_call.1} parent=79 // pred_fallthru
          _
        // Predicated region
        $region89: #{tpu_custom_call.1} parent=79 // pred_check
          %p526 = pneg %p210
        $region90: #{tpu_custom_call.1} parent=79 // pred_check_branch
          %528 = sbr.rel (%p526) target = $region92
        $region91: #{tpu_custom_call.1} parent=79 // pred_region
          %529 = dma.done [#allocation6], 8192
        $region92: #{tpu_custom_call.1} parent=79 // pred_fallthru
          _
        // Predicated region
        $region93: #{tpu_custom_call.1} parent=79 // pred_check
          %p530 = pneg %p252
        $region94: #{tpu_custom_call.1} parent=79 // pred_check_branch
          %532 = sbr.rel (%p530) target = $region96
        $region95: #{tpu_custom_call.1} parent=79 // pred_region
          %533 = dma.done [#allocation9], 8192
        $region96: #{tpu_custom_call.1} parent=79 // pred_fallthru
          _
        // Predicated region
        $region97: #{tpu_custom_call.1} parent=79 // pred_check
          %p534 = pneg %p273
        $region98: #{tpu_custom_call.1} parent=79 // pred_check_branch
          %536 = sbr.rel (%p534) target = $region100
        $region99: #{tpu_custom_call.1} parent=79 // pred_region
          %537 = dma.done [#allocation9], 8192
        $region100: #{tpu_custom_call.1} parent=79 // pred_fallthru
          _
        // Predicated region
        $region101: #{tpu_custom_call.1} parent=79 // pred_check
          %p538 = pneg %p294
        $region102: #{tpu_custom_call.1} parent=79 // pred_check_branch
          %540 = sbr.rel (%p538) target = $region104
        $region103: #{tpu_custom_call.1} parent=79 // pred_region
          %541 = dma.done [#allocation12], 32
        $region104: #{tpu_custom_call.1} parent=79 // pred_fallthru
          _
        %s542 = smul.u32 16, %s34
        %p543 = scmp.lt.s32.totalorder %s542, 31
        %s544 = scalar_select %p543, %s542, 31
        %s545 = smul.addr %s544, 8
        %s546 = scalar_lea.vmem %s0, %s545
        %p547 = pneg %p63
        %p548 = pneg %p60
        %p549 = pneg %p84
        %p550 = pneg %p81
        %p551 = pneg %p105
        %p552 = pneg %p102
        %p553 = pneg %p126
        %p554 = pneg %p123
        %p555 = pneg %p147
        %p556 = pneg %p144
        %p557 = pneg %p168
        %p558 = pneg %p165
        %p559 = pneg %p189
        %p560 = pneg %p186
        %p561 = pneg %p210
        %p562 = pneg %p207
        %p563 = pneg %p231
        %p564 = pneg %p228
        %p565 = pneg %p252
        %p566 = pneg %p249
        %p567 = pneg %p273
        %p568 = pneg %p270
        %p569 = pneg %p294
        %p570 = pneg %p291
        %p571 = pneg %p315
        %p572 = pneg %p312
        %p573 = pneg %p336
        %p574 = pneg %p333
        %p575 = pneg %p357
        %p576 = pneg %p354
        %p577 = pneg %p383
        %p578 = pneg %p380
        %s579 = smul.u32 16, %s34
        %p580 = scmp.lt.s32.totalorder %s579, 31
        %s581 = scalar_select %p580, %s579, 31
        %s582 = smul.addr %s581, 8
        %s583 = scalar_lea.vmem %s15, %s582
        %s584 = smul.u32 16, %s34
        %p585 = scmp.lt.s32.totalorder %s584, 31
        %s586 = scalar_select %p585, %s584, 31
        %s587 = smul.addr %s586, 8
        %s588 = scalar_lea.vmem %s0, %s587
        %s589 = smul.u32 16, %s34
        %s590 = smul.u32 16, %s34
        %p591 = scmp.lt.s32.totalorder %s590, 31
        %s592 = scalar_select %p591, %s590, 31
        %s593 = smul.addr %s592, 8
        %s594 = scalar_lea.vmem %s15, %s593
        %s595 = smul.u32 16, %s34
        %p596 = scmp.eq.s32.totalorder %s35, 0
        // Predicated region
        $region105: #{tpu_custom_call.1} parent=79 // pred_check
          %p597 = pneg %p596
        $region106: #{tpu_custom_call.1} parent=79 // pred_check_branch
          %599 = sbr.rel (%p597) target = $region108
        $region107: #{tpu_custom_call.1} parent=79 // pred_region
          %v600 = vld [vmem:[%s588] sm:$0xff]
          %v601 = vld [vmem:[%s588 + $0x8] sm:$0xff]
          %v602 = vld [vmem:[%s588 + $0x10] sm:$0xff]
          %v603 = vld [vmem:[%s588 + $0x18] sm:$0xff]
          %v604 = vld [vmem:[%s588 + $0x20] sm:$0xff]
          %v605 = vld [vmem:[%s588 + $0x28] sm:$0xff]
          %v606 = vld [vmem:[%s588 + $0x30] sm:$0xff]
          %v607 = vld [vmem:[%s588 + $0x38] sm:$0xff]
          %v608 = vld [vmem:[%s588 + $0x40] sm:$0xff]
          %v609 = vld [vmem:[%s588 + $0x48] sm:$0xff]
          %v610 = vld [vmem:[%s588 + $0x50] sm:$0xff]
          %v611 = vld [vmem:[%s588 + $0x58] sm:$0xff]
          %v612 = vld [vmem:[%s588 + $0x60] sm:$0xff]
          %v613 = vld [vmem:[%s588 + $0x68] sm:$0xff]
          %v614 = vld [vmem:[%s588 + $0x70] sm:$0xff]
          %v615 = vld [vmem:[%s588 + $0x78] sm:$0xff]
          %vm616 = vcmask 64512
          %617 = vst.msk [vmem:[#allocation2] sm:$0xff] %vm616, %v600
          %618 = vst.msk [vmem:[#allocation2 + $0x8] sm:$0xff] %vm616, %v601
          %619 = vst.msk [vmem:[#allocation2 + $0x10] sm:$0xff] %vm616, %v602
          %620 = vst.msk [vmem:[#allocation2 + $0x18] sm:$0xff] %vm616, %v603
          %621 = vst.msk [vmem:[#allocation2 + $0x20] sm:$0xff] %vm616, %v604
          %622 = vst.msk [vmem:[#allocation2 + $0x28] sm:$0xff] %vm616, %v605
          %623 = vst.msk [vmem:[#allocation2 + $0x30] sm:$0xff] %vm616, %v606
          %624 = vst.msk [vmem:[#allocation2 + $0x38] sm:$0xff] %vm616, %v607
          %625 = vst.msk [vmem:[#allocation2 + $0x40] sm:$0xff] %vm616, %v608
          %626 = vst.msk [vmem:[#allocation2 + $0x48] sm:$0xff] %vm616, %v609
          %627 = vst.msk [vmem:[#allocation2 + $0x50] sm:$0xff] %vm616, %v610
          %628 = vst.msk [vmem:[#allocation2 + $0x58] sm:$0xff] %vm616, %v611
          %629 = vst.msk [vmem:[#allocation2 + $0x60] sm:$0xff] %vm616, %v612
          %630 = vst.msk [vmem:[#allocation2 + $0x68] sm:$0xff] %vm616, %v613
          %631 = vst.msk [vmem:[#allocation2 + $0x70] sm:$0xff] %vm616, %v614
          %632 = vst.msk [vmem:[#allocation2 + $0x78] sm:$0xff] %vm616, %v615
        $region108: #{tpu_custom_call.1} parent=79 // pred_fallthru
          _
        %v633 = vld [vmem:[#allocation2] sm:$0xff]
        %v634 = vld [vmem:[#allocation2 + $0x8] sm:$0xff]
        %v635 = vld [vmem:[#allocation2 + $0x10] sm:$0xff]
        %v636 = vld [vmem:[#allocation2 + $0x18] sm:$0xff]
        %v637 = vld [vmem:[#allocation2 + $0x20] sm:$0xff]
        %v638 = vld [vmem:[#allocation2 + $0x28] sm:$0xff]
        %v639 = vld [vmem:[#allocation2 + $0x30] sm:$0xff]
        %v640 = vld [vmem:[#allocation2 + $0x38] sm:$0xff]
        %v641 = vld [vmem:[#allocation2 + $0x40] sm:$0xff]
        %v642 = vld [vmem:[#allocation2 + $0x48] sm:$0xff]
        %v643 = vld [vmem:[#allocation2 + $0x50] sm:$0xff]
        %v644 = vld [vmem:[#allocation2 + $0x58] sm:$0xff]
        %v645 = vld [vmem:[#allocation2 + $0x60] sm:$0xff]
        %v646 = vld [vmem:[#allocation2 + $0x68] sm:$0xff]
        %v647 = vld [vmem:[#allocation2 + $0x70] sm:$0xff]
        %v648 = vld [vmem:[#allocation2 + $0x78] sm:$0xff]
        %v649 = vld [vmem:[%s1] sm:$0xff]
        %v650 = vld [vmem:[%s1 + $0x8] sm:$0xff]
        %v651 = vld [vmem:[%s2] sm:$0x3]
        %v653 = vlaneseq
        %v654 = vshrl.u32 %v653, 7
        %v655 = vsub.s32 0, %v654
        %v656 = vrot.slane %v651, %v655
        %v657 = vlaneseq
        %v658 = vshrl.u32 %v657, 7
        %v659 = vsub.s32 1, %v658
        %v660 = vrot.slane %v651, %v659
        %vm663 = vcmask 64512
        %v665 = vsel %vm663, %v633, 0
        %v668 = vsel %vm663, %v634, 0
        %v671 = vsel %vm663, %v635, 0
        %v674 = vsel %vm663, %v636, 0
        %v677 = vsel %vm663, %v637, 0
        %v680 = vsel %vm663, %v638, 0
        %v683 = vsel %vm663, %v639, 0
        %v686 = vsel %vm663, %v640, 0
        %v689 = vsel %vm663, %v641, 0
        %v692 = vsel %vm663, %v642, 0
        %v695 = vsel %vm663, %v643, 0
        %v698 = vsel %vm663, %v644, 0
        %v701 = vsel %vm663, %v645, 0
        %v704 = vsel %vm663, %v646, 0
        %v707 = vsel %vm663, %v647, 0
        %v710 = vsel %vm663, %v648, 0
        %712 = vmatprep.subr.mxu0 0.0
        %713 = vmatpush1.msra.mxu0 0.0
        %714 = vmatprep.subr.mxu0 0.0
        %715 = vmatpush1.msra.mxu0 0.0
        %716 = vmatprep.subr.mxu0 0.0
        %717 = vmatpush1.msra.mxu0 0.0
        %718 = vmatprep.subr.mxu0 0.0
        %719 = vmatpush1.msra.mxu0 0.0
        %720 = vmatprep.subr.mxu0 0.0
        %721 = vmatpush1.msra.mxu0 0.0
        %722 = vmatprep.subr.mxu0 0.0
        %723 = vmatpush1.msra.mxu0 0.0
        %724 = vmatprep.subr.mxu0 0.0
        %725 = vmatpush1.msra.mxu0 0.0
        %726 = vmatprep.subr.mxu0 0.0
        %727 = vmatpush1.msra.mxu0 0.0
        %728 = vmatprep.subr.mxu0 0.0
        %729 = vmatpush1.msra.mxu0 0.0
        %730 = vmatprep.subr.mxu0 0.0
        %731 = vmatpush1.msra.mxu0 0.0
        %732 = vmatprep.subr.mxu0 0.0
        %733 = vmatpush1.msra.mxu0 0.0
        %734 = vmatprep.subr.mxu0 0.0
        %735 = vmatpush1.msra.mxu0 0.0
        %736 = vmatprep.subr.mxu0 0.0
        %737 = vmatpush1.msra.mxu0 0.0
        %738 = vmatprep.subr.mxu0 0.0
        %739 = vmatpush1.msra.mxu0 0.0
        %740 = vmatprep.subr.mxu0 0.0
        %741 = vmatpush1.msra.mxu0 0.0
        %742 = vmatprep.subr.mxu0 %v650
        %743 = vmatpush1.msra.mxu0 %v649
        %744 = vmatprep.subr.mxu0 0.0
        %745 = vmatpush2.msra.mxu0 0.0
        %746 = vmatprep.subr.mxu0 0.0
        %747 = vmatpush2.msra.mxu0 0.0
        %748 = vmatprep.subr.mxu0 0.0
        %749 = vmatpush2.msra.mxu0 0.0
        %750 = vmatprep.subr.mxu0 0.0
        %751 = vmatpush2.msra.mxu0 0.0
        %752 = vmatprep.subr.mxu0 0.0
        %753 = vmatpush2.msra.mxu0 0.0
        %754 = vmatprep.subr.mxu0 0.0
        %755 = vmatpush2.msra.mxu0 0.0
        %756 = vmatprep.subr.mxu0 0.0
        %757 = vmatpush2.msra.mxu0 0.0
        %758 = vmatprep.subr.mxu0 0.0
        %759 = vmatpush2.msra.mxu0 0.0
        %760 = vmatprep.subr.mxu0 0.0
        %761 = vmatpush2.msra.mxu0 0.0
        %762 = vmatprep.subr.mxu0 0.0
        %763 = vmatpush2.msra.mxu0 0.0
        %764 = vmatprep.subr.mxu0 0.0
        %765 = vmatpush2.msra.mxu0 0.0
        %766 = vmatprep.subr.mxu0 0.0
        %767 = vmatpush2.msra.mxu0 0.0
        %768 = vmatprep.subr.mxu0 0.0
        %769 = vmatpush2.msra.mxu0 0.0
        %770 = vmatprep.subr.mxu0 0.0
        %771 = vmatpush2.msra.mxu0 0.0
        %772 = vmatprep.subr.mxu0 0.0
        %773 = vmatpush2.msra.mxu0 0.0
        %774 = vmatprep.subr.mxu0 0.0
        %775 = vmatpush2.msra.mxu0 0.0
        %776 = vmatprep.mubr.f32.mxu0 0.0
        %777 = vmatmul.mubr.f32.gmra.mxu0 %v665
        %v778 = vpop.f32.mrf.mxu0
        %v779 = vadd.f32 %v656, %v778
        %v780 = vpop.f32.mrf.mxu0
        %v781 = vadd.f32 %v660, %v780
        %782 = vmatprep.mubr.f32.mxu0 0.0
        %783 = vmatmul.mubr.f32.gmra.mxu0 %v668
        %v784 = vpop.f32.mrf.mxu0
        %v785 = vadd.f32 %v656, %v784
        %v786 = vpop.f32.mrf.mxu0
        %v787 = vadd.f32 %v660, %v786
        %788 = vmatprep.mubr.f32.mxu0 0.0
        %789 = vmatmul.mubr.f32.gmra.mxu0 %v671
        %v790 = vpop.f32.mrf.mxu0
        %v791 = vadd.f32 %v656, %v790
        %v792 = vpop.f32.mrf.mxu0
        %v793 = vadd.f32 %v660, %v792
        %794 = vmatprep.mubr.f32.mxu0 0.0
        %795 = vmatmul.mubr.f32.gmra.mxu0 %v674
        %v796 = vpop.f32.mrf.mxu0
        %v797 = vadd.f32 %v656, %v796
        %v798 = vpop.f32.mrf.mxu0
        %v799 = vadd.f32 %v660, %v798
        %800 = vmatprep.mubr.f32.mxu0 0.0
        %801 = vmatmul.mubr.f32.gmra.mxu0 %v677
        %v802 = vpop.f32.mrf.mxu0
        %v803 = vadd.f32 %v656, %v802
        %v804 = vpop.f32.mrf.mxu0
        %v805 = vadd.f32 %v660, %v804
        %806 = vmatprep.mubr.f32.mxu0 0.0
        %807 = vmatmul.mubr.f32.gmra.mxu0 %v680
        %v808 = vpop.f32.mrf.mxu0
        %v809 = vadd.f32 %v656, %v808
        %v810 = vpop.f32.mrf.mxu0
        %v811 = vadd.f32 %v660, %v810
        %812 = vmatprep.mubr.f32.mxu0 0.0
        %813 = vmatmul.mubr.f32.gmra.mxu0 %v683
        %v814 = vpop.f32.mrf.mxu0
        %v815 = vadd.f32 %v656, %v814
        %v816 = vpop.f32.mrf.mxu0
        %v817 = vadd.f32 %v660, %v816
        %818 = vmatprep.mubr.f32.mxu0 0.0
        %819 = vmatmul.mubr.f32.gmra.mxu0 %v686
        %v820 = vpop.f32.mrf.mxu0
        %v821 = vadd.f32 %v656, %v820
        %v822 = vpop.f32.mrf.mxu0
        %v823 = vadd.f32 %v660, %v822
        %824 = vmatprep.mubr.f32.mxu0 0.0
        %825 = vmatmul.mubr.f32.gmra.mxu0 %v689
        %v826 = vpop.f32.mrf.mxu0
        %v827 = vadd.f32 %v656, %v826
        %v828 = vpop.f32.mrf.mxu0
        %v829 = vadd.f32 %v660, %v828
        %830 = vmatprep.mubr.f32.mxu0 0.0
        %831 = vmatmul.mubr.f32.gmra.mxu0 %v692
        %v832 = vpop.f32.mrf.mxu0
        %v833 = vadd.f32 %v656, %v832
        %v834 = vpop.f32.mrf.mxu0
        %v835 = vadd.f32 %v660, %v834
        %836 = vmatprep.mubr.f32.mxu0 0.0
        %837 = vmatmul.mubr.f32.gmra.mxu0 %v695
        %v838 = vpop.f32.mrf.mxu0
        %v839 = vadd.f32 %v656, %v838
        %v840 = vpop.f32.mrf.mxu0
        %v841 = vadd.f32 %v660, %v840
        %842 = vmatprep.mubr.f32.mxu0 0.0
        %843 = vmatmul.mubr.f32.gmra.mxu0 %v698
        %v844 = vpop.f32.mrf.mxu0
        %v845 = vadd.f32 %v656, %v844
        %v846 = vpop.f32.mrf.mxu0
        %v847 = vadd.f32 %v660, %v846
        %848 = vmatprep.mubr.f32.mxu0 0.0
        %849 = vmatmul.mubr.f32.gmra.mxu0 %v701
        %v850 = vpop.f32.mrf.mxu0
        %v851 = vadd.f32 %v656, %v850
        %v852 = vpop.f32.mrf.mxu0
        %v853 = vadd.f32 %v660, %v852
        %854 = vmatprep.mubr.f32.mxu0 0.0
        %855 = vmatmul.mubr.f32.gmra.mxu0 %v704
        %v856 = vpop.f32.mrf.mxu0
        %v857 = vadd.f32 %v656, %v856
        %v858 = vpop.f32.mrf.mxu0
        %v859 = vadd.f32 %v660, %v858
        %860 = vmatprep.mubr.f32.mxu0 0.0
        %861 = vmatmul.mubr.f32.gmra.mxu0 %v707
        %v862 = vpop.f32.mrf.mxu0
        %v863 = vadd.f32 %v656, %v862
        %v864 = vpop.f32.mrf.mxu0
        %v865 = vadd.f32 %v660, %v864
        %866 = vmatprep.mubr.f32.mxu0 0.0
        %867 = vmatmul.mubr.f32.gmra.mxu0 %v710
        %v868 = vpop.f32.mrf.mxu0
        %v869 = vadd.f32 %v656, %v868
        %v870 = vpop.f32.mrf.mxu0
        %v871 = vadd.f32 %v660, %v870
        %872 = vdwg.mxu0
        %v873 = vtanh.pop %v779
        %v874 = vtanh.pop %v781
        %v875 = vtanh.pop %v785
        %v876 = vtanh.pop %v787
        %v877 = vtanh.pop %v791
        %v878 = vtanh.pop %v793
        %v879 = vtanh.pop %v797
        %v880 = vtanh.pop %v799
        %v881 = vtanh.pop %v803
        %v882 = vtanh.pop %v805
        %v883 = vtanh.pop %v809
        %v884 = vtanh.pop %v811
        %v885 = vtanh.pop %v815
        %v886 = vtanh.pop %v817
        %v887 = vtanh.pop %v821
        %v888 = vtanh.pop %v823
        %v889 = vtanh.pop %v827
        %v890 = vtanh.pop %v829
        %v891 = vtanh.pop %v833
        %v892 = vtanh.pop %v835
        %v893 = vtanh.pop %v839
        %v894 = vtanh.pop %v841
        %v895 = vtanh.pop %v845
        %v896 = vtanh.pop %v847
        %v897 = vtanh.pop %v851
        %v898 = vtanh.pop %v853
        %v899 = vtanh.pop %v857
        %v900 = vtanh.pop %v859
        %v901 = vtanh.pop %v863
        %v902 = vtanh.pop %v865
        %v903 = vtanh.pop %v869
        %v904 = vtanh.pop %v871
        %v905 = vld [vmem:[%s3] sm:$0xff]
        %v906 = vld [vmem:[%s3 + $0x8] sm:$0xff]
        %v907 = vld [vmem:[%s3 + $0x10] sm:$0xff]
        %v908 = vld [vmem:[%s3 + $0x18] sm:$0xff]
        %v909 = vld [vmem:[%s3 + $0x20] sm:$0xff]
        %v910 = vld [vmem:[%s3 + $0x28] sm:$0xff]
        %v911 = vld [vmem:[%s3 + $0x30] sm:$0xff]
        %v912 = vld [vmem:[%s3 + $0x38] sm:$0xff]
        %v913 = vld [vmem:[%s3 + $0x40] sm:$0xff]
        %v914 = vld [vmem:[%s3 + $0x48] sm:$0xff]
        %v915 = vld [vmem:[%s3 + $0x50] sm:$0xff]
        %v916 = vld [vmem:[%s3 + $0x58] sm:$0xff]
        %v917 = vld [vmem:[%s3 + $0x60] sm:$0xff]
        %v918 = vld [vmem:[%s3 + $0x68] sm:$0xff]
        %v919 = vld [vmem:[%s3 + $0x70] sm:$0xff]
        %v920 = vld [vmem:[%s3 + $0x78] sm:$0xff]
        %v921 = vld [vmem:[%s3 + $0x80] sm:$0xff]
        %v922 = vld [vmem:[%s3 + $0x88] sm:$0xff]
        %v923 = vld [vmem:[%s3 + $0x90] sm:$0xff]
        %v924 = vld [vmem:[%s3 + $0x98] sm:$0xff]
        %v925 = vld [vmem:[%s3 + $0xa0] sm:$0xff]
        %v926 = vld [vmem:[%s3 + $0xa8] sm:$0xff]
        %v927 = vld [vmem:[%s3 + $0xb0] sm:$0xff]
        %v928 = vld [vmem:[%s3 + $0xb8] sm:$0xff]
        %v929 = vld [vmem:[%s3 + $0xc0] sm:$0xff]
        %v930 = vld [vmem:[%s3 + $0xc8] sm:$0xff]
        %v931 = vld [vmem:[%s3 + $0xd0] sm:$0xff]
        %v932 = vld [vmem:[%s3 + $0xd8] sm:$0xff]
        %v933 = vld [vmem:[%s3 + $0xe0] sm:$0xff]
        %v934 = vld [vmem:[%s3 + $0xe8] sm:$0xff]
        %v935 = vld [vmem:[%s3 + $0xf0] sm:$0xff]
        %v936 = vld [vmem:[%s3 + $0xf8] sm:$0xff]
        %v937 = vld [vmem:[%s3 + $0x100] sm:$0xff]
        %v938 = vld [vmem:[%s3 + $0x108] sm:$0xff]
        %v939 = vld [vmem:[%s3 + $0x110] sm:$0xff]
        %v940 = vld [vmem:[%s3 + $0x118] sm:$0xff]
        %v941 = vld [vmem:[%s3 + $0x120] sm:$0xff]
        %v942 = vld [vmem:[%s3 + $0x128] sm:$0xff]
        %v943 = vld [vmem:[%s3 + $0x130] sm:$0xff]
        %v944 = vld [vmem:[%s3 + $0x138] sm:$0xff]
        %v945 = vld [vmem:[%s3 + $0x140] sm:$0xff]
        %v946 = vld [vmem:[%s3 + $0x148] sm:$0xff]
        %v947 = vld [vmem:[%s3 + $0x150] sm:$0xff]
        %v948 = vld [vmem:[%s3 + $0x158] sm:$0xff]
        %v949 = vld [vmem:[%s3 + $0x160] sm:$0xff]
        %v950 = vld [vmem:[%s3 + $0x168] sm:$0xff]
        %v951 = vld [vmem:[%s3 + $0x170] sm:$0xff]
        %v952 = vld [vmem:[%s3 + $0x178] sm:$0xff]
        %v953 = vld [vmem:[%s3 + $0x180] sm:$0xff]
        %v954 = vld [vmem:[%s3 + $0x188] sm:$0xff]
        %v955 = vld [vmem:[%s3 + $0x190] sm:$0xff]
        %v956 = vld [vmem:[%s3 + $0x198] sm:$0xff]
        %v957 = vld [vmem:[%s3 + $0x1a0] sm:$0xff]
        %v958 = vld [vmem:[%s3 + $0x1a8] sm:$0xff]
        %v959 = vld [vmem:[%s3 + $0x1b0] sm:$0xff]
        %v960 = vld [vmem:[%s3 + $0x1b8] sm:$0xff]
        %v961 = vld [vmem:[%s3 + $0x1c0] sm:$0xff]
        %v962 = vld [vmem:[%s3 + $0x1c8] sm:$0xff]
        %v963 = vld [vmem:[%s3 + $0x1d0] sm:$0xff]
        %v964 = vld [vmem:[%s3 + $0x1d8] sm:$0xff]
        %v965 = vld [vmem:[%s3 + $0x1e0] sm:$0xff]
        %v966 = vld [vmem:[%s3 + $0x1e8] sm:$0xff]
        %v967 = vld [vmem:[%s3 + $0x1f0] sm:$0xff]
        %v968 = vld [vmem:[%s3 + $0x1f8] sm:$0xff]
        %v969 = vld [vmem:[%s5] sm:$0x3]
        %v971 = vlaneseq
        %v972 = vshrl.u32 %v971, 7
        %v973 = vsub.s32 0, %v972
        %v974 = vrot.slane %v969, %v973
        %v975 = vlaneseq
        %v976 = vshrl.u32 %v975, 7
        %v977 = vsub.s32 1, %v976
        %v978 = vrot.slane %v969, %v977
        %981 = vmatprep.subr.mxu0 %v936
        %982 = vmatpush1.msra.mxu0 %v935
        %983 = vmatprep.subr.mxu0 %v934
        %984 = vmatpush1.msra.mxu0 %v933
        %985 = vmatprep.subr.mxu0 %v932
        %986 = vmatpush1.msra.mxu0 %v931
        %987 = vmatprep.subr.mxu0 %v930
        %988 = vmatpush1.msra.mxu0 %v929
        %989 = vmatprep.subr.mxu0 %v928
        %990 = vmatpush1.msra.mxu0 %v927
        %991 = vmatprep.subr.mxu0 %v926
        %992 = vmatpush1.msra.mxu0 %v925
        %993 = vmatprep.subr.mxu0 %v924
        %994 = vmatpush1.msra.mxu0 %v923
        %995 = vmatprep.subr.mxu0 %v922
        %996 = vmatpush1.msra.mxu0 %v921
        %997 = vmatprep.subr.mxu0 %v920
        %998 = vmatpush1.msra.mxu0 %v919
        %999 = vmatprep.subr.mxu0 %v918
        %1000 = vmatpush1.msra.mxu0 %v917
        %1001 = vmatprep.subr.mxu0 %v916
        %1002 = vmatpush1.msra.mxu0 %v915
        %1003 = vmatprep.subr.mxu0 %v914
        %1004 = vmatpush1.msra.mxu0 %v913
        %1005 = vmatprep.subr.mxu0 %v912
        %1006 = vmatpush1.msra.mxu0 %v911
        %1007 = vmatprep.subr.mxu0 %v910
        %1008 = vmatpush1.msra.mxu0 %v909
        %1009 = vmatprep.subr.mxu0 %v908
        %1010 = vmatpush1.msra.mxu0 %v907
        %1011 = vmatprep.subr.mxu0 %v906
        %1012 = vmatpush1.msra.mxu0 %v905
        %1013 = vmatprep.subr.mxu0 %v968
        %1014 = vmatpush2.msra.mxu0 %v967
        %1015 = vmatprep.subr.mxu0 %v966
        %1016 = vmatpush2.msra.mxu0 %v965
        %1017 = vmatprep.subr.mxu0 %v964
        %1018 = vmatpush2.msra.mxu0 %v963
        %1019 = vmatprep.subr.mxu0 %v962
        %1020 = vmatpush2.msra.mxu0 %v961
        %1021 = vmatprep.subr.mxu0 %v960
        %1022 = vmatpush2.msra.mxu0 %v959
        %1023 = vmatprep.subr.mxu0 %v958
        %1024 = vmatpush2.msra.mxu0 %v957
        %1025 = vmatprep.subr.mxu0 %v956
        %1026 = vmatpush2.msra.mxu0 %v955
        %1027 = vmatprep.subr.mxu0 %v954
        %1028 = vmatpush2.msra.mxu0 %v953
        %1029 = vmatprep.subr.mxu0 %v952
        %1030 = vmatpush2.msra.mxu0 %v951
        %1031 = vmatprep.subr.mxu0 %v950
        %1032 = vmatpush2.msra.mxu0 %v949
        %1033 = vmatprep.subr.mxu0 %v948
        %1034 = vmatpush2.msra.mxu0 %v947
        %1035 = vmatprep.subr.mxu0 %v946
        %1036 = vmatpush2.msra.mxu0 %v945
        %1037 = vmatprep.subr.mxu0 %v944
        %1038 = vmatpush2.msra.mxu0 %v943
        %1039 = vmatprep.subr.mxu0 %v942
        %1040 = vmatpush2.msra.mxu0 %v941
        %1041 = vmatprep.subr.mxu0 %v940
        %1042 = vmatpush2.msra.mxu0 %v939
        %1043 = vmatprep.subr.mxu0 %v938
        %1044 = vmatpush2.msra.mxu0 %v937
        %1045 = vmatprep.mubr.f32.mxu0 %v874
        %1046 = vmatmul.mubr.f32.gmra.mxu0 %v873
        %v1047 = vpop.f32.mrf.mxu0
        %v1048 = vadd.f32 %v974, %v1047
        %v1049 = vpop.f32.mrf.mxu0
        %v1050 = vadd.f32 %v978, %v1049
        %1051 = vmatprep.mubr.f32.mxu0 %v876
        %1052 = vmatmul.mubr.f32.gmra.mxu0 %v875
        %v1053 = vpop.f32.mrf.mxu0
        %v1054 = vadd.f32 %v974, %v1053
        %v1055 = vpop.f32.mrf.mxu0
        %v1056 = vadd.f32 %v978, %v1055
        %1057 = vmatprep.mubr.f32.mxu0 %v878
        %1058 = vmatmul.mubr.f32.gmra.mxu0 %v877
        %v1059 = vpop.f32.mrf.mxu0
        %v1060 = vadd.f32 %v974, %v1059
        %v1061 = vpop.f32.mrf.mxu0
        %v1062 = vadd.f32 %v978, %v1061
        %1063 = vmatprep.mubr.f32.mxu0 %v880
        %1064 = vmatmul.mubr.f32.gmra.mxu0 %v879
        %v1065 = vpop.f32.mrf.mxu0
        %v1066 = vadd.f32 %v974, %v1065
        %v1067 = vpop.f32.mrf.mxu0
        %v1068 = vadd.f32 %v978, %v1067
        %1069 = vmatprep.mubr.f32.mxu0 %v882
        %1070 = vmatmul.mubr.f32.gmra.mxu0 %v881
        %v1071 = vpop.f32.mrf.mxu0
        %v1072 = vadd.f32 %v974, %v1071
        %v1073 = vpop.f32.mrf.mxu0
        %v1074 = vadd.f32 %v978, %v1073
        %1075 = vmatprep.mubr.f32.mxu0 %v884
        %1076 = vmatmul.mubr.f32.gmra.mxu0 %v883
        %v1077 = vpop.f32.mrf.mxu0
        %v1078 = vadd.f32 %v974, %v1077
        %v1079 = vpop.f32.mrf.mxu0
        %v1080 = vadd.f32 %v978, %v1079
        %1081 = vmatprep.mubr.f32.mxu0 %v886
        %1082 = vmatmul.mubr.f32.gmra.mxu0 %v885
        %v1083 = vpop.f32.mrf.mxu0
        %v1084 = vadd.f32 %v974, %v1083
        %v1085 = vpop.f32.mrf.mxu0
        %v1086 = vadd.f32 %v978, %v1085
        %1087 = vmatprep.mubr.f32.mxu0 %v888
        %1088 = vmatmul.mubr.f32.gmra.mxu0 %v887
        %v1089 = vpop.f32.mrf.mxu0
        %v1090 = vadd.f32 %v974, %v1089
        %v1091 = vpop.f32.mrf.mxu0
        %v1092 = vadd.f32 %v978, %v1091
        %1093 = vmatprep.mubr.f32.mxu0 %v890
        %1094 = vmatmul.mubr.f32.gmra.mxu0 %v889
        %v1095 = vpop.f32.mrf.mxu0
        %v1096 = vadd.f32 %v974, %v1095
        %v1097 = vpop.f32.mrf.mxu0
        %v1098 = vadd.f32 %v978, %v1097
        %1099 = vmatprep.mubr.f32.mxu0 %v892
        %1100 = vmatmul.mubr.f32.gmra.mxu0 %v891
        %v1101 = vpop.f32.mrf.mxu0
        %v1102 = vadd.f32 %v974, %v1101
        %v1103 = vpop.f32.mrf.mxu0
        %v1104 = vadd.f32 %v978, %v1103
        %1105 = vmatprep.mubr.f32.mxu0 %v894
        %1106 = vmatmul.mubr.f32.gmra.mxu0 %v893
        %v1107 = vpop.f32.mrf.mxu0
        %v1108 = vadd.f32 %v974, %v1107
        %v1109 = vpop.f32.mrf.mxu0
        %v1110 = vadd.f32 %v978, %v1109
        %1111 = vmatprep.mubr.f32.mxu0 %v896
        %1112 = vmatmul.mubr.f32.gmra.mxu0 %v895
        %v1113 = vpop.f32.mrf.mxu0
        %v1114 = vadd.f32 %v974, %v1113
        %v1115 = vpop.f32.mrf.mxu0
        %v1116 = vadd.f32 %v978, %v1115
        %1117 = vmatprep.mubr.f32.mxu0 %v898
        %1118 = vmatmul.mubr.f32.gmra.mxu0 %v897
        %v1119 = vpop.f32.mrf.mxu0
        %v1120 = vadd.f32 %v974, %v1119
        %v1121 = vpop.f32.mrf.mxu0
        %v1122 = vadd.f32 %v978, %v1121
        %1123 = vmatprep.mubr.f32.mxu0 %v900
        %1124 = vmatmul.mubr.f32.gmra.mxu0 %v899
        %v1125 = vpop.f32.mrf.mxu0
        %v1126 = vadd.f32 %v974, %v1125
        %v1127 = vpop.f32.mrf.mxu0
        %v1128 = vadd.f32 %v978, %v1127
        %1129 = vmatprep.mubr.f32.mxu0 %v902
        %1130 = vmatmul.mubr.f32.gmra.mxu0 %v901
        %v1131 = vpop.f32.mrf.mxu0
        %v1132 = vadd.f32 %v974, %v1131
        %v1133 = vpop.f32.mrf.mxu0
        %v1134 = vadd.f32 %v978, %v1133
        %1135 = vmatprep.mubr.f32.mxu0 %v904
        %1136 = vmatmul.mubr.f32.gmra.mxu0 %v903
        %v1137 = vpop.f32.mrf.mxu0
        %v1138 = vadd.f32 %v974, %v1137
        %v1139 = vpop.f32.mrf.mxu0
        %v1140 = vadd.f32 %v978, %v1139
        %1141 = vdwg.mxu0
        %v1142 = vtanh.pop %v1048
        %v1143 = vtanh.pop %v1050
        %v1144 = vtanh.pop %v1054
        %v1145 = vtanh.pop %v1056
        %v1146 = vtanh.pop %v1060
        %v1147 = vtanh.pop %v1062
        %v1148 = vtanh.pop %v1066
        %v1149 = vtanh.pop %v1068
        %v1150 = vtanh.pop %v1072
        %v1151 = vtanh.pop %v1074
        %v1152 = vtanh.pop %v1078
        %v1153 = vtanh.pop %v1080
        %v1154 = vtanh.pop %v1084
        %v1155 = vtanh.pop %v1086
        %v1156 = vtanh.pop %v1090
        %v1157 = vtanh.pop %v1092
        %v1158 = vtanh.pop %v1096
        %v1159 = vtanh.pop %v1098
        %v1160 = vtanh.pop %v1102
        %v1161 = vtanh.pop %v1104
        %v1162 = vtanh.pop %v1108
        %v1163 = vtanh.pop %v1110
        %v1164 = vtanh.pop %v1114
        %v1165 = vtanh.pop %v1116
        %v1166 = vtanh.pop %v1120
        %v1167 = vtanh.pop %v1122
        %v1168 = vtanh.pop %v1126
        %v1169 = vtanh.pop %v1128
        %v1170 = vtanh.pop %v1132
        %v1171 = vtanh.pop %v1134
        %v1172 = vtanh.pop %v1138
        %v1173 = vtanh.pop %v1140
        %v1174 = vld [vmem:[#allocation5] sm:$0xff]
        %v1175 = vld [vmem:[#allocation5 + $0x8] sm:$0xff]
        %v1176 = vld [vmem:[#allocation5 + $0x10] sm:$0xff]
        %v1177 = vld [vmem:[#allocation5 + $0x18] sm:$0xff]
        %v1178 = vld [vmem:[#allocation5 + $0x20] sm:$0xff]
        %v1179 = vld [vmem:[#allocation5 + $0x28] sm:$0xff]
        %v1180 = vld [vmem:[#allocation5 + $0x30] sm:$0xff]
        %v1181 = vld [vmem:[#allocation5 + $0x38] sm:$0xff]
        %v1182 = vld [vmem:[#allocation5 + $0x40] sm:$0xff]
        %v1183 = vld [vmem:[#allocation5 + $0x48] sm:$0xff]
        %v1184 = vld [vmem:[#allocation5 + $0x50] sm:$0xff]
        %v1185 = vld [vmem:[#allocation5 + $0x58] sm:$0xff]
        %v1186 = vld [vmem:[#allocation5 + $0x60] sm:$0xff]
        %v1187 = vld [vmem:[#allocation5 + $0x68] sm:$0xff]
        %v1188 = vld [vmem:[#allocation5 + $0x70] sm:$0xff]
        %v1189 = vld [vmem:[#allocation5 + $0x78] sm:$0xff]
        %v1190 = vld [vmem:[#allocation5 + $0x80] sm:$0xff]
        %v1191 = vld [vmem:[#allocation5 + $0x88] sm:$0xff]
        %v1192 = vld [vmem:[#allocation5 + $0x90] sm:$0xff]
        %v1193 = vld [vmem:[#allocation5 + $0x98] sm:$0xff]
        %v1194 = vld [vmem:[#allocation5 + $0xa0] sm:$0xff]
        %v1195 = vld [vmem:[#allocation5 + $0xa8] sm:$0xff]
        %v1196 = vld [vmem:[#allocation5 + $0xb0] sm:$0xff]
        %v1197 = vld [vmem:[#allocation5 + $0xb8] sm:$0xff]
        %v1198 = vld [vmem:[#allocation5 + $0xc0] sm:$0xff]
        %v1199 = vld [vmem:[#allocation5 + $0xc8] sm:$0xff]
        %v1200 = vld [vmem:[#allocation5 + $0xd0] sm:$0xff]
        %v1201 = vld [vmem:[#allocation5 + $0xd8] sm:$0xff]
        %v1202 = vld [vmem:[#allocation5 + $0xe0] sm:$0xff]
        %v1203 = vld [vmem:[#allocation5 + $0xe8] sm:$0xff]
        %v1204 = vld [vmem:[#allocation5 + $0xf0] sm:$0xff]
        %v1205 = vld [vmem:[#allocation5 + $0xf8] sm:$0xff]
        %v1206 = vld [vmem:[#allocation5 + $0x100] sm:$0xff]
        %v1207 = vld [vmem:[#allocation5 + $0x108] sm:$0xff]
        %v1208 = vld [vmem:[#allocation5 + $0x110] sm:$0xff]
        %v1209 = vld [vmem:[#allocation5 + $0x118] sm:$0xff]
        %v1210 = vld [vmem:[#allocation5 + $0x120] sm:$0xff]
        %v1211 = vld [vmem:[#allocation5 + $0x128] sm:$0xff]
        %v1212 = vld [vmem:[#allocation5 + $0x130] sm:$0xff]
        %v1213 = vld [vmem:[#allocation5 + $0x138] sm:$0xff]
        %v1214 = vld [vmem:[#allocation5 + $0x140] sm:$0xff]
        %v1215 = vld [vmem:[#allocation5 + $0x148] sm:$0xff]
        %v1216 = vld [vmem:[#allocation5 + $0x150] sm:$0xff]
        %v1217 = vld [vmem:[#allocation5 + $0x158] sm:$0xff]
        %v1218 = vld [vmem:[#allocation5 + $0x160] sm:$0xff]
        %v1219 = vld [vmem:[#allocation5 + $0x168] sm:$0xff]
        %v1220 = vld [vmem:[#allocation5 + $0x170] sm:$0xff]
        %v1221 = vld [vmem:[#allocation5 + $0x178] sm:$0xff]
        %v1222 = vld [vmem:[#allocation5 + $0x180] sm:$0xff]
        %v1223 = vld [vmem:[#allocation5 + $0x188] sm:$0xff]
        %v1224 = vld [vmem:[#allocation5 + $0x190] sm:$0xff]
        %v1225 = vld [vmem:[#allocation5 + $0x198] sm:$0xff]
        %v1226 = vld [vmem:[#allocation5 + $0x1a0] sm:$0xff]
        %v1227 = vld [vmem:[#allocation5 + $0x1a8] sm:$0xff]
        %v1228 = vld [vmem:[#allocation5 + $0x1b0] sm:$0xff]
        %v1229 = vld [vmem:[#allocation5 + $0x1b8] sm:$0xff]
        %v1230 = vld [vmem:[#allocation5 + $0x1c0] sm:$0xff]
        %v1231 = vld [vmem:[#allocation5 + $0x1c8] sm:$0xff]
        %v1232 = vld [vmem:[#allocation5 + $0x1d0] sm:$0xff]
        %v1233 = vld [vmem:[#allocation5 + $0x1d8] sm:$0xff]
        %v1234 = vld [vmem:[#allocation5 + $0x1e0] sm:$0xff]
        %v1235 = vld [vmem:[#allocation5 + $0x1e8] sm:$0xff]
        %v1236 = vld [vmem:[#allocation5 + $0x1f0] sm:$0xff]
        %v1237 = vld [vmem:[#allocation5 + $0x1f8] sm:$0xff]
        %v1238 = vld [vmem:[%s8] sm:$0x3]
        %v1240 = vlaneseq
        %v1241 = vshrl.u32 %v1240, 7
        %v1242 = vsub.s32 0, %v1241
        %v1243 = vrot.slane %v1238, %v1242
        %v1244 = vlaneseq
        %v1245 = vshrl.u32 %v1244, 7
        %v1246 = vsub.s32 1, %v1245
        %v1247 = vrot.slane %v1238, %v1246
        %1250 = vmatprep.subr.mxu0 %v1205
        %1251 = vmatpush1.msra.mxu0 %v1204
        %1252 = vmatprep.subr.mxu0 %v1203
        %1253 = vmatpush1.msra.mxu0 %v1202
        %1254 = vmatprep.subr.mxu0 %v1201
        %1255 = vmatpush1.msra.mxu0 %v1200
        %1256 = vmatprep.subr.mxu0 %v1199
        %1257 = vmatpush1.msra.mxu0 %v1198
        %1258 = vmatprep.subr.mxu0 %v1197
        %1259 = vmatpush1.msra.mxu0 %v1196
        %1260 = vmatprep.subr.mxu0 %v1195
        %1261 = vmatpush1.msra.mxu0 %v1194
        %1262 = vmatprep.subr.mxu0 %v1193
        %1263 = vmatpush1.msra.mxu0 %v1192
        %1264 = vmatprep.subr.mxu0 %v1191
        %1265 = vmatpush1.msra.mxu0 %v1190
        %1266 = vmatprep.subr.mxu0 %v1189
        %1267 = vmatpush1.msra.mxu0 %v1188
        %1268 = vmatprep.subr.mxu0 %v1187
        %1269 = vmatpush1.msra.mxu0 %v1186
        %1270 = vmatprep.subr.mxu0 %v1185
        %1271 = vmatpush1.msra.mxu0 %v1184
        %1272 = vmatprep.subr.mxu0 %v1183
        %1273 = vmatpush1.msra.mxu0 %v1182
        %1274 = vmatprep.subr.mxu0 %v1181
        %1275 = vmatpush1.msra.mxu0 %v1180
        %1276 = vmatprep.subr.mxu0 %v1179
        %1277 = vmatpush1.msra.mxu0 %v1178
        %1278 = vmatprep.subr.mxu0 %v1177
        %1279 = vmatpush1.msra.mxu0 %v1176
        %1280 = vmatprep.subr.mxu0 %v1175
        %1281 = vmatpush1.msra.mxu0 %v1174
        %1282 = vmatprep.subr.mxu0 %v1237
        %1283 = vmatpush2.msra.mxu0 %v1236
        %1284 = vmatprep.subr.mxu0 %v1235
        %1285 = vmatpush2.msra.mxu0 %v1234
        %1286 = vmatprep.subr.mxu0 %v1233
        %1287 = vmatpush2.msra.mxu0 %v1232
        %1288 = vmatprep.subr.mxu0 %v1231
        %1289 = vmatpush2.msra.mxu0 %v1230
        %1290 = vmatprep.subr.mxu0 %v1229
        %1291 = vmatpush2.msra.mxu0 %v1228
        %1292 = vmatprep.subr.mxu0 %v1227
        %1293 = vmatpush2.msra.mxu0 %v1226
        %1294 = vmatprep.subr.mxu0 %v1225
        %1295 = vmatpush2.msra.mxu0 %v1224
        %1296 = vmatprep.subr.mxu0 %v1223
        %1297 = vmatpush2.msra.mxu0 %v1222
        %1298 = vmatprep.subr.mxu0 %v1221
        %1299 = vmatpush2.msra.mxu0 %v1220
        %1300 = vmatprep.subr.mxu0 %v1219
        %1301 = vmatpush2.msra.mxu0 %v1218
        %1302 = vmatprep.subr.mxu0 %v1217
        %1303 = vmatpush2.msra.mxu0 %v1216
        %1304 = vmatprep.subr.mxu0 %v1215
        %1305 = vmatpush2.msra.mxu0 %v1214
        %1306 = vmatprep.subr.mxu0 %v1213
        %1307 = vmatpush2.msra.mxu0 %v1212
        %1308 = vmatprep.subr.mxu0 %v1211
        %1309 = vmatpush2.msra.mxu0 %v1210
        %1310 = vmatprep.subr.mxu0 %v1209
        %1311 = vmatpush2.msra.mxu0 %v1208
        %1312 = vmatprep.subr.mxu0 %v1207
        %1313 = vmatpush2.msra.mxu0 %v1206
        %1314 = vmatprep.mubr.f32.mxu0 %v1143
        %1315 = vmatmul.mubr.f32.gmra.mxu0 %v1142
        %v1316 = vpop.f32.mrf.mxu0
        %v1317 = vadd.f32 %v1243, %v1316
        %v1318 = vpop.f32.mrf.mxu0
        %v1319 = vadd.f32 %v1247, %v1318
        %1320 = vmatprep.mubr.f32.mxu0 %v1145
        %1321 = vmatmul.mubr.f32.gmra.mxu0 %v1144
        %v1322 = vpop.f32.mrf.mxu0
        %v1323 = vadd.f32 %v1243, %v1322
        %v1324 = vpop.f32.mrf.mxu0
        %v1325 = vadd.f32 %v1247, %v1324
        %1326 = vmatprep.mubr.f32.mxu0 %v1147
        %1327 = vmatmul.mubr.f32.gmra.mxu0 %v1146
        %v1328 = vpop.f32.mrf.mxu0
        %v1329 = vadd.f32 %v1243, %v1328
        %v1330 = vpop.f32.mrf.mxu0
        %v1331 = vadd.f32 %v1247, %v1330
        %1332 = vmatprep.mubr.f32.mxu0 %v1149
        %1333 = vmatmul.mubr.f32.gmra.mxu0 %v1148
        %v1334 = vpop.f32.mrf.mxu0
        %v1335 = vadd.f32 %v1243, %v1334
        %v1336 = vpop.f32.mrf.mxu0
        %v1337 = vadd.f32 %v1247, %v1336
        %1338 = vmatprep.mubr.f32.mxu0 %v1151
        %1339 = vmatmul.mubr.f32.gmra.mxu0 %v1150
        %v1340 = vpop.f32.mrf.mxu0
        %v1341 = vadd.f32 %v1243, %v1340
        %v1342 = vpop.f32.mrf.mxu0
        %v1343 = vadd.f32 %v1247, %v1342
        %1344 = vmatprep.mubr.f32.mxu0 %v1153
        %1345 = vmatmul.mubr.f32.gmra.mxu0 %v1152
        %v1346 = vpop.f32.mrf.mxu0
        %v1347 = vadd.f32 %v1243, %v1346
        %v1348 = vpop.f32.mrf.mxu0
        %v1349 = vadd.f32 %v1247, %v1348
        %1350 = vmatprep.mubr.f32.mxu0 %v1155
        %1351 = vmatmul.mubr.f32.gmra.mxu0 %v1154
        %v1352 = vpop.f32.mrf.mxu0
        %v1353 = vadd.f32 %v1243, %v1352
        %v1354 = vpop.f32.mrf.mxu0
        %v1355 = vadd.f32 %v1247, %v1354
        %1356 = vmatprep.mubr.f32.mxu0 %v1157
        %1357 = vmatmul.mubr.f32.gmra.mxu0 %v1156
        %v1358 = vpop.f32.mrf.mxu0
        %v1359 = vadd.f32 %v1243, %v1358
        %v1360 = vpop.f32.mrf.mxu0
        %v1361 = vadd.f32 %v1247, %v1360
        %1362 = vmatprep.mubr.f32.mxu0 %v1159
        %1363 = vmatmul.mubr.f32.gmra.mxu0 %v1158
        %v1364 = vpop.f32.mrf.mxu0
        %v1365 = vadd.f32 %v1243, %v1364
        %v1366 = vpop.f32.mrf.mxu0
        %v1367 = vadd.f32 %v1247, %v1366
        %1368 = vmatprep.mubr.f32.mxu0 %v1161
        %1369 = vmatmul.mubr.f32.gmra.mxu0 %v1160
        %v1370 = vpop.f32.mrf.mxu0
        %v1371 = vadd.f32 %v1243, %v1370
        %v1372 = vpop.f32.mrf.mxu0
        %v1373 = vadd.f32 %v1247, %v1372
        %1374 = vmatprep.mubr.f32.mxu0 %v1163
        %1375 = vmatmul.mubr.f32.gmra.mxu0 %v1162
        %v1376 = vpop.f32.mrf.mxu0
        %v1377 = vadd.f32 %v1243, %v1376
        %v1378 = vpop.f32.mrf.mxu0
        %v1379 = vadd.f32 %v1247, %v1378
        %1380 = vmatprep.mubr.f32.mxu0 %v1165
        %1381 = vmatmul.mubr.f32.gmra.mxu0 %v1164
        %v1382 = vpop.f32.mrf.mxu0
        %v1383 = vadd.f32 %v1243, %v1382
        %v1384 = vpop.f32.mrf.mxu0
        %v1385 = vadd.f32 %v1247, %v1384
        %1386 = vmatprep.mubr.f32.mxu0 %v1167
        %1387 = vmatmul.mubr.f32.gmra.mxu0 %v1166
        %v1388 = vpop.f32.mrf.mxu0
        %v1389 = vadd.f32 %v1243, %v1388
        %v1390 = vpop.f32.mrf.mxu0
        %v1391 = vadd.f32 %v1247, %v1390
        %1392 = vmatprep.mubr.f32.mxu0 %v1169
        %1393 = vmatmul.mubr.f32.gmra.mxu0 %v1168
        %v1394 = vpop.f32.mrf.mxu0
        %v1395 = vadd.f32 %v1243, %v1394
        %v1396 = vpop.f32.mrf.mxu0
        %v1397 = vadd.f32 %v1247, %v1396
        %1398 = vmatprep.mubr.f32.mxu0 %v1171
        %1399 = vmatmul.mubr.f32.gmra.mxu0 %v1170
        %v1400 = vpop.f32.mrf.mxu0
        %v1401 = vadd.f32 %v1243, %v1400
        %v1402 = vpop.f32.mrf.mxu0
        %v1403 = vadd.f32 %v1247, %v1402
        %1404 = vmatprep.mubr.f32.mxu0 %v1173
        %1405 = vmatmul.mubr.f32.gmra.mxu0 %v1172
        %v1406 = vpop.f32.mrf.mxu0
        %v1407 = vadd.f32 %v1243, %v1406
        %v1408 = vpop.f32.mrf.mxu0
        %v1409 = vadd.f32 %v1247, %v1408
        %1410 = vdwg.mxu0
        %v1411 = vtanh.pop %v1317
        %v1412 = vtanh.pop %v1319
        %v1413 = vtanh.pop %v1323
        %v1414 = vtanh.pop %v1325
        %v1415 = vtanh.pop %v1329
        %v1416 = vtanh.pop %v1331
        %v1417 = vtanh.pop %v1335
        %v1418 = vtanh.pop %v1337
        %v1419 = vtanh.pop %v1341
        %v1420 = vtanh.pop %v1343
        %v1421 = vtanh.pop %v1347
        %v1422 = vtanh.pop %v1349
        %v1423 = vtanh.pop %v1353
        %v1424 = vtanh.pop %v1355
        %v1425 = vtanh.pop %v1359
        %v1426 = vtanh.pop %v1361
        %v1427 = vtanh.pop %v1365
        %v1428 = vtanh.pop %v1367
        %v1429 = vtanh.pop %v1371
        %v1430 = vtanh.pop %v1373
        %v1431 = vtanh.pop %v1377
        %v1432 = vtanh.pop %v1379
        %v1433 = vtanh.pop %v1383
        %v1434 = vtanh.pop %v1385
        %v1435 = vtanh.pop %v1389
        %v1436 = vtanh.pop %v1391
        %v1437 = vtanh.pop %v1395
        %v1438 = vtanh.pop %v1397
        %v1439 = vtanh.pop %v1401
        %v1440 = vtanh.pop %v1403
        %v1441 = vtanh.pop %v1407
        %v1442 = vtanh.pop %v1409
        %v1443 = vld [vmem:[#allocation8] sm:$0xff]
        %v1444 = vld [vmem:[#allocation8 + $0x8] sm:$0xff]
        %v1445 = vld [vmem:[#allocation8 + $0x10] sm:$0xff]
        %v1446 = vld [vmem:[#allocation8 + $0x18] sm:$0xff]
        %v1447 = vld [vmem:[#allocation8 + $0x20] sm:$0xff]
        %v1448 = vld [vmem:[#allocation8 + $0x28] sm:$0xff]
        %v1449 = vld [vmem:[#allocation8 + $0x30] sm:$0xff]
        %v1450 = vld [vmem:[#allocation8 + $0x38] sm:$0xff]
        %v1451 = vld [vmem:[#allocation8 + $0x40] sm:$0xff]
        %v1452 = vld [vmem:[#allocation8 + $0x48] sm:$0xff]
        %v1453 = vld [vmem:[#allocation8 + $0x50] sm:$0xff]
        %v1454 = vld [vmem:[#allocation8 + $0x58] sm:$0xff]
        %v1455 = vld [vmem:[#allocation8 + $0x60] sm:$0xff]
        %v1456 = vld [vmem:[#allocation8 + $0x68] sm:$0xff]
        %v1457 = vld [vmem:[#allocation8 + $0x70] sm:$0xff]
        %v1458 = vld [vmem:[#allocation8 + $0x78] sm:$0xff]
        %v1459 = vld [vmem:[#allocation8 + $0x80] sm:$0xff]
        %v1460 = vld [vmem:[#allocation8 + $0x88] sm:$0xff]
        %v1461 = vld [vmem:[#allocation8 + $0x90] sm:$0xff]
        %v1462 = vld [vmem:[#allocation8 + $0x98] sm:$0xff]
        %v1463 = vld [vmem:[#allocation8 + $0xa0] sm:$0xff]
        %v1464 = vld [vmem:[#allocation8 + $0xa8] sm:$0xff]
        %v1465 = vld [vmem:[#allocation8 + $0xb0] sm:$0xff]
        %v1466 = vld [vmem:[#allocation8 + $0xb8] sm:$0xff]
        %v1467 = vld [vmem:[#allocation8 + $0xc0] sm:$0xff]
        %v1468 = vld [vmem:[#allocation8 + $0xc8] sm:$0xff]
        %v1469 = vld [vmem:[#allocation8 + $0xd0] sm:$0xff]
        %v1470 = vld [vmem:[#allocation8 + $0xd8] sm:$0xff]
        %v1471 = vld [vmem:[#allocation8 + $0xe0] sm:$0xff]
        %v1472 = vld [vmem:[#allocation8 + $0xe8] sm:$0xff]
        %v1473 = vld [vmem:[#allocation8 + $0xf0] sm:$0xff]
        %v1474 = vld [vmem:[#allocation8 + $0xf8] sm:$0xff]
        %v1475 = vld [vmem:[#allocation8 + $0x100] sm:$0xff]
        %v1476 = vld [vmem:[#allocation8 + $0x108] sm:$0xff]
        %v1477 = vld [vmem:[#allocation8 + $0x110] sm:$0xff]
        %v1478 = vld [vmem:[#allocation8 + $0x118] sm:$0xff]
        %v1479 = vld [vmem:[#allocation8 + $0x120] sm:$0xff]
        %v1480 = vld [vmem:[#allocation8 + $0x128] sm:$0xff]
        %v1481 = vld [vmem:[#allocation8 + $0x130] sm:$0xff]
        %v1482 = vld [vmem:[#allocation8 + $0x138] sm:$0xff]
        %v1483 = vld [vmem:[#allocation8 + $0x140] sm:$0xff]
        %v1484 = vld [vmem:[#allocation8 + $0x148] sm:$0xff]
        %v1485 = vld [vmem:[#allocation8 + $0x150] sm:$0xff]
        %v1486 = vld [vmem:[#allocation8 + $0x158] sm:$0xff]
        %v1487 = vld [vmem:[#allocation8 + $0x160] sm:$0xff]
        %v1488 = vld [vmem:[#allocation8 + $0x168] sm:$0xff]
        %v1489 = vld [vmem:[#allocation8 + $0x170] sm:$0xff]
        %v1490 = vld [vmem:[#allocation8 + $0x178] sm:$0xff]
        %v1491 = vld [vmem:[#allocation8 + $0x180] sm:$0xff]
        %v1492 = vld [vmem:[#allocation8 + $0x188] sm:$0xff]
        %v1493 = vld [vmem:[#allocation8 + $0x190] sm:$0xff]
        %v1494 = vld [vmem:[#allocation8 + $0x198] sm:$0xff]
        %v1495 = vld [vmem:[#allocation8 + $0x1a0] sm:$0xff]
        %v1496 = vld [vmem:[#allocation8 + $0x1a8] sm:$0xff]
        %v1497 = vld [vmem:[#allocation8 + $0x1b0] sm:$0xff]
        %v1498 = vld [vmem:[#allocation8 + $0x1b8] sm:$0xff]
        %v1499 = vld [vmem:[#allocation8 + $0x1c0] sm:$0xff]
        %v1500 = vld [vmem:[#allocation8 + $0x1c8] sm:$0xff]
        %v1501 = vld [vmem:[#allocation8 + $0x1d0] sm:$0xff]
        %v1502 = vld [vmem:[#allocation8 + $0x1d8] sm:$0xff]
        %v1503 = vld [vmem:[#allocation8 + $0x1e0] sm:$0xff]
        %v1504 = vld [vmem:[#allocation8 + $0x1e8] sm:$0xff]
        %v1505 = vld [vmem:[#allocation8 + $0x1f0] sm:$0xff]
        %v1506 = vld [vmem:[#allocation8 + $0x1f8] sm:$0xff]
        %v1507 = vld [vmem:[#allocation11] sm:$0x3]
        %v1509 = vlaneseq
        %v1510 = vshrl.u32 %v1509, 7
        %v1511 = vsub.s32 0, %v1510
        %v1512 = vrot.slane %v1507, %v1511
        %v1513 = vlaneseq
        %v1514 = vshrl.u32 %v1513, 7
        %v1515 = vsub.s32 1, %v1514
        %v1516 = vrot.slane %v1507, %v1515
        %1519 = vmatprep.subr.mxu0 %v1474
        %1520 = vmatpush1.msra.mxu0 %v1473
        %1521 = vmatprep.subr.mxu0 %v1472
        %1522 = vmatpush1.msra.mxu0 %v1471
        %1523 = vmatprep.subr.mxu0 %v1470
        %1524 = vmatpush1.msra.mxu0 %v1469
        %1525 = vmatprep.subr.mxu0 %v1468
        %1526 = vmatpush1.msra.mxu0 %v1467
        %1527 = vmatprep.subr.mxu0 %v1466
        %1528 = vmatpush1.msra.mxu0 %v1465
        %1529 = vmatprep.subr.mxu0 %v1464
        %1530 = vmatpush1.msra.mxu0 %v1463
        %1531 = vmatprep.subr.mxu0 %v1462
        %1532 = vmatpush1.msra.mxu0 %v1461
        %1533 = vmatprep.subr.mxu0 %v1460
        %1534 = vmatpush1.msra.mxu0 %v1459
        %1535 = vmatprep.subr.mxu0 %v1458
        %1536 = vmatpush1.msra.mxu0 %v1457
        %1537 = vmatprep.subr.mxu0 %v1456
        %1538 = vmatpush1.msra.mxu0 %v1455
        %1539 = vmatprep.subr.mxu0 %v1454
        %1540 = vmatpush1.msra.mxu0 %v1453
        %1541 = vmatprep.subr.mxu0 %v1452
        %1542 = vmatpush1.msra.mxu0 %v1451
        %1543 = vmatprep.subr.mxu0 %v1450
        %1544 = vmatpush1.msra.mxu0 %v1449
        %1545 = vmatprep.subr.mxu0 %v1448
        %1546 = vmatpush1.msra.mxu0 %v1447
        %1547 = vmatprep.subr.mxu0 %v1446
        %1548 = vmatpush1.msra.mxu0 %v1445
        %1549 = vmatprep.subr.mxu0 %v1444
        %1550 = vmatpush1.msra.mxu0 %v1443
        %1551 = vmatprep.subr.mxu0 %v1506
        %1552 = vmatpush2.msra.mxu0 %v1505
        %1553 = vmatprep.subr.mxu0 %v1504
        %1554 = vmatpush2.msra.mxu0 %v1503
        %1555 = vmatprep.subr.mxu0 %v1502
        %1556 = vmatpush2.msra.mxu0 %v1501
        %1557 = vmatprep.subr.mxu0 %v1500
        %1558 = vmatpush2.msra.mxu0 %v1499
        %1559 = vmatprep.subr.mxu0 %v1498
        %1560 = vmatpush2.msra.mxu0 %v1497
        %1561 = vmatprep.subr.mxu0 %v1496
        %1562 = vmatpush2.msra.mxu0 %v1495
        %1563 = vmatprep.subr.mxu0 %v1494
        %1564 = vmatpush2.msra.mxu0 %v1493
        %1565 = vmatprep.subr.mxu0 %v1492
        %1566 = vmatpush2.msra.mxu0 %v1491
        %1567 = vmatprep.subr.mxu0 %v1490
        %1568 = vmatpush2.msra.mxu0 %v1489
        %1569 = vmatprep.subr.mxu0 %v1488
        %1570 = vmatpush2.msra.mxu0 %v1487
        %1571 = vmatprep.subr.mxu0 %v1486
        %1572 = vmatpush2.msra.mxu0 %v1485
        %1573 = vmatprep.subr.mxu0 %v1484
        %1574 = vmatpush2.msra.mxu0 %v1483
        %1575 = vmatprep.subr.mxu0 %v1482
        %1576 = vmatpush2.msra.mxu0 %v1481
        %1577 = vmatprep.subr.mxu0 %v1480
        %1578 = vmatpush2.msra.mxu0 %v1479
        %1579 = vmatprep.subr.mxu0 %v1478
        %1580 = vmatpush2.msra.mxu0 %v1477
        %1581 = vmatprep.subr.mxu0 %v1476
        %1582 = vmatpush2.msra.mxu0 %v1475
        %1583 = vmatprep.mubr.f32.mxu0 %v1412
        %1584 = vmatmul.mubr.f32.gmra.mxu0 %v1411
        %v1585 = vpop.f32.mrf.mxu0
        %v1586 = vadd.f32 %v1512, %v1585
        %v1587 = vpop.f32.mrf.mxu0
        %v1588 = vadd.f32 %v1516, %v1587
        %1589 = vmatprep.mubr.f32.mxu0 %v1414
        %1590 = vmatmul.mubr.f32.gmra.mxu0 %v1413
        %v1591 = vpop.f32.mrf.mxu0
        %v1592 = vadd.f32 %v1512, %v1591
        %v1593 = vpop.f32.mrf.mxu0
        %v1594 = vadd.f32 %v1516, %v1593
        %1595 = vmatprep.mubr.f32.mxu0 %v1416
        %1596 = vmatmul.mubr.f32.gmra.mxu0 %v1415
        %v1597 = vpop.f32.mrf.mxu0
        %v1598 = vadd.f32 %v1512, %v1597
        %v1599 = vpop.f32.mrf.mxu0
        %v1600 = vadd.f32 %v1516, %v1599
        %1601 = vmatprep.mubr.f32.mxu0 %v1418
        %1602 = vmatmul.mubr.f32.gmra.mxu0 %v1417
        %v1603 = vpop.f32.mrf.mxu0
        %v1604 = vadd.f32 %v1512, %v1603
        %v1605 = vpop.f32.mrf.mxu0
        %v1606 = vadd.f32 %v1516, %v1605
        %1607 = vmatprep.mubr.f32.mxu0 %v1420
        %1608 = vmatmul.mubr.f32.gmra.mxu0 %v1419
        %v1609 = vpop.f32.mrf.mxu0
        %v1610 = vadd.f32 %v1512, %v1609
        %v1611 = vpop.f32.mrf.mxu0
        %v1612 = vadd.f32 %v1516, %v1611
        %1613 = vmatprep.mubr.f32.mxu0 %v1422
        %1614 = vmatmul.mubr.f32.gmra.mxu0 %v1421
        %v1615 = vpop.f32.mrf.mxu0
        %v1616 = vadd.f32 %v1512, %v1615
        %v1617 = vpop.f32.mrf.mxu0
        %v1618 = vadd.f32 %v1516, %v1617
        %1619 = vmatprep.mubr.f32.mxu0 %v1424
        %1620 = vmatmul.mubr.f32.gmra.mxu0 %v1423
        %v1621 = vpop.f32.mrf.mxu0
        %v1622 = vadd.f32 %v1512, %v1621
        %v1623 = vpop.f32.mrf.mxu0
        %v1624 = vadd.f32 %v1516, %v1623
        %1625 = vmatprep.mubr.f32.mxu0 %v1426
        %1626 = vmatmul.mubr.f32.gmra.mxu0 %v1425
        %v1627 = vpop.f32.mrf.mxu0
        %v1628 = vadd.f32 %v1512, %v1627
        %v1629 = vpop.f32.mrf.mxu0
        %v1630 = vadd.f32 %v1516, %v1629
        %1631 = vmatprep.mubr.f32.mxu0 %v1428
        %1632 = vmatmul.mubr.f32.gmra.mxu0 %v1427
        %v1633 = vpop.f32.mrf.mxu0
        %v1634 = vadd.f32 %v1512, %v1633
        %v1635 = vpop.f32.mrf.mxu0
        %v1636 = vadd.f32 %v1516, %v1635
        %1637 = vmatprep.mubr.f32.mxu0 %v1430
        %1638 = vmatmul.mubr.f32.gmra.mxu0 %v1429
        %v1639 = vpop.f32.mrf.mxu0
        %v1640 = vadd.f32 %v1512, %v1639
        %v1641 = vpop.f32.mrf.mxu0
        %v1642 = vadd.f32 %v1516, %v1641
        %1643 = vmatprep.mubr.f32.mxu0 %v1432
        %1644 = vmatmul.mubr.f32.gmra.mxu0 %v1431
        %v1645 = vpop.f32.mrf.mxu0
        %v1646 = vadd.f32 %v1512, %v1645
        %v1647 = vpop.f32.mrf.mxu0
        %v1648 = vadd.f32 %v1516, %v1647
        %1649 = vmatprep.mubr.f32.mxu0 %v1434
        %1650 = vmatmul.mubr.f32.gmra.mxu0 %v1433
        %v1651 = vpop.f32.mrf.mxu0
        %v1652 = vadd.f32 %v1512, %v1651
        %v1653 = vpop.f32.mrf.mxu0
        %v1654 = vadd.f32 %v1516, %v1653
        %1655 = vmatprep.mubr.f32.mxu0 %v1436
        %1656 = vmatmul.mubr.f32.gmra.mxu0 %v1435
        %v1657 = vpop.f32.mrf.mxu0
        %v1658 = vadd.f32 %v1512, %v1657
        %v1659 = vpop.f32.mrf.mxu0
        %v1660 = vadd.f32 %v1516, %v1659
        %1661 = vmatprep.mubr.f32.mxu0 %v1438
        %1662 = vmatmul.mubr.f32.gmra.mxu0 %v1437
        %v1663 = vpop.f32.mrf.mxu0
        %v1664 = vadd.f32 %v1512, %v1663
        %v1665 = vpop.f32.mrf.mxu0
        %v1666 = vadd.f32 %v1516, %v1665
        %1667 = vmatprep.mubr.f32.mxu0 %v1440
        %1668 = vmatmul.mubr.f32.gmra.mxu0 %v1439
        %v1669 = vpop.f32.mrf.mxu0
        %v1670 = vadd.f32 %v1512, %v1669
        %v1671 = vpop.f32.mrf.mxu0
        %v1672 = vadd.f32 %v1516, %v1671
        %1673 = vmatprep.mubr.f32.mxu0 %v1442
        %1674 = vmatmul.mubr.f32.gmra.mxu0 %v1441
        %v1675 = vpop.f32.mrf.mxu0
        %v1676 = vadd.f32 %v1512, %v1675
        %v1677 = vpop.f32.mrf.mxu0
        %v1678 = vadd.f32 %v1516, %v1677
        %1679 = vdwg.mxu0
        %v1680 = vtanh.pop %v1586
        %v1681 = vtanh.pop %v1588
        %v1682 = vtanh.pop %v1592
        %v1683 = vtanh.pop %v1594
        %v1684 = vtanh.pop %v1598
        %v1685 = vtanh.pop %v1600
        %v1686 = vtanh.pop %v1604
        %v1687 = vtanh.pop %v1606
        %v1688 = vtanh.pop %v1610
        %v1689 = vtanh.pop %v1612
        %v1690 = vtanh.pop %v1616
        %v1691 = vtanh.pop %v1618
        %v1692 = vtanh.pop %v1622
        %v1693 = vtanh.pop %v1624
        %v1694 = vtanh.pop %v1628
        %v1695 = vtanh.pop %v1630
        %v1696 = vtanh.pop %v1634
        %v1697 = vtanh.pop %v1636
        %v1698 = vtanh.pop %v1640
        %v1699 = vtanh.pop %v1642
        %v1700 = vtanh.pop %v1646
        %v1701 = vtanh.pop %v1648
        %v1702 = vtanh.pop %v1652
        %v1703 = vtanh.pop %v1654
        %v1704 = vtanh.pop %v1658
        %v1705 = vtanh.pop %v1660
        %v1706 = vtanh.pop %v1664
        %v1707 = vtanh.pop %v1666
        %v1708 = vtanh.pop %v1670
        %v1709 = vtanh.pop %v1672
        %v1710 = vtanh.pop %v1676
        %v1711 = vtanh.pop %v1678
        %v1712 = vmul.f32 %v1680, %v1680
        %v1713 = vmul.f32 %v1681, %v1681
        %v1714 = vmul.f32 %v1682, %v1682
        %v1715 = vmul.f32 %v1683, %v1683
        %v1716 = vmul.f32 %v1684, %v1684
        %v1717 = vmul.f32 %v1685, %v1685
        %v1718 = vmul.f32 %v1686, %v1686
        %v1719 = vmul.f32 %v1687, %v1687
        %v1720 = vmul.f32 %v1688, %v1688
        %v1721 = vmul.f32 %v1689, %v1689
        %v1722 = vmul.f32 %v1690, %v1690
        %v1723 = vmul.f32 %v1691, %v1691
        %v1724 = vmul.f32 %v1692, %v1692
        %v1725 = vmul.f32 %v1693, %v1693
        %v1726 = vmul.f32 %v1694, %v1694
        %v1727 = vmul.f32 %v1695, %v1695
        %v1728 = vmul.f32 %v1696, %v1696
        %v1729 = vmul.f32 %v1697, %v1697
        %v1730 = vmul.f32 %v1698, %v1698
        %v1731 = vmul.f32 %v1699, %v1699
        %v1732 = vmul.f32 %v1700, %v1700
        %v1733 = vmul.f32 %v1701, %v1701
        %v1734 = vmul.f32 %v1702, %v1702
        %v1735 = vmul.f32 %v1703, %v1703
        %v1736 = vmul.f32 %v1704, %v1704
        %v1737 = vmul.f32 %v1705, %v1705
        %v1738 = vmul.f32 %v1706, %v1706
        %v1739 = vmul.f32 %v1707, %v1707
        %v1740 = vmul.f32 %v1708, %v1708
        %v1741 = vmul.f32 %v1709, %v1709
        %v1742 = vmul.f32 %v1710, %v1710
        %v1743 = vmul.f32 %v1711, %v1711
        %v1744 = vsub.f32 1.0, %v1712
        %v1745 = vsub.f32 1.0, %v1713
        %v1746 = vsub.f32 1.0, %v1714
        %v1747 = vsub.f32 1.0, %v1715
        %v1748 = vsub.f32 1.0, %v1716
        %v1749 = vsub.f32 1.0, %v1717
        %v1750 = vsub.f32 1.0, %v1718
        %v1751 = vsub.f32 1.0, %v1719
        %v1752 = vsub.f32 1.0, %v1720
        %v1753 = vsub.f32 1.0, %v1721
        %v1754 = vsub.f32 1.0, %v1722
        %v1755 = vsub.f32 1.0, %v1723
        %v1756 = vsub.f32 1.0, %v1724
        %v1757 = vsub.f32 1.0, %v1725
        %v1758 = vsub.f32 1.0, %v1726
        %v1759 = vsub.f32 1.0, %v1727
        %v1760 = vsub.f32 1.0, %v1728
        %v1761 = vsub.f32 1.0, %v1729
        %v1762 = vsub.f32 1.0, %v1730
        %v1763 = vsub.f32 1.0, %v1731
        %v1764 = vsub.f32 1.0, %v1732
        %v1765 = vsub.f32 1.0, %v1733
        %v1766 = vsub.f32 1.0, %v1734
        %v1767 = vsub.f32 1.0, %v1735
        %v1768 = vsub.f32 1.0, %v1736
        %v1769 = vsub.f32 1.0, %v1737
        %v1770 = vsub.f32 1.0, %v1738
        %v1771 = vsub.f32 1.0, %v1739
        %v1772 = vsub.f32 1.0, %v1740
        %v1773 = vsub.f32 1.0, %v1741
        %v1774 = vsub.f32 1.0, %v1742
        %v1775 = vsub.f32 1.0, %v1743
        %v1776 = vld [vmem:[%s12] sm:$0x3]
        %v1778 = vlaneseq
        %v1779 = vshrl.u32 %v1778, 7
        %v1780 = vsub.s32 0, %v1779
        %v1781 = vrot.slane %v1776, %v1780
        %v1782 = vlaneseq
        %v1783 = vshrl.u32 %v1782, 7
        %v1784 = vsub.s32 1, %v1783
        %v1785 = vrot.slane %v1776, %v1784
        %v1788 = vmul.f32 %v1744, %v1781
        %v1789 = vmul.f32 %v1745, %v1785
        %v1790 = vmul.f32 %v1746, %v1781
        %v1791 = vmul.f32 %v1747, %v1785
        %v1792 = vmul.f32 %v1748, %v1781
        %v1793 = vmul.f32 %v1749, %v1785
        %v1794 = vmul.f32 %v1750, %v1781
        %v1795 = vmul.f32 %v1751, %v1785
        %v1796 = vmul.f32 %v1752, %v1781
        %v1797 = vmul.f32 %v1753, %v1785
        %v1798 = vmul.f32 %v1754, %v1781
        %v1799 = vmul.f32 %v1755, %v1785
        %v1800 = vmul.f32 %v1756, %v1781
        %v1801 = vmul.f32 %v1757, %v1785
        %v1802 = vmul.f32 %v1758, %v1781
        %v1803 = vmul.f32 %v1759, %v1785
        %v1804 = vmul.f32 %v1760, %v1781
        %v1805 = vmul.f32 %v1761, %v1785
        %v1806 = vmul.f32 %v1762, %v1781
        %v1807 = vmul.f32 %v1763, %v1785
        %v1808 = vmul.f32 %v1764, %v1781
        %v1809 = vmul.f32 %v1765, %v1785
        %v1810 = vmul.f32 %v1766, %v1781
        %v1811 = vmul.f32 %v1767, %v1785
        %v1812 = vmul.f32 %v1768, %v1781
        %v1813 = vmul.f32 %v1769, %v1785
        %v1814 = vmul.f32 %v1770, %v1781
        %v1815 = vmul.f32 %v1771, %v1785
        %v1816 = vmul.f32 %v1772, %v1781
        %v1817 = vmul.f32 %v1773, %v1785
        %v1818 = vmul.f32 %v1774, %v1781
        %v1819 = vmul.f32 %v1775, %v1785
        %v1820 = vmul.f32 %v1411, %v1411
        %v1821 = vmul.f32 %v1412, %v1412
        %v1822 = vmul.f32 %v1413, %v1413
        %v1823 = vmul.f32 %v1414, %v1414
        %v1824 = vmul.f32 %v1415, %v1415
        %v1825 = vmul.f32 %v1416, %v1416
        %v1826 = vmul.f32 %v1417, %v1417
        %v1827 = vmul.f32 %v1418, %v1418
        %v1828 = vmul.f32 %v1419, %v1419
        %v1829 = vmul.f32 %v1420, %v1420
        %v1830 = vmul.f32 %v1421, %v1421
        %v1831 = vmul.f32 %v1422, %v1422
        %v1832 = vmul.f32 %v1423, %v1423
        %v1833 = vmul.f32 %v1424, %v1424
        %v1834 = vmul.f32 %v1425, %v1425
        %v1835 = vmul.f32 %v1426, %v1426
        %v1836 = vmul.f32 %v1427, %v1427
        %v1837 = vmul.f32 %v1428, %v1428
        %v1838 = vmul.f32 %v1429, %v1429
        %v1839 = vmul.f32 %v1430, %v1430
        %v1840 = vmul.f32 %v1431, %v1431
        %v1841 = vmul.f32 %v1432, %v1432
        %v1842 = vmul.f32 %v1433, %v1433
        %v1843 = vmul.f32 %v1434, %v1434
        %v1844 = vmul.f32 %v1435, %v1435
        %v1845 = vmul.f32 %v1436, %v1436
        %v1846 = vmul.f32 %v1437, %v1437
        %v1847 = vmul.f32 %v1438, %v1438
        %v1848 = vmul.f32 %v1439, %v1439
        %v1849 = vmul.f32 %v1440, %v1440
        %v1850 = vmul.f32 %v1441, %v1441
        %v1851 = vmul.f32 %v1442, %v1442
        %v1852 = vsub.f32 1.0, %v1820
        %v1853 = vsub.f32 1.0, %v1821
        %v1854 = vsub.f32 1.0, %v1822
        %v1855 = vsub.f32 1.0, %v1823
        %v1856 = vsub.f32 1.0, %v1824
        %v1857 = vsub.f32 1.0, %v1825
        %v1858 = vsub.f32 1.0, %v1826
        %v1859 = vsub.f32 1.0, %v1827
        %v1860 = vsub.f32 1.0, %v1828
        %v1861 = vsub.f32 1.0, %v1829
        %v1862 = vsub.f32 1.0, %v1830
        %v1863 = vsub.f32 1.0, %v1831
        %v1864 = vsub.f32 1.0, %v1832
        %v1865 = vsub.f32 1.0, %v1833
        %v1866 = vsub.f32 1.0, %v1834
        %v1867 = vsub.f32 1.0, %v1835
        %v1868 = vsub.f32 1.0, %v1836
        %v1869 = vsub.f32 1.0, %v1837
        %v1870 = vsub.f32 1.0, %v1838
        %v1871 = vsub.f32 1.0, %v1839
        %v1872 = vsub.f32 1.0, %v1840
        %v1873 = vsub.f32 1.0, %v1841
        %v1874 = vsub.f32 1.0, %v1842
        %v1875 = vsub.f32 1.0, %v1843
        %v1876 = vsub.f32 1.0, %v1844
        %v1877 = vsub.f32 1.0, %v1845
        %v1878 = vsub.f32 1.0, %v1846
        %v1879 = vsub.f32 1.0, %v1847
        %v1880 = vsub.f32 1.0, %v1848
        %v1881 = vsub.f32 1.0, %v1849
        %v1882 = vsub.f32 1.0, %v1850
        %v1883 = vsub.f32 1.0, %v1851
        %v1884 = vld [vmem:[#allocation10] sm:$0xff]
        %v1885 = vld [vmem:[#allocation10 + $0x8] sm:$0xff]
        %v1886 = vld [vmem:[#allocation10 + $0x10] sm:$0xff]
        %v1887 = vld [vmem:[#allocation10 + $0x18] sm:$0xff]
        %v1888 = vld [vmem:[#allocation10 + $0x20] sm:$0xff]
        %v1889 = vld [vmem:[#allocation10 + $0x28] sm:$0xff]
        %v1890 = vld [vmem:[#allocation10 + $0x30] sm:$0xff]
        %v1891 = vld [vmem:[#allocation10 + $0x38] sm:$0xff]
        %v1892 = vld [vmem:[#allocation10 + $0x40] sm:$0xff]
        %v1893 = vld [vmem:[#allocation10 + $0x48] sm:$0xff]
        %v1894 = vld [vmem:[#allocation10 + $0x50] sm:$0xff]
        %v1895 = vld [vmem:[#allocation10 + $0x58] sm:$0xff]
        %v1896 = vld [vmem:[#allocation10 + $0x60] sm:$0xff]
        %v1897 = vld [vmem:[#allocation10 + $0x68] sm:$0xff]
        %v1898 = vld [vmem:[#allocation10 + $0x70] sm:$0xff]
        %v1899 = vld [vmem:[#allocation10 + $0x78] sm:$0xff]
        %v1900 = vld [vmem:[#allocation10 + $0x80] sm:$0xff]
        %v1901 = vld [vmem:[#allocation10 + $0x88] sm:$0xff]
        %v1902 = vld [vmem:[#allocation10 + $0x90] sm:$0xff]
        %v1903 = vld [vmem:[#allocation10 + $0x98] sm:$0xff]
        %v1904 = vld [vmem:[#allocation10 + $0xa0] sm:$0xff]
        %v1905 = vld [vmem:[#allocation10 + $0xa8] sm:$0xff]
        %v1906 = vld [vmem:[#allocation10 + $0xb0] sm:$0xff]
        %v1907 = vld [vmem:[#allocation10 + $0xb8] sm:$0xff]
        %v1908 = vld [vmem:[#allocation10 + $0xc0] sm:$0xff]
        %v1909 = vld [vmem:[#allocation10 + $0xc8] sm:$0xff]
        %v1910 = vld [vmem:[#allocation10 + $0xd0] sm:$0xff]
        %v1911 = vld [vmem:[#allocation10 + $0xd8] sm:$0xff]
        %v1912 = vld [vmem:[#allocation10 + $0xe0] sm:$0xff]
        %v1913 = vld [vmem:[#allocation10 + $0xe8] sm:$0xff]
        %v1914 = vld [vmem:[#allocation10 + $0xf0] sm:$0xff]
        %v1915 = vld [vmem:[#allocation10 + $0xf8] sm:$0xff]
        %v1916 = vld [vmem:[#allocation10 + $0x100] sm:$0xff]
        %v1917 = vld [vmem:[#allocation10 + $0x108] sm:$0xff]
        %v1918 = vld [vmem:[#allocation10 + $0x110] sm:$0xff]
        %v1919 = vld [vmem:[#allocation10 + $0x118] sm:$0xff]
        %v1920 = vld [vmem:[#allocation10 + $0x120] sm:$0xff]
        %v1921 = vld [vmem:[#allocation10 + $0x128] sm:$0xff]
        %v1922 = vld [vmem:[#allocation10 + $0x130] sm:$0xff]
        %v1923 = vld [vmem:[#allocation10 + $0x138] sm:$0xff]
        %v1924 = vld [vmem:[#allocation10 + $0x140] sm:$0xff]
        %v1925 = vld [vmem:[#allocation10 + $0x148] sm:$0xff]
        %v1926 = vld [vmem:[#allocation10 + $0x150] sm:$0xff]
        %v1927 = vld [vmem:[#allocation10 + $0x158] sm:$0xff]
        %v1928 = vld [vmem:[#allocation10 + $0x160] sm:$0xff]
        %v1929 = vld [vmem:[#allocation10 + $0x168] sm:$0xff]
        %v1930 = vld [vmem:[#allocation10 + $0x170] sm:$0xff]
        %v1931 = vld [vmem:[#allocation10 + $0x178] sm:$0xff]
        %v1932 = vld [vmem:[#allocation10 + $0x180] sm:$0xff]
        %v1933 = vld [vmem:[#allocation10 + $0x188] sm:$0xff]
        %v1934 = vld [vmem:[#allocation10 + $0x190] sm:$0xff]
        %v1935 = vld [vmem:[#allocation10 + $0x198] sm:$0xff]
        %v1936 = vld [vmem:[#allocation10 + $0x1a0] sm:$0xff]
        %v1937 = vld [vmem:[#allocation10 + $0x1a8] sm:$0xff]
        %v1938 = vld [vmem:[#allocation10 + $0x1b0] sm:$0xff]
        %v1939 = vld [vmem:[#allocation10 + $0x1b8] sm:$0xff]
        %v1940 = vld [vmem:[#allocation10 + $0x1c0] sm:$0xff]
        %v1941 = vld [vmem:[#allocation10 + $0x1c8] sm:$0xff]
        %v1942 = vld [vmem:[#allocation10 + $0x1d0] sm:$0xff]
        %v1943 = vld [vmem:[#allocation10 + $0x1d8] sm:$0xff]
        %v1944 = vld [vmem:[#allocation10 + $0x1e0] sm:$0xff]
        %v1945 = vld [vmem:[#allocation10 + $0x1e8] sm:$0xff]
        %v1946 = vld [vmem:[#allocation10 + $0x1f0] sm:$0xff]
        %v1947 = vld [vmem:[#allocation10 + $0x1f8] sm:$0xff]
        %1948 = vmatprep.subr.mxu0 %v1915
        %1949 = vmatpush1.msra.mxu0 %v1914
        %1950 = vmatprep.subr.mxu0 %v1913
        %1951 = vmatpush1.msra.mxu0 %v1912
        %1952 = vmatprep.subr.mxu0 %v1911
        %1953 = vmatpush1.msra.mxu0 %v1910
        %1954 = vmatprep.subr.mxu0 %v1909
        %1955 = vmatpush1.msra.mxu0 %v1908
        %1956 = vmatprep.subr.mxu0 %v1907
        %1957 = vmatpush1.msra.mxu0 %v1906
        %1958 = vmatprep.subr.mxu0 %v1905
        %1959 = vmatpush1.msra.mxu0 %v1904
        %1960 = vmatprep.subr.mxu0 %v1903
        %1961 = vmatpush1.msra.mxu0 %v1902
        %1962 = vmatprep.subr.mxu0 %v1901
        %1963 = vmatpush1.msra.mxu0 %v1900
        %1964 = vmatprep.subr.mxu0 %v1899
        %1965 = vmatpush1.msra.mxu0 %v1898
        %1966 = vmatprep.subr.mxu0 %v1897
        %1967 = vmatpush1.msra.mxu0 %v1896
        %1968 = vmatprep.subr.mxu0 %v1895
        %1969 = vmatpush1.msra.mxu0 %v1894
        %1970 = vmatprep.subr.mxu0 %v1893
        %1971 = vmatpush1.msra.mxu0 %v1892
        %1972 = vmatprep.subr.mxu0 %v1891
        %1973 = vmatpush1.msra.mxu0 %v1890
        %1974 = vmatprep.subr.mxu0 %v1889
        %1975 = vmatpush1.msra.mxu0 %v1888
        %1976 = vmatprep.subr.mxu0 %v1887
        %1977 = vmatpush1.msra.mxu0 %v1886
        %1978 = vmatprep.subr.mxu0 %v1885
        %1979 = vmatpush1.msra.mxu0 %v1884
        %1980 = vmatprep.subr.mxu0 %v1947
        %1981 = vmatpush2.msra.mxu0 %v1946
        %1982 = vmatprep.subr.mxu0 %v1945
        %1983 = vmatpush2.msra.mxu0 %v1944
        %1984 = vmatprep.subr.mxu0 %v1943
        %1985 = vmatpush2.msra.mxu0 %v1942
        %1986 = vmatprep.subr.mxu0 %v1941
        %1987 = vmatpush2.msra.mxu0 %v1940
        %1988 = vmatprep.subr.mxu0 %v1939
        %1989 = vmatpush2.msra.mxu0 %v1938
        %1990 = vmatprep.subr.mxu0 %v1937
        %1991 = vmatpush2.msra.mxu0 %v1936
        %1992 = vmatprep.subr.mxu0 %v1935
        %1993 = vmatpush2.msra.mxu0 %v1934
        %1994 = vmatprep.subr.mxu0 %v1933
        %1995 = vmatpush2.msra.mxu0 %v1932
        %1996 = vmatprep.subr.mxu0 %v1931
        %1997 = vmatpush2.msra.mxu0 %v1930
        %1998 = vmatprep.subr.mxu0 %v1929
        %1999 = vmatpush2.msra.mxu0 %v1928
        %2000 = vmatprep.subr.mxu0 %v1927
        %2001 = vmatpush2.msra.mxu0 %v1926
        %2002 = vmatprep.subr.mxu0 %v1925
        %2003 = vmatpush2.msra.mxu0 %v1924
        %2004 = vmatprep.subr.mxu0 %v1923
        %2005 = vmatpush2.msra.mxu0 %v1922
        %2006 = vmatprep.subr.mxu0 %v1921
        %2007 = vmatpush2.msra.mxu0 %v1920
        %2008 = vmatprep.subr.mxu0 %v1919
        %2009 = vmatpush2.msra.mxu0 %v1918
        %2010 = vmatprep.subr.mxu0 %v1917
        %2011 = vmatpush2.msra.mxu0 %v1916
        %2012 = vmatprep.mubr.f32.mxu0 %v1789
        %2013 = vmatmul.mubr.f32.gmra.mxu0 %v1788
        %v2014 = vpop.f32.mrf.mxu0
        %v2015 = vadd.f32 0.0, %v2014
        %v2016 = vpop.f32.mrf.mxu0
        %v2017 = vadd.f32 0.0, %v2016
        %2018 = vmatprep.mubr.f32.mxu0 %v1791
        %2019 = vmatmul.mubr.f32.gmra.mxu0 %v1790
        %v2020 = vpop.f32.mrf.mxu0
        %v2021 = vadd.f32 0.0, %v2020
        %v2022 = vpop.f32.mrf.mxu0
        %v2023 = vadd.f32 0.0, %v2022
        %2024 = vmatprep.mubr.f32.mxu0 %v1793
        %2025 = vmatmul.mubr.f32.gmra.mxu0 %v1792
        %v2026 = vpop.f32.mrf.mxu0
        %v2027 = vadd.f32 0.0, %v2026
        %v2028 = vpop.f32.mrf.mxu0
        %v2029 = vadd.f32 0.0, %v2028
        %2030 = vmatprep.mubr.f32.mxu0 %v1795
        %2031 = vmatmul.mubr.f32.gmra.mxu0 %v1794
        %v2032 = vpop.f32.mrf.mxu0
        %v2033 = vadd.f32 0.0, %v2032
        %v2034 = vpop.f32.mrf.mxu0
        %v2035 = vadd.f32 0.0, %v2034
        %2036 = vmatprep.mubr.f32.mxu0 %v1797
        %2037 = vmatmul.mubr.f32.gmra.mxu0 %v1796
        %v2038 = vpop.f32.mrf.mxu0
        %v2039 = vadd.f32 0.0, %v2038
        %v2040 = vpop.f32.mrf.mxu0
        %v2041 = vadd.f32 0.0, %v2040
        %2042 = vmatprep.mubr.f32.mxu0 %v1799
        %2043 = vmatmul.mubr.f32.gmra.mxu0 %v1798
        %v2044 = vpop.f32.mrf.mxu0
        %v2045 = vadd.f32 0.0, %v2044
        %v2046 = vpop.f32.mrf.mxu0
        %v2047 = vadd.f32 0.0, %v2046
        %2048 = vmatprep.mubr.f32.mxu0 %v1801
        %2049 = vmatmul.mubr.f32.gmra.mxu0 %v1800
        %v2050 = vpop.f32.mrf.mxu0
        %v2051 = vadd.f32 0.0, %v2050
        %v2052 = vpop.f32.mrf.mxu0
        %v2053 = vadd.f32 0.0, %v2052
        %2054 = vmatprep.mubr.f32.mxu0 %v1803
        %2055 = vmatmul.mubr.f32.gmra.mxu0 %v1802
        %v2056 = vpop.f32.mrf.mxu0
        %v2057 = vadd.f32 0.0, %v2056
        %v2058 = vpop.f32.mrf.mxu0
        %v2059 = vadd.f32 0.0, %v2058
        %2060 = vmatprep.mubr.f32.mxu0 %v1805
        %2061 = vmatmul.mubr.f32.gmra.mxu0 %v1804
        %v2062 = vpop.f32.mrf.mxu0
        %v2063 = vadd.f32 0.0, %v2062
        %v2064 = vpop.f32.mrf.mxu0
        %v2065 = vadd.f32 0.0, %v2064
        %2066 = vmatprep.mubr.f32.mxu0 %v1807
        %2067 = vmatmul.mubr.f32.gmra.mxu0 %v1806
        %v2068 = vpop.f32.mrf.mxu0
        %v2069 = vadd.f32 0.0, %v2068
        %v2070 = vpop.f32.mrf.mxu0
        %v2071 = vadd.f32 0.0, %v2070
        %2072 = vmatprep.mubr.f32.mxu0 %v1809
        %2073 = vmatmul.mubr.f32.gmra.mxu0 %v1808
        %v2074 = vpop.f32.mrf.mxu0
        %v2075 = vadd.f32 0.0, %v2074
        %v2076 = vpop.f32.mrf.mxu0
        %v2077 = vadd.f32 0.0, %v2076
        %2078 = vmatprep.mubr.f32.mxu0 %v1811
        %2079 = vmatmul.mubr.f32.gmra.mxu0 %v1810
        %v2080 = vpop.f32.mrf.mxu0
        %v2081 = vadd.f32 0.0, %v2080
        %v2082 = vpop.f32.mrf.mxu0
        %v2083 = vadd.f32 0.0, %v2082
        %2084 = vmatprep.mubr.f32.mxu0 %v1813
        %2085 = vmatmul.mubr.f32.gmra.mxu0 %v1812
        %v2086 = vpop.f32.mrf.mxu0
        %v2087 = vadd.f32 0.0, %v2086
        %v2088 = vpop.f32.mrf.mxu0
        %v2089 = vadd.f32 0.0, %v2088
        %2090 = vmatprep.mubr.f32.mxu0 %v1815
        %2091 = vmatmul.mubr.f32.gmra.mxu0 %v1814
        %v2092 = vpop.f32.mrf.mxu0
        %v2093 = vadd.f32 0.0, %v2092
        %v2094 = vpop.f32.mrf.mxu0
        %v2095 = vadd.f32 0.0, %v2094
        %2096 = vmatprep.mubr.f32.mxu0 %v1817
        %2097 = vmatmul.mubr.f32.gmra.mxu0 %v1816
        %v2098 = vpop.f32.mrf.mxu0
        %v2099 = vadd.f32 0.0, %v2098
        %v2100 = vpop.f32.mrf.mxu0
        %v2101 = vadd.f32 0.0, %v2100
        %2102 = vmatprep.mubr.f32.mxu0 %v1819
        %2103 = vmatmul.mubr.f32.gmra.mxu0 %v1818
        %v2104 = vpop.f32.mrf.mxu0
        %v2105 = vadd.f32 0.0, %v2104
        %v2106 = vpop.f32.mrf.mxu0
        %v2107 = vadd.f32 0.0, %v2106
        %2108 = vdwg.mxu0
        %v2109 = vmul.f32 %v1852, %v2015
        %v2110 = vmul.f32 %v1853, %v2017
        %v2111 = vmul.f32 %v1854, %v2021
        %v2112 = vmul.f32 %v1855, %v2023
        %v2113 = vmul.f32 %v1856, %v2027
        %v2114 = vmul.f32 %v1857, %v2029
        %v2115 = vmul.f32 %v1858, %v2033
        %v2116 = vmul.f32 %v1859, %v2035
        %v2117 = vmul.f32 %v1860, %v2039
        %v2118 = vmul.f32 %v1861, %v2041
        %v2119 = vmul.f32 %v1862, %v2045
        %v2120 = vmul.f32 %v1863, %v2047
        %v2121 = vmul.f32 %v1864, %v2051
        %v2122 = vmul.f32 %v1865, %v2053
        %v2123 = vmul.f32 %v1866, %v2057
        %v2124 = vmul.f32 %v1867, %v2059
        %v2125 = vmul.f32 %v1868, %v2063
        %v2126 = vmul.f32 %v1869, %v2065
        %v2127 = vmul.f32 %v1870, %v2069
        %v2128 = vmul.f32 %v1871, %v2071
        %v2129 = vmul.f32 %v1872, %v2075
        %v2130 = vmul.f32 %v1873, %v2077
        %v2131 = vmul.f32 %v1874, %v2081
        %v2132 = vmul.f32 %v1875, %v2083
        %v2133 = vmul.f32 %v1876, %v2087
        %v2134 = vmul.f32 %v1877, %v2089
        %v2135 = vmul.f32 %v1878, %v2093
        %v2136 = vmul.f32 %v1879, %v2095
        %v2137 = vmul.f32 %v1880, %v2099
        %v2138 = vmul.f32 %v1881, %v2101
        %v2139 = vmul.f32 %v1882, %v2105
        %v2140 = vmul.f32 %v1883, %v2107
        %v2141 = vmul.f32 %v1142, %v1142
        %v2142 = vmul.f32 %v1143, %v1143
        %v2143 = vmul.f32 %v1144, %v1144
        %v2144 = vmul.f32 %v1145, %v1145
        %v2145 = vmul.f32 %v1146, %v1146
        %v2146 = vmul.f32 %v1147, %v1147
        %v2147 = vmul.f32 %v1148, %v1148
        %v2148 = vmul.f32 %v1149, %v1149
        %v2149 = vmul.f32 %v1150, %v1150
        %v2150 = vmul.f32 %v1151, %v1151
        %v2151 = vmul.f32 %v1152, %v1152
        %v2152 = vmul.f32 %v1153, %v1153
        %v2153 = vmul.f32 %v1154, %v1154
        %v2154 = vmul.f32 %v1155, %v1155
        %v2155 = vmul.f32 %v1156, %v1156
        %v2156 = vmul.f32 %v1157, %v1157
        %v2157 = vmul.f32 %v1158, %v1158
        %v2158 = vmul.f32 %v1159, %v1159
        %v2159 = vmul.f32 %v1160, %v1160
        %v2160 = vmul.f32 %v1161, %v1161
        %v2161 = vmul.f32 %v1162, %v1162
        %v2162 = vmul.f32 %v1163, %v1163
        %v2163 = vmul.f32 %v1164, %v1164
        %v2164 = vmul.f32 %v1165, %v1165
        %v2165 = vmul.f32 %v1166, %v1166
        %v2166 = vmul.f32 %v1167, %v1167
        %v2167 = vmul.f32 %v1168, %v1168
        %v2168 = vmul.f32 %v1169, %v1169
        %v2169 = vmul.f32 %v1170, %v1170
        %v2170 = vmul.f32 %v1171, %v1171
        %v2171 = vmul.f32 %v1172, %v1172
        %v2172 = vmul.f32 %v1173, %v1173
        %v2173 = vsub.f32 1.0, %v2141
        %v2174 = vsub.f32 1.0, %v2142
        %v2175 = vsub.f32 1.0, %v2143
        %v2176 = vsub.f32 1.0, %v2144
        %v2177 = vsub.f32 1.0, %v2145
        %v2178 = vsub.f32 1.0, %v2146
        %v2179 = vsub.f32 1.0, %v2147
        %v2180 = vsub.f32 1.0, %v2148
        %v2181 = vsub.f32 1.0, %v2149
        %v2182 = vsub.f32 1.0, %v2150
        %v2183 = vsub.f32 1.0, %v2151
        %v2184 = vsub.f32 1.0, %v2152
        %v2185 = vsub.f32 1.0, %v2153
        %v2186 = vsub.f32 1.0, %v2154
        %v2187 = vsub.f32 1.0, %v2155
        %v2188 = vsub.f32 1.0, %v2156
        %v2189 = vsub.f32 1.0, %v2157
        %v2190 = vsub.f32 1.0, %v2158
        %v2191 = vsub.f32 1.0, %v2159
        %v2192 = vsub.f32 1.0, %v2160
        %v2193 = vsub.f32 1.0, %v2161
        %v2194 = vsub.f32 1.0, %v2162
        %v2195 = vsub.f32 1.0, %v2163
        %v2196 = vsub.f32 1.0, %v2164
        %v2197 = vsub.f32 1.0, %v2165
        %v2198 = vsub.f32 1.0, %v2166
        %v2199 = vsub.f32 1.0, %v2167
        %v2200 = vsub.f32 1.0, %v2168
        %v2201 = vsub.f32 1.0, %v2169
        %v2202 = vsub.f32 1.0, %v2170
        %v2203 = vsub.f32 1.0, %v2171
        %v2204 = vsub.f32 1.0, %v2172
        %v2205 = vld [vmem:[#allocation7] sm:$0xff]
        %v2206 = vld [vmem:[#allocation7 + $0x8] sm:$0xff]
        %v2207 = vld [vmem:[#allocation7 + $0x10] sm:$0xff]
        %v2208 = vld [vmem:[#allocation7 + $0x18] sm:$0xff]
        %v2209 = vld [vmem:[#allocation7 + $0x20] sm:$0xff]
        %v2210 = vld [vmem:[#allocation7 + $0x28] sm:$0xff]
        %v2211 = vld [vmem:[#allocation7 + $0x30] sm:$0xff]
        %v2212 = vld [vmem:[#allocation7 + $0x38] sm:$0xff]
        %v2213 = vld [vmem:[#allocation7 + $0x40] sm:$0xff]
        %v2214 = vld [vmem:[#allocation7 + $0x48] sm:$0xff]
        %v2215 = vld [vmem:[#allocation7 + $0x50] sm:$0xff]
        %v2216 = vld [vmem:[#allocation7 + $0x58] sm:$0xff]
        %v2217 = vld [vmem:[#allocation7 + $0x60] sm:$0xff]
        %v2218 = vld [vmem:[#allocation7 + $0x68] sm:$0xff]
        %v2219 = vld [vmem:[#allocation7 + $0x70] sm:$0xff]
        %v2220 = vld [vmem:[#allocation7 + $0x78] sm:$0xff]
        %v2221 = vld [vmem:[#allocation7 + $0x80] sm:$0xff]
        %v2222 = vld [vmem:[#allocation7 + $0x88] sm:$0xff]
        %v2223 = vld [vmem:[#allocation7 + $0x90] sm:$0xff]
        %v2224 = vld [vmem:[#allocation7 + $0x98] sm:$0xff]
        %v2225 = vld [vmem:[#allocation7 + $0xa0] sm:$0xff]
        %v2226 = vld [vmem:[#allocation7 + $0xa8] sm:$0xff]
        %v2227 = vld [vmem:[#allocation7 + $0xb0] sm:$0xff]
        %v2228 = vld [vmem:[#allocation7 + $0xb8] sm:$0xff]
        %v2229 = vld [vmem:[#allocation7 + $0xc0] sm:$0xff]
        %v2230 = vld [vmem:[#allocation7 + $0xc8] sm:$0xff]
        %v2231 = vld [vmem:[#allocation7 + $0xd0] sm:$0xff]
        %v2232 = vld [vmem:[#allocation7 + $0xd8] sm:$0xff]
        %v2233 = vld [vmem:[#allocation7 + $0xe0] sm:$0xff]
        %v2234 = vld [vmem:[#allocation7 + $0xe8] sm:$0xff]
        %v2235 = vld [vmem:[#allocation7 + $0xf0] sm:$0xff]
        %v2236 = vld [vmem:[#allocation7 + $0xf8] sm:$0xff]
        %v2237 = vld [vmem:[#allocation7 + $0x100] sm:$0xff]
        %v2238 = vld [vmem:[#allocation7 + $0x108] sm:$0xff]
        %v2239 = vld [vmem:[#allocation7 + $0x110] sm:$0xff]
        %v2240 = vld [vmem:[#allocation7 + $0x118] sm:$0xff]
        %v2241 = vld [vmem:[#allocation7 + $0x120] sm:$0xff]
        %v2242 = vld [vmem:[#allocation7 + $0x128] sm:$0xff]
        %v2243 = vld [vmem:[#allocation7 + $0x130] sm:$0xff]
        %v2244 = vld [vmem:[#allocation7 + $0x138] sm:$0xff]
        %v2245 = vld [vmem:[#allocation7 + $0x140] sm:$0xff]
        %v2246 = vld [vmem:[#allocation7 + $0x148] sm:$0xff]
        %v2247 = vld [vmem:[#allocation7 + $0x150] sm:$0xff]
        %v2248 = vld [vmem:[#allocation7 + $0x158] sm:$0xff]
        %v2249 = vld [vmem:[#allocation7 + $0x160] sm:$0xff]
        %v2250 = vld [vmem:[#allocation7 + $0x168] sm:$0xff]
        %v2251 = vld [vmem:[#allocation7 + $0x170] sm:$0xff]
        %v2252 = vld [vmem:[#allocation7 + $0x178] sm:$0xff]
        %v2253 = vld [vmem:[#allocation7 + $0x180] sm:$0xff]
        %v2254 = vld [vmem:[#allocation7 + $0x188] sm:$0xff]
        %v2255 = vld [vmem:[#allocation7 + $0x190] sm:$0xff]
        %v2256 = vld [vmem:[#allocation7 + $0x198] sm:$0xff]
        %v2257 = vld [vmem:[#allocation7 + $0x1a0] sm:$0xff]
        %v2258 = vld [vmem:[#allocation7 + $0x1a8] sm:$0xff]
        %v2259 = vld [vmem:[#allocation7 + $0x1b0] sm:$0xff]
        %v2260 = vld [vmem:[#allocation7 + $0x1b8] sm:$0xff]
        %v2261 = vld [vmem:[#allocation7 + $0x1c0] sm:$0xff]
        %v2262 = vld [vmem:[#allocation7 + $0x1c8] sm:$0xff]
        %v2263 = vld [vmem:[#allocation7 + $0x1d0] sm:$0xff]
        %v2264 = vld [vmem:[#allocation7 + $0x1d8] sm:$0xff]
        %v2265 = vld [vmem:[#allocation7 + $0x1e0] sm:$0xff]
        %v2266 = vld [vmem:[#allocation7 + $0x1e8] sm:$0xff]
        %v2267 = vld [vmem:[#allocation7 + $0x1f0] sm:$0xff]
        %v2268 = vld [vmem:[#allocation7 + $0x1f8] sm:$0xff]
        %2269 = vmatprep.subr.mxu0 %v2236
        %2270 = vmatpush1.msra.mxu0 %v2235
        %2271 = vmatprep.subr.mxu0 %v2234
        %2272 = vmatpush1.msra.mxu0 %v2233
        %2273 = vmatprep.subr.mxu0 %v2232
        %2274 = vmatpush1.msra.mxu0 %v2231
        %2275 = vmatprep.subr.mxu0 %v2230
        %2276 = vmatpush1.msra.mxu0 %v2229
        %2277 = vmatprep.subr.mxu0 %v2228
        %2278 = vmatpush1.msra.mxu0 %v2227
        %2279 = vmatprep.subr.mxu0 %v2226
        %2280 = vmatpush1.msra.mxu0 %v2225
        %2281 = vmatprep.subr.mxu0 %v2224
        %2282 = vmatpush1.msra.mxu0 %v2223
        %2283 = vmatprep.subr.mxu0 %v2222
        %2284 = vmatpush1.msra.mxu0 %v2221
        %2285 = vmatprep.subr.mxu0 %v2220
        %2286 = vmatpush1.msra.mxu0 %v2219
        %2287 = vmatprep.subr.mxu0 %v2218
        %2288 = vmatpush1.msra.mxu0 %v2217
        %2289 = vmatprep.subr.mxu0 %v2216
        %2290 = vmatpush1.msra.mxu0 %v2215
        %2291 = vmatprep.subr.mxu0 %v2214
        %2292 = vmatpush1.msra.mxu0 %v2213
        %2293 = vmatprep.subr.mxu0 %v2212
        %2294 = vmatpush1.msra.mxu0 %v2211
        %2295 = vmatprep.subr.mxu0 %v2210
        %2296 = vmatpush1.msra.mxu0 %v2209
        %2297 = vmatprep.subr.mxu0 %v2208
        %2298 = vmatpush1.msra.mxu0 %v2207
        %2299 = vmatprep.subr.mxu0 %v2206
        %2300 = vmatpush1.msra.mxu0 %v2205
        %2301 = vmatprep.subr.mxu0 %v2268
        %2302 = vmatpush2.msra.mxu0 %v2267
        %2303 = vmatprep.subr.mxu0 %v2266
        %2304 = vmatpush2.msra.mxu0 %v2265
        %2305 = vmatprep.subr.mxu0 %v2264
        %2306 = vmatpush2.msra.mxu0 %v2263
        %2307 = vmatprep.subr.mxu0 %v2262
        %2308 = vmatpush2.msra.mxu0 %v2261
        %2309 = vmatprep.subr.mxu0 %v2260
        %2310 = vmatpush2.msra.mxu0 %v2259
        %2311 = vmatprep.subr.mxu0 %v2258
        %2312 = vmatpush2.msra.mxu0 %v2257
        %2313 = vmatprep.subr.mxu0 %v2256
        %2314 = vmatpush2.msra.mxu0 %v2255
        %2315 = vmatprep.subr.mxu0 %v2254
        %2316 = vmatpush2.msra.mxu0 %v2253
        %2317 = vmatprep.subr.mxu0 %v2252
        %2318 = vmatpush2.msra.mxu0 %v2251
        %2319 = vmatprep.subr.mxu0 %v2250
        %2320 = vmatpush2.msra.mxu0 %v2249
        %2321 = vmatprep.subr.mxu0 %v2248
        %2322 = vmatpush2.msra.mxu0 %v2247
        %2323 = vmatprep.subr.mxu0 %v2246
        %2324 = vmatpush2.msra.mxu0 %v2245
        %2325 = vmatprep.subr.mxu0 %v2244
        %2326 = vmatpush2.msra.mxu0 %v2243
        %2327 = vmatprep.subr.mxu0 %v2242
        %2328 = vmatpush2.msra.mxu0 %v2241
        %2329 = vmatprep.subr.mxu0 %v2240
        %2330 = vmatpush2.msra.mxu0 %v2239
        %2331 = vmatprep.subr.mxu0 %v2238
        %2332 = vmatpush2.msra.mxu0 %v2237
        %2333 = vmatprep.mubr.f32.mxu0 %v2110
        %2334 = vmatmul.mubr.f32.gmra.mxu0 %v2109
        %v2335 = vpop.f32.mrf.mxu0
        %v2336 = vadd.f32 0.0, %v2335
        %v2337 = vpop.f32.mrf.mxu0
        %v2338 = vadd.f32 0.0, %v2337
        %2339 = vmatprep.mubr.f32.mxu0 %v2112
        %2340 = vmatmul.mubr.f32.gmra.mxu0 %v2111
        %v2341 = vpop.f32.mrf.mxu0
        %v2342 = vadd.f32 0.0, %v2341
        %v2343 = vpop.f32.mrf.mxu0
        %v2344 = vadd.f32 0.0, %v2343
        %2345 = vmatprep.mubr.f32.mxu0 %v2114
        %2346 = vmatmul.mubr.f32.gmra.mxu0 %v2113
        %v2347 = vpop.f32.mrf.mxu0
        %v2348 = vadd.f32 0.0, %v2347
        %v2349 = vpop.f32.mrf.mxu0
        %v2350 = vadd.f32 0.0, %v2349
        %2351 = vmatprep.mubr.f32.mxu0 %v2116
        %2352 = vmatmul.mubr.f32.gmra.mxu0 %v2115
        %v2353 = vpop.f32.mrf.mxu0
        %v2354 = vadd.f32 0.0, %v2353
        %v2355 = vpop.f32.mrf.mxu0
        %v2356 = vadd.f32 0.0, %v2355
        %2357 = vmatprep.mubr.f32.mxu0 %v2118
        %2358 = vmatmul.mubr.f32.gmra.mxu0 %v2117
        %v2359 = vpop.f32.mrf.mxu0
        %v2360 = vadd.f32 0.0, %v2359
        %v2361 = vpop.f32.mrf.mxu0
        %v2362 = vadd.f32 0.0, %v2361
        %2363 = vmatprep.mubr.f32.mxu0 %v2120
        %2364 = vmatmul.mubr.f32.gmra.mxu0 %v2119
        %v2365 = vpop.f32.mrf.mxu0
        %v2366 = vadd.f32 0.0, %v2365
        %v2367 = vpop.f32.mrf.mxu0
        %v2368 = vadd.f32 0.0, %v2367
        %2369 = vmatprep.mubr.f32.mxu0 %v2122
        %2370 = vmatmul.mubr.f32.gmra.mxu0 %v2121
        %v2371 = vpop.f32.mrf.mxu0
        %v2372 = vadd.f32 0.0, %v2371
        %v2373 = vpop.f32.mrf.mxu0
        %v2374 = vadd.f32 0.0, %v2373
        %2375 = vmatprep.mubr.f32.mxu0 %v2124
        %2376 = vmatmul.mubr.f32.gmra.mxu0 %v2123
        %v2377 = vpop.f32.mrf.mxu0
        %v2378 = vadd.f32 0.0, %v2377
        %v2379 = vpop.f32.mrf.mxu0
        %v2380 = vadd.f32 0.0, %v2379
        %2381 = vmatprep.mubr.f32.mxu0 %v2126
        %2382 = vmatmul.mubr.f32.gmra.mxu0 %v2125
        %v2383 = vpop.f32.mrf.mxu0
        %v2384 = vadd.f32 0.0, %v2383
        %v2385 = vpop.f32.mrf.mxu0
        %v2386 = vadd.f32 0.0, %v2385
        %2387 = vmatprep.mubr.f32.mxu0 %v2128
        %2388 = vmatmul.mubr.f32.gmra.mxu0 %v2127
        %v2389 = vpop.f32.mrf.mxu0
        %v2390 = vadd.f32 0.0, %v2389
        %v2391 = vpop.f32.mrf.mxu0
        %v2392 = vadd.f32 0.0, %v2391
        %2393 = vmatprep.mubr.f32.mxu0 %v2130
        %2394 = vmatmul.mubr.f32.gmra.mxu0 %v2129
        %v2395 = vpop.f32.mrf.mxu0
        %v2396 = vadd.f32 0.0, %v2395
        %v2397 = vpop.f32.mrf.mxu0
        %v2398 = vadd.f32 0.0, %v2397
        %2399 = vmatprep.mubr.f32.mxu0 %v2132
        %2400 = vmatmul.mubr.f32.gmra.mxu0 %v2131
        %v2401 = vpop.f32.mrf.mxu0
        %v2402 = vadd.f32 0.0, %v2401
        %v2403 = vpop.f32.mrf.mxu0
        %v2404 = vadd.f32 0.0, %v2403
        %2405 = vmatprep.mubr.f32.mxu0 %v2134
        %2406 = vmatmul.mubr.f32.gmra.mxu0 %v2133
        %v2407 = vpop.f32.mrf.mxu0
        %v2408 = vadd.f32 0.0, %v2407
        %v2409 = vpop.f32.mrf.mxu0
        %v2410 = vadd.f32 0.0, %v2409
        %2411 = vmatprep.mubr.f32.mxu0 %v2136
        %2412 = vmatmul.mubr.f32.gmra.mxu0 %v2135
        %v2413 = vpop.f32.mrf.mxu0
        %v2414 = vadd.f32 0.0, %v2413
        %v2415 = vpop.f32.mrf.mxu0
        %v2416 = vadd.f32 0.0, %v2415
        %2417 = vmatprep.mubr.f32.mxu0 %v2138
        %2418 = vmatmul.mubr.f32.gmra.mxu0 %v2137
        %v2419 = vpop.f32.mrf.mxu0
        %v2420 = vadd.f32 0.0, %v2419
        %v2421 = vpop.f32.mrf.mxu0
        %v2422 = vadd.f32 0.0, %v2421
        %2423 = vmatprep.mubr.f32.mxu0 %v2140
        %2424 = vmatmul.mubr.f32.gmra.mxu0 %v2139
        %v2425 = vpop.f32.mrf.mxu0
        %v2426 = vadd.f32 0.0, %v2425
        %v2427 = vpop.f32.mrf.mxu0
        %v2428 = vadd.f32 0.0, %v2427
        %2429 = vdwg.mxu0
        %v2430 = vmul.f32 %v2173, %v2336
        %v2431 = vmul.f32 %v2174, %v2338
        %v2432 = vmul.f32 %v2175, %v2342
        %v2433 = vmul.f32 %v2176, %v2344
        %v2434 = vmul.f32 %v2177, %v2348
        %v2435 = vmul.f32 %v2178, %v2350
        %v2436 = vmul.f32 %v2179, %v2354
        %v2437 = vmul.f32 %v2180, %v2356
        %v2438 = vmul.f32 %v2181, %v2360
        %v2439 = vmul.f32 %v2182, %v2362
        %v2440 = vmul.f32 %v2183, %v2366
        %v2441 = vmul.f32 %v2184, %v2368
        %v2442 = vmul.f32 %v2185, %v2372
        %v2443 = vmul.f32 %v2186, %v2374
        %v2444 = vmul.f32 %v2187, %v2378
        %v2445 = vmul.f32 %v2188, %v2380
        %v2446 = vmul.f32 %v2189, %v2384
        %v2447 = vmul.f32 %v2190, %v2386
        %v2448 = vmul.f32 %v2191, %v2390
        %v2449 = vmul.f32 %v2192, %v2392
        %v2450 = vmul.f32 %v2193, %v2396
        %v2451 = vmul.f32 %v2194, %v2398
        %v2452 = vmul.f32 %v2195, %v2402
        %v2453 = vmul.f32 %v2196, %v2404
        %v2454 = vmul.f32 %v2197, %v2408
        %v2455 = vmul.f32 %v2198, %v2410
        %v2456 = vmul.f32 %v2199, %v2414
        %v2457 = vmul.f32 %v2200, %v2416
        %v2458 = vmul.f32 %v2201, %v2420
        %v2459 = vmul.f32 %v2202, %v2422
        %v2460 = vmul.f32 %v2203, %v2426
        %v2461 = vmul.f32 %v2204, %v2428
        %v2462 = vmul.f32 %v873, %v873
        %v2463 = vmul.f32 %v874, %v874
        %v2464 = vmul.f32 %v875, %v875
        %v2465 = vmul.f32 %v876, %v876
        %v2466 = vmul.f32 %v877, %v877
        %v2467 = vmul.f32 %v878, %v878
        %v2468 = vmul.f32 %v879, %v879
        %v2469 = vmul.f32 %v880, %v880
        %v2470 = vmul.f32 %v881, %v881
        %v2471 = vmul.f32 %v882, %v882
        %v2472 = vmul.f32 %v883, %v883
        %v2473 = vmul.f32 %v884, %v884
        %v2474 = vmul.f32 %v885, %v885
        %v2475 = vmul.f32 %v886, %v886
        %v2476 = vmul.f32 %v887, %v887
        %v2477 = vmul.f32 %v888, %v888
        %v2478 = vmul.f32 %v889, %v889
        %v2479 = vmul.f32 %v890, %v890
        %v2480 = vmul.f32 %v891, %v891
        %v2481 = vmul.f32 %v892, %v892
        %v2482 = vmul.f32 %v893, %v893
        %v2483 = vmul.f32 %v894, %v894
        %v2484 = vmul.f32 %v895, %v895
        %v2485 = vmul.f32 %v896, %v896
        %v2486 = vmul.f32 %v897, %v897
        %v2487 = vmul.f32 %v898, %v898
        %v2488 = vmul.f32 %v899, %v899
        %v2489 = vmul.f32 %v900, %v900
        %v2490 = vmul.f32 %v901, %v901
        %v2491 = vmul.f32 %v902, %v902
        %v2492 = vmul.f32 %v903, %v903
        %v2493 = vmul.f32 %v904, %v904
        %v2494 = vsub.f32 1.0, %v2462
        %v2495 = vsub.f32 1.0, %v2463
        %v2496 = vsub.f32 1.0, %v2464
        %v2497 = vsub.f32 1.0, %v2465
        %v2498 = vsub.f32 1.0, %v2466
        %v2499 = vsub.f32 1.0, %v2467
        %v2500 = vsub.f32 1.0, %v2468
        %v2501 = vsub.f32 1.0, %v2469
        %v2502 = vsub.f32 1.0, %v2470
        %v2503 = vsub.f32 1.0, %v2471
        %v2504 = vsub.f32 1.0, %v2472
        %v2505 = vsub.f32 1.0, %v2473
        %v2506 = vsub.f32 1.0, %v2474
        %v2507 = vsub.f32 1.0, %v2475
        %v2508 = vsub.f32 1.0, %v2476
        %v2509 = vsub.f32 1.0, %v2477
        %v2510 = vsub.f32 1.0, %v2478
        %v2511 = vsub.f32 1.0, %v2479
        %v2512 = vsub.f32 1.0, %v2480
        %v2513 = vsub.f32 1.0, %v2481
        %v2514 = vsub.f32 1.0, %v2482
        %v2515 = vsub.f32 1.0, %v2483
        %v2516 = vsub.f32 1.0, %v2484
        %v2517 = vsub.f32 1.0, %v2485
        %v2518 = vsub.f32 1.0, %v2486
        %v2519 = vsub.f32 1.0, %v2487
        %v2520 = vsub.f32 1.0, %v2488
        %v2521 = vsub.f32 1.0, %v2489
        %v2522 = vsub.f32 1.0, %v2490
        %v2523 = vsub.f32 1.0, %v2491
        %v2524 = vsub.f32 1.0, %v2492
        %v2525 = vsub.f32 1.0, %v2493
        %v2526 = vld [vmem:[#allocation3] sm:$0xff]
        %v2527 = vld [vmem:[#allocation3 + $0x8] sm:$0xff]
        %v2528 = vld [vmem:[#allocation3 + $0x10] sm:$0xff]
        %v2529 = vld [vmem:[#allocation3 + $0x18] sm:$0xff]
        %v2530 = vld [vmem:[#allocation3 + $0x20] sm:$0xff]
        %v2531 = vld [vmem:[#allocation3 + $0x28] sm:$0xff]
        %v2532 = vld [vmem:[#allocation3 + $0x30] sm:$0xff]
        %v2533 = vld [vmem:[#allocation3 + $0x38] sm:$0xff]
        %v2534 = vld [vmem:[#allocation3 + $0x40] sm:$0xff]
        %v2535 = vld [vmem:[#allocation3 + $0x48] sm:$0xff]
        %v2536 = vld [vmem:[#allocation3 + $0x50] sm:$0xff]
        %v2537 = vld [vmem:[#allocation3 + $0x58] sm:$0xff]
        %v2538 = vld [vmem:[#allocation3 + $0x60] sm:$0xff]
        %v2539 = vld [vmem:[#allocation3 + $0x68] sm:$0xff]
        %v2540 = vld [vmem:[#allocation3 + $0x70] sm:$0xff]
        %v2541 = vld [vmem:[#allocation3 + $0x78] sm:$0xff]
        %v2542 = vld [vmem:[#allocation3 + $0x80] sm:$0xff]
        %v2543 = vld [vmem:[#allocation3 + $0x88] sm:$0xff]
        %v2544 = vld [vmem:[#allocation3 + $0x90] sm:$0xff]
        %v2545 = vld [vmem:[#allocation3 + $0x98] sm:$0xff]
        %v2546 = vld [vmem:[#allocation3 + $0xa0] sm:$0xff]
        %v2547 = vld [vmem:[#allocation3 + $0xa8] sm:$0xff]
        %v2548 = vld [vmem:[#allocation3 + $0xb0] sm:$0xff]
        %v2549 = vld [vmem:[#allocation3 + $0xb8] sm:$0xff]
        %v2550 = vld [vmem:[#allocation3 + $0xc0] sm:$0xff]
        %v2551 = vld [vmem:[#allocation3 + $0xc8] sm:$0xff]
        %v2552 = vld [vmem:[#allocation3 + $0xd0] sm:$0xff]
        %v2553 = vld [vmem:[#allocation3 + $0xd8] sm:$0xff]
        %v2554 = vld [vmem:[#allocation3 + $0xe0] sm:$0xff]
        %v2555 = vld [vmem:[#allocation3 + $0xe8] sm:$0xff]
        %v2556 = vld [vmem:[#allocation3 + $0xf0] sm:$0xff]
        %v2557 = vld [vmem:[#allocation3 + $0xf8] sm:$0xff]
        %v2558 = vld [vmem:[#allocation3 + $0x100] sm:$0xff]
        %v2559 = vld [vmem:[#allocation3 + $0x108] sm:$0xff]
        %v2560 = vld [vmem:[#allocation3 + $0x110] sm:$0xff]
        %v2561 = vld [vmem:[#allocation3 + $0x118] sm:$0xff]
        %v2562 = vld [vmem:[#allocation3 + $0x120] sm:$0xff]
        %v2563 = vld [vmem:[#allocation3 + $0x128] sm:$0xff]
        %v2564 = vld [vmem:[#allocation3 + $0x130] sm:$0xff]
        %v2565 = vld [vmem:[#allocation3 + $0x138] sm:$0xff]
        %v2566 = vld [vmem:[#allocation3 + $0x140] sm:$0xff]
        %v2567 = vld [vmem:[#allocation3 + $0x148] sm:$0xff]
        %v2568 = vld [vmem:[#allocation3 + $0x150] sm:$0xff]
        %v2569 = vld [vmem:[#allocation3 + $0x158] sm:$0xff]
        %v2570 = vld [vmem:[#allocation3 + $0x160] sm:$0xff]
        %v2571 = vld [vmem:[#allocation3 + $0x168] sm:$0xff]
        %v2572 = vld [vmem:[#allocation3 + $0x170] sm:$0xff]
        %v2573 = vld [vmem:[#allocation3 + $0x178] sm:$0xff]
        %v2574 = vld [vmem:[#allocation3 + $0x180] sm:$0xff]
        %v2575 = vld [vmem:[#allocation3 + $0x188] sm:$0xff]
        %v2576 = vld [vmem:[#allocation3 + $0x190] sm:$0xff]
        %v2577 = vld [vmem:[#allocation3 + $0x198] sm:$0xff]
        %v2578 = vld [vmem:[#allocation3 + $0x1a0] sm:$0xff]
        %v2579 = vld [vmem:[#allocation3 + $0x1a8] sm:$0xff]
        %v2580 = vld [vmem:[#allocation3 + $0x1b0] sm:$0xff]
        %v2581 = vld [vmem:[#allocation3 + $0x1b8] sm:$0xff]
        %v2582 = vld [vmem:[#allocation3 + $0x1c0] sm:$0xff]
        %v2583 = vld [vmem:[#allocation3 + $0x1c8] sm:$0xff]
        %v2584 = vld [vmem:[#allocation3 + $0x1d0] sm:$0xff]
        %v2585 = vld [vmem:[#allocation3 + $0x1d8] sm:$0xff]
        %v2586 = vld [vmem:[#allocation3 + $0x1e0] sm:$0xff]
        %v2587 = vld [vmem:[#allocation3 + $0x1e8] sm:$0xff]
        %v2588 = vld [vmem:[#allocation3 + $0x1f0] sm:$0xff]
        %v2589 = vld [vmem:[#allocation3 + $0x1f8] sm:$0xff]
        %2590 = vmatprep.subr.mxu0 %v2557
        %2591 = vmatpush1.msra.mxu0 %v2556
        %2592 = vmatprep.subr.mxu0 %v2555
        %2593 = vmatpush1.msra.mxu0 %v2554
        %2594 = vmatprep.subr.mxu0 %v2553
        %2595 = vmatpush1.msra.mxu0 %v2552
        %2596 = vmatprep.subr.mxu0 %v2551
        %2597 = vmatpush1.msra.mxu0 %v2550
        %2598 = vmatprep.subr.mxu0 %v2549
        %2599 = vmatpush1.msra.mxu0 %v2548
        %2600 = vmatprep.subr.mxu0 %v2547
        %2601 = vmatpush1.msra.mxu0 %v2546
        %2602 = vmatprep.subr.mxu0 %v2545
        %2603 = vmatpush1.msra.mxu0 %v2544
        %2604 = vmatprep.subr.mxu0 %v2543
        %2605 = vmatpush1.msra.mxu0 %v2542
        %2606 = vmatprep.subr.mxu0 %v2541
        %2607 = vmatpush1.msra.mxu0 %v2540
        %2608 = vmatprep.subr.mxu0 %v2539
        %2609 = vmatpush1.msra.mxu0 %v2538
        %2610 = vmatprep.subr.mxu0 %v2537
        %2611 = vmatpush1.msra.mxu0 %v2536
        %2612 = vmatprep.subr.mxu0 %v2535
        %2613 = vmatpush1.msra.mxu0 %v2534
        %2614 = vmatprep.subr.mxu0 %v2533
        %2615 = vmatpush1.msra.mxu0 %v2532
        %2616 = vmatprep.subr.mxu0 %v2531
        %2617 = vmatpush1.msra.mxu0 %v2530
        %2618 = vmatprep.subr.mxu0 %v2529
        %2619 = vmatpush1.msra.mxu0 %v2528
        %2620 = vmatprep.subr.mxu0 %v2527
        %2621 = vmatpush1.msra.mxu0 %v2526
        %2622 = vmatprep.subr.mxu0 %v2589
        %2623 = vmatpush2.msra.mxu0 %v2588
        %2624 = vmatprep.subr.mxu0 %v2587
        %2625 = vmatpush2.msra.mxu0 %v2586
        %2626 = vmatprep.subr.mxu0 %v2585
        %2627 = vmatpush2.msra.mxu0 %v2584
        %2628 = vmatprep.subr.mxu0 %v2583
        %2629 = vmatpush2.msra.mxu0 %v2582
        %2630 = vmatprep.subr.mxu0 %v2581
        %2631 = vmatpush2.msra.mxu0 %v2580
        %2632 = vmatprep.subr.mxu0 %v2579
        %2633 = vmatpush2.msra.mxu0 %v2578
        %2634 = vmatprep.subr.mxu0 %v2577
        %2635 = vmatpush2.msra.mxu0 %v2576
        %2636 = vmatprep.subr.mxu0 %v2575
        %2637 = vmatpush2.msra.mxu0 %v2574
        %2638 = vmatprep.subr.mxu0 %v2573
        %2639 = vmatpush2.msra.mxu0 %v2572
        %2640 = vmatprep.subr.mxu0 %v2571
        %2641 = vmatpush2.msra.mxu0 %v2570
        %2642 = vmatprep.subr.mxu0 %v2569
        %2643 = vmatpush2.msra.mxu0 %v2568
        %2644 = vmatprep.subr.mxu0 %v2567
        %2645 = vmatpush2.msra.mxu0 %v2566
        %2646 = vmatprep.subr.mxu0 %v2565
        %2647 = vmatpush2.msra.mxu0 %v2564
        %2648 = vmatprep.subr.mxu0 %v2563
        %2649 = vmatpush2.msra.mxu0 %v2562
        %2650 = vmatprep.subr.mxu0 %v2561
        %2651 = vmatpush2.msra.mxu0 %v2560
        %2652 = vmatprep.subr.mxu0 %v2559
        %2653 = vmatpush2.msra.mxu0 %v2558
        %2654 = vmatprep.mubr.f32.mxu0 %v2431
        %2655 = vmatmul.mubr.f32.gmra.mxu0 %v2430
        %v2656 = vpop.f32.mrf.mxu0
        %v2657 = vadd.f32 0.0, %v2656
        %v2658 = vpop.f32.mrf.mxu0
        %v2659 = vadd.f32 0.0, %v2658
        %2660 = vmatprep.mubr.f32.mxu0 %v2433
        %2661 = vmatmul.mubr.f32.gmra.mxu0 %v2432
        %v2662 = vpop.f32.mrf.mxu0
        %v2663 = vadd.f32 0.0, %v2662
        %v2664 = vpop.f32.mrf.mxu0
        %v2665 = vadd.f32 0.0, %v2664
        %2666 = vmatprep.mubr.f32.mxu0 %v2435
        %2667 = vmatmul.mubr.f32.gmra.mxu0 %v2434
        %v2668 = vpop.f32.mrf.mxu0
        %v2669 = vadd.f32 0.0, %v2668
        %v2670 = vpop.f32.mrf.mxu0
        %v2671 = vadd.f32 0.0, %v2670
        %2672 = vmatprep.mubr.f32.mxu0 %v2437
        %2673 = vmatmul.mubr.f32.gmra.mxu0 %v2436
        %v2674 = vpop.f32.mrf.mxu0
        %v2675 = vadd.f32 0.0, %v2674
        %v2676 = vpop.f32.mrf.mxu0
        %v2677 = vadd.f32 0.0, %v2676
        %2678 = vmatprep.mubr.f32.mxu0 %v2439
        %2679 = vmatmul.mubr.f32.gmra.mxu0 %v2438
        %v2680 = vpop.f32.mrf.mxu0
        %v2681 = vadd.f32 0.0, %v2680
        %v2682 = vpop.f32.mrf.mxu0
        %v2683 = vadd.f32 0.0, %v2682
        %2684 = vmatprep.mubr.f32.mxu0 %v2441
        %2685 = vmatmul.mubr.f32.gmra.mxu0 %v2440
        %v2686 = vpop.f32.mrf.mxu0
        %v2687 = vadd.f32 0.0, %v2686
        %v2688 = vpop.f32.mrf.mxu0
        %v2689 = vadd.f32 0.0, %v2688
        %2690 = vmatprep.mubr.f32.mxu0 %v2443
        %2691 = vmatmul.mubr.f32.gmra.mxu0 %v2442
        %v2692 = vpop.f32.mrf.mxu0
        %v2693 = vadd.f32 0.0, %v2692
        %v2694 = vpop.f32.mrf.mxu0
        %v2695 = vadd.f32 0.0, %v2694
        %2696 = vmatprep.mubr.f32.mxu0 %v2445
        %2697 = vmatmul.mubr.f32.gmra.mxu0 %v2444
        %v2698 = vpop.f32.mrf.mxu0
        %v2699 = vadd.f32 0.0, %v2698
        %v2700 = vpop.f32.mrf.mxu0
        %v2701 = vadd.f32 0.0, %v2700
        %2702 = vmatprep.mubr.f32.mxu0 %v2447
        %2703 = vmatmul.mubr.f32.gmra.mxu0 %v2446
        %v2704 = vpop.f32.mrf.mxu0
        %v2705 = vadd.f32 0.0, %v2704
        %v2706 = vpop.f32.mrf.mxu0
        %v2707 = vadd.f32 0.0, %v2706
        %2708 = vmatprep.mubr.f32.mxu0 %v2449
        %2709 = vmatmul.mubr.f32.gmra.mxu0 %v2448
        %v2710 = vpop.f32.mrf.mxu0
        %v2711 = vadd.f32 0.0, %v2710
        %v2712 = vpop.f32.mrf.mxu0
        %v2713 = vadd.f32 0.0, %v2712
        %2714 = vmatprep.mubr.f32.mxu0 %v2451
        %2715 = vmatmul.mubr.f32.gmra.mxu0 %v2450
        %v2716 = vpop.f32.mrf.mxu0
        %v2717 = vadd.f32 0.0, %v2716
        %v2718 = vpop.f32.mrf.mxu0
        %v2719 = vadd.f32 0.0, %v2718
        %2720 = vmatprep.mubr.f32.mxu0 %v2453
        %2721 = vmatmul.mubr.f32.gmra.mxu0 %v2452
        %v2722 = vpop.f32.mrf.mxu0
        %v2723 = vadd.f32 0.0, %v2722
        %v2724 = vpop.f32.mrf.mxu0
        %v2725 = vadd.f32 0.0, %v2724
        %2726 = vmatprep.mubr.f32.mxu0 %v2455
        %2727 = vmatmul.mubr.f32.gmra.mxu0 %v2454
        %v2728 = vpop.f32.mrf.mxu0
        %v2729 = vadd.f32 0.0, %v2728
        %v2730 = vpop.f32.mrf.mxu0
        %v2731 = vadd.f32 0.0, %v2730
        %2732 = vmatprep.mubr.f32.mxu0 %v2457
        %2733 = vmatmul.mubr.f32.gmra.mxu0 %v2456
        %v2734 = vpop.f32.mrf.mxu0
        %v2735 = vadd.f32 0.0, %v2734
        %v2736 = vpop.f32.mrf.mxu0
        %v2737 = vadd.f32 0.0, %v2736
        %2738 = vmatprep.mubr.f32.mxu0 %v2459
        %2739 = vmatmul.mubr.f32.gmra.mxu0 %v2458
        %v2740 = vpop.f32.mrf.mxu0
        %v2741 = vadd.f32 0.0, %v2740
        %v2742 = vpop.f32.mrf.mxu0
        %v2743 = vadd.f32 0.0, %v2742
        %2744 = vmatprep.mubr.f32.mxu0 %v2461
        %2745 = vmatmul.mubr.f32.gmra.mxu0 %v2460
        %v2746 = vpop.f32.mrf.mxu0
        %v2747 = vadd.f32 0.0, %v2746
        %v2748 = vpop.f32.mrf.mxu0
        %v2749 = vadd.f32 0.0, %v2748
        %2750 = vdwg.mxu0
        %v2751 = vmul.f32 %v2494, %v2657
        %v2752 = vmul.f32 %v2495, %v2659
        %v2753 = vmul.f32 %v2496, %v2663
        %v2754 = vmul.f32 %v2497, %v2665
        %v2755 = vmul.f32 %v2498, %v2669
        %v2756 = vmul.f32 %v2499, %v2671
        %v2757 = vmul.f32 %v2500, %v2675
        %v2758 = vmul.f32 %v2501, %v2677
        %v2759 = vmul.f32 %v2502, %v2681
        %v2760 = vmul.f32 %v2503, %v2683
        %v2761 = vmul.f32 %v2504, %v2687
        %v2762 = vmul.f32 %v2505, %v2689
        %v2763 = vmul.f32 %v2506, %v2693
        %v2764 = vmul.f32 %v2507, %v2695
        %v2765 = vmul.f32 %v2508, %v2699
        %v2766 = vmul.f32 %v2509, %v2701
        %v2767 = vmul.f32 %v2510, %v2705
        %v2768 = vmul.f32 %v2511, %v2707
        %v2769 = vmul.f32 %v2512, %v2711
        %v2770 = vmul.f32 %v2513, %v2713
        %v2771 = vmul.f32 %v2514, %v2717
        %v2772 = vmul.f32 %v2515, %v2719
        %v2773 = vmul.f32 %v2516, %v2723
        %v2774 = vmul.f32 %v2517, %v2725
        %v2775 = vmul.f32 %v2518, %v2729
        %v2776 = vmul.f32 %v2519, %v2731
        %v2777 = vmul.f32 %v2520, %v2735
        %v2778 = vmul.f32 %v2521, %v2737
        %v2779 = vmul.f32 %v2522, %v2741
        %v2780 = vmul.f32 %v2523, %v2743
        %v2781 = vmul.f32 %v2524, %v2747
        %v2782 = vmul.f32 %v2525, %v2749
        %v2783 = vld [vmem:[%s14] sm:$0xff]
        %v2784 = vld [vmem:[%s13] sm:$0xff]
        %v2785 = vld [vmem:[%s13 + $0x8] sm:$0xff]
        %v2786 = vld [vmem:[%s13 + $0x10] sm:$0xff]
        %v2787 = vld [vmem:[%s13 + $0x18] sm:$0xff]
        %v2788 = vld [vmem:[%s13 + $0x20] sm:$0xff]
        %v2789 = vld [vmem:[%s13 + $0x28] sm:$0xff]
        %v2790 = vld [vmem:[%s13 + $0x30] sm:$0xff]
        %v2791 = vld [vmem:[%s13 + $0x38] sm:$0xff]
        %v2792 = vld [vmem:[%s13 + $0x40] sm:$0xff]
        %v2793 = vld [vmem:[%s13 + $0x48] sm:$0xff]
        %v2794 = vld [vmem:[%s13 + $0x50] sm:$0xff]
        %v2795 = vld [vmem:[%s13 + $0x58] sm:$0xff]
        %v2796 = vld [vmem:[%s13 + $0x60] sm:$0xff]
        %v2797 = vld [vmem:[%s13 + $0x68] sm:$0xff]
        %v2798 = vld [vmem:[%s13 + $0x70] sm:$0xff]
        %v2799 = vld [vmem:[%s13 + $0x78] sm:$0xff]
        %v2800 = vld [vmem:[%s13 + $0x80] sm:$0xff]
        %v2801 = vld [vmem:[%s13 + $0x88] sm:$0xff]
        %v2802 = vld [vmem:[%s13 + $0x90] sm:$0xff]
        %v2803 = vld [vmem:[%s13 + $0x98] sm:$0xff]
        %v2804 = vld [vmem:[%s13 + $0xa0] sm:$0xff]
        %v2805 = vld [vmem:[%s13 + $0xa8] sm:$0xff]
        %v2806 = vld [vmem:[%s13 + $0xb0] sm:$0xff]
        %v2807 = vld [vmem:[%s13 + $0xb8] sm:$0xff]
        %v2808 = vld [vmem:[%s13 + $0xc0] sm:$0xff]
        %v2809 = vld [vmem:[%s13 + $0xc8] sm:$0xff]
        %v2810 = vld [vmem:[%s13 + $0xd0] sm:$0xff]
        %v2811 = vld [vmem:[%s13 + $0xd8] sm:$0xff]
        %v2812 = vld [vmem:[%s13 + $0xe0] sm:$0xff]
        %v2813 = vld [vmem:[%s13 + $0xe8] sm:$0xff]
        %v2814 = vld [vmem:[%s13 + $0xf0] sm:$0xff]
        %v2815 = vld [vmem:[%s13 + $0xf8] sm:$0xff]
        %2816 = vmatprep.subr.mxu0 0.0
        %2817 = vmatpush1.msra.mxu0 %v2799
        %2818 = vmatprep.subr.mxu0 0.0
        %2819 = vmatpush1.msra.mxu0 %v2798
        %2820 = vmatprep.subr.mxu0 0.0
        %2821 = vmatpush1.msra.mxu0 %v2797
        %2822 = vmatprep.subr.mxu0 0.0
        %2823 = vmatpush1.msra.mxu0 %v2796
        %2824 = vmatprep.subr.mxu0 0.0
        %2825 = vmatpush1.msra.mxu0 %v2795
        %2826 = vmatprep.subr.mxu0 0.0
        %2827 = vmatpush1.msra.mxu0 %v2794
        %2828 = vmatprep.subr.mxu0 0.0
        %2829 = vmatpush1.msra.mxu0 %v2793
        %2830 = vmatprep.subr.mxu0 0.0
        %2831 = vmatpush1.msra.mxu0 %v2792
        %2832 = vmatprep.subr.mxu0 0.0
        %2833 = vmatpush1.msra.mxu0 %v2791
        %2834 = vmatprep.subr.mxu0 0.0
        %2835 = vmatpush1.msra.mxu0 %v2790
        %2836 = vmatprep.subr.mxu0 0.0
        %2837 = vmatpush1.msra.mxu0 %v2789
        %2838 = vmatprep.subr.mxu0 0.0
        %2839 = vmatpush1.msra.mxu0 %v2788
        %2840 = vmatprep.subr.mxu0 0.0
        %2841 = vmatpush1.msra.mxu0 %v2787
        %2842 = vmatprep.subr.mxu0 0.0
        %2843 = vmatpush1.msra.mxu0 %v2786
        %2844 = vmatprep.subr.mxu0 0.0
        %2845 = vmatpush1.msra.mxu0 %v2785
        %2846 = vmatprep.subr.mxu0 0.0
        %2847 = vmatpush1.msra.mxu0 %v2784
        %2848 = vmatprep.subr.mxu0 0.0
        %2849 = vmatpush2.msra.mxu0 %v2815
        %2850 = vmatprep.subr.mxu0 0.0
        %2851 = vmatpush2.msra.mxu0 %v2814
        %2852 = vmatprep.subr.mxu0 0.0
        %2853 = vmatpush2.msra.mxu0 %v2813
        %2854 = vmatprep.subr.mxu0 0.0
        %2855 = vmatpush2.msra.mxu0 %v2812
        %2856 = vmatprep.subr.mxu0 0.0
        %2857 = vmatpush2.msra.mxu0 %v2811
        %2858 = vmatprep.subr.mxu0 0.0
        %2859 = vmatpush2.msra.mxu0 %v2810
        %2860 = vmatprep.subr.mxu0 0.0
        %2861 = vmatpush2.msra.mxu0 %v2809
        %2862 = vmatprep.subr.mxu0 0.0
        %2863 = vmatpush2.msra.mxu0 %v2808
        %2864 = vmatprep.subr.mxu0 0.0
        %2865 = vmatpush2.msra.mxu0 %v2807
        %2866 = vmatprep.subr.mxu0 0.0
        %2867 = vmatpush2.msra.mxu0 %v2806
        %2868 = vmatprep.subr.mxu0 0.0
        %2869 = vmatpush2.msra.mxu0 %v2805
        %2870 = vmatprep.subr.mxu0 0.0
        %2871 = vmatpush2.msra.mxu0 %v2804
        %2872 = vmatprep.subr.mxu0 0.0
        %2873 = vmatpush2.msra.mxu0 %v2803
        %2874 = vmatprep.subr.mxu0 0.0
        %2875 = vmatpush2.msra.mxu0 %v2802
        %2876 = vmatprep.subr.mxu0 0.0
        %2877 = vmatpush2.msra.mxu0 %v2801
        %2878 = vmatprep.subr.mxu0 0.0
        %2879 = vmatpush2.msra.mxu0 %v2800
        %2880 = vmatprep.mubr.f32.mxu0 %v2752
        %2881 = vmatmul.mubr.f32.gmra.mxu0 %v2751
        %v2882 = vpop.f32.mrf.mxu0
        %v2883 = vadd.f32 0.0, %v2882
        %v2884 = vpop.f32.mrf.mxu0
        %2885 = vmatprep.mubr.f32.mxu0 %v2754
        %2886 = vmatmul.mubr.f32.gmra.mxu0 %v2753
        %v2887 = vpop.f32.mrf.mxu0
        %v2888 = vadd.f32 0.0, %v2887
        %v2889 = vpop.f32.mrf.mxu0
        %2890 = vmatprep.mubr.f32.mxu0 %v2756
        %2891 = vmatmul.mubr.f32.gmra.mxu0 %v2755
        %v2892 = vpop.f32.mrf.mxu0
        %v2893 = vadd.f32 0.0, %v2892
        %v2894 = vpop.f32.mrf.mxu0
        %2895 = vmatprep.mubr.f32.mxu0 %v2758
        %2896 = vmatmul.mubr.f32.gmra.mxu0 %v2757
        %v2897 = vpop.f32.mrf.mxu0
        %v2898 = vadd.f32 0.0, %v2897
        %v2899 = vpop.f32.mrf.mxu0
        %2900 = vmatprep.mubr.f32.mxu0 %v2760
        %2901 = vmatmul.mubr.f32.gmra.mxu0 %v2759
        %v2902 = vpop.f32.mrf.mxu0
        %v2903 = vadd.f32 0.0, %v2902
        %v2904 = vpop.f32.mrf.mxu0
        %2905 = vmatprep.mubr.f32.mxu0 %v2762
        %2906 = vmatmul.mubr.f32.gmra.mxu0 %v2761
        %v2907 = vpop.f32.mrf.mxu0
        %v2908 = vadd.f32 0.0, %v2907
        %v2909 = vpop.f32.mrf.mxu0
        %2910 = vmatprep.mubr.f32.mxu0 %v2764
        %2911 = vmatmul.mubr.f32.gmra.mxu0 %v2763
        %v2912 = vpop.f32.mrf.mxu0
        %v2913 = vadd.f32 0.0, %v2912
        %v2914 = vpop.f32.mrf.mxu0
        %2915 = vmatprep.mubr.f32.mxu0 %v2766
        %2916 = vmatmul.mubr.f32.gmra.mxu0 %v2765
        %v2917 = vpop.f32.mrf.mxu0
        %v2918 = vadd.f32 0.0, %v2917
        %v2919 = vpop.f32.mrf.mxu0
        %2920 = vmatprep.mubr.f32.mxu0 %v2768
        %2921 = vmatmul.mubr.f32.gmra.mxu0 %v2767
        %v2922 = vpop.f32.mrf.mxu0
        %v2923 = vadd.f32 0.0, %v2922
        %v2924 = vpop.f32.mrf.mxu0
        %2925 = vmatprep.mubr.f32.mxu0 %v2770
        %2926 = vmatmul.mubr.f32.gmra.mxu0 %v2769
        %v2927 = vpop.f32.mrf.mxu0
        %v2928 = vadd.f32 0.0, %v2927
        %v2929 = vpop.f32.mrf.mxu0
        %2930 = vmatprep.mubr.f32.mxu0 %v2772
        %2931 = vmatmul.mubr.f32.gmra.mxu0 %v2771
        %v2932 = vpop.f32.mrf.mxu0
        %v2933 = vadd.f32 0.0, %v2932
        %v2934 = vpop.f32.mrf.mxu0
        %2935 = vmatprep.mubr.f32.mxu0 %v2774
        %2936 = vmatmul.mubr.f32.gmra.mxu0 %v2773
        %v2937 = vpop.f32.mrf.mxu0
        %v2938 = vadd.f32 0.0, %v2937
        %v2939 = vpop.f32.mrf.mxu0
        %2940 = vmatprep.mubr.f32.mxu0 %v2776
        %2941 = vmatmul.mubr.f32.gmra.mxu0 %v2775
        %v2942 = vpop.f32.mrf.mxu0
        %v2943 = vadd.f32 0.0, %v2942
        %v2944 = vpop.f32.mrf.mxu0
        %2945 = vmatprep.mubr.f32.mxu0 %v2778
        %2946 = vmatmul.mubr.f32.gmra.mxu0 %v2777
        %v2947 = vpop.f32.mrf.mxu0
        %v2948 = vadd.f32 0.0, %v2947
        %v2949 = vpop.f32.mrf.mxu0
        %2950 = vmatprep.mubr.f32.mxu0 %v2780
        %2951 = vmatmul.mubr.f32.gmra.mxu0 %v2779
        %v2952 = vpop.f32.mrf.mxu0
        %v2953 = vadd.f32 0.0, %v2952
        %v2954 = vpop.f32.mrf.mxu0
        %2955 = vmatprep.mubr.f32.mxu0 %v2782
        %2956 = vmatmul.mubr.f32.gmra.mxu0 %v2781
        %v2957 = vpop.f32.mrf.mxu0
        %v2958 = vadd.f32 0.0, %v2957
        %v2959 = vpop.f32.mrf.mxu0
        %2960 = vdwg.mxu0
        %2961 = vmatprep.subr.mxu0 0.0
        %2962 = vmatpush1.msra.mxu0 0.0
        %2963 = vmatprep.subr.mxu0 0.0
        %2964 = vmatpush1.msra.mxu0 0.0
        %2965 = vmatprep.subr.mxu0 0.0
        %2966 = vmatpush1.msra.mxu0 0.0
        %2967 = vmatprep.subr.mxu0 0.0
        %2968 = vmatpush1.msra.mxu0 0.0
        %2969 = vmatprep.subr.mxu0 0.0
        %2970 = vmatpush1.msra.mxu0 0.0
        %2971 = vmatprep.subr.mxu0 0.0
        %2972 = vmatpush1.msra.mxu0 0.0
        %2973 = vmatprep.subr.mxu0 0.0
        %2974 = vmatpush1.msra.mxu0 0.0
        %2975 = vmatprep.subr.mxu0 0.0
        %2976 = vmatpush1.msra.mxu0 0.0
        %2977 = vmatprep.subr.mxu0 0.0
        %2978 = vmatpush1.msra.mxu0 0.0
        %2979 = vmatprep.subr.mxu0 0.0
        %2980 = vmatpush1.msra.mxu0 0.0
        %2981 = vmatprep.subr.mxu0 0.0
        %2982 = vmatpush1.msra.mxu0 0.0
        %2983 = vmatprep.subr.mxu0 0.0
        %2984 = vmatpush1.msra.mxu0 0.0
        %2985 = vmatprep.subr.mxu0 0.0
        %2986 = vmatpush1.msra.mxu0 0.0
        %2987 = vmatprep.subr.mxu0 0.0
        %2988 = vmatpush1.msra.mxu0 0.0
        %2989 = vmatprep.subr.mxu0 0.0
        %2990 = vmatpush1.msra.mxu0 0.0
        %2991 = vmatprep.subr.mxu0 0.0
        %2992 = vmatpush1.msra.mxu0 %v2783
        %2993 = vmatprep.subr.mxu0 0.0
        %2994 = vmatpush2.msra.mxu0 0.0
        %2995 = vmatprep.subr.mxu0 0.0
        %2996 = vmatpush2.msra.mxu0 0.0
        %2997 = vmatprep.subr.mxu0 0.0
        %2998 = vmatpush2.msra.mxu0 0.0
        %2999 = vmatprep.subr.mxu0 0.0
        %3000 = vmatpush2.msra.mxu0 0.0
        %3001 = vmatprep.subr.mxu0 0.0
        %3002 = vmatpush2.msra.mxu0 0.0
        %3003 = vmatprep.subr.mxu0 0.0
        %3004 = vmatpush2.msra.mxu0 0.0
        %3005 = vmatprep.subr.mxu0 0.0
        %3006 = vmatpush2.msra.mxu0 0.0
        %3007 = vmatprep.subr.mxu0 0.0
        %3008 = vmatpush2.msra.mxu0 0.0
        %3009 = vmatprep.subr.mxu0 0.0
        %3010 = vmatpush2.msra.mxu0 0.0
        %3011 = vmatprep.subr.mxu0 0.0
        %3012 = vmatpush2.msra.mxu0 0.0
        %3013 = vmatprep.subr.mxu0 0.0
        %3014 = vmatpush2.msra.mxu0 0.0
        %3015 = vmatprep.subr.mxu0 0.0
        %3016 = vmatpush2.msra.mxu0 0.0
        %3017 = vmatprep.subr.mxu0 0.0
        %3018 = vmatpush2.msra.mxu0 0.0
        %3019 = vmatprep.subr.mxu0 0.0
        %3020 = vmatpush2.msra.mxu0 0.0
        %3021 = vmatprep.subr.mxu0 0.0
        %3022 = vmatpush2.msra.mxu0 0.0
        %3023 = vmatprep.subr.mxu0 0.0
        %3024 = vmatpush2.msra.mxu0 0.0
        %3025 = vmatprep.mubr.f32.mxu0 0.0
        %3026 = vmatmul.mubr.f32.gmra.mxu0 %v665
        %v3027 = vpop.f32.mrf.mxu0
        %v3028 = vadd.f32 %v2883, %v3027
        %v3029 = vpop.f32.mrf.mxu0
        %3030 = vmatprep.mubr.f32.mxu0 0.0
        %3031 = vmatmul.mubr.f32.gmra.mxu0 %v668
        %v3032 = vpop.f32.mrf.mxu0
        %v3033 = vadd.f32 %v2888, %v3032
        %v3034 = vpop.f32.mrf.mxu0
        %3035 = vmatprep.mubr.f32.mxu0 0.0
        %3036 = vmatmul.mubr.f32.gmra.mxu0 %v671
        %v3037 = vpop.f32.mrf.mxu0
        %v3038 = vadd.f32 %v2893, %v3037
        %v3039 = vpop.f32.mrf.mxu0
        %3040 = vmatprep.mubr.f32.mxu0 0.0
        %3041 = vmatmul.mubr.f32.gmra.mxu0 %v674
        %v3042 = vpop.f32.mrf.mxu0
        %v3043 = vadd.f32 %v2898, %v3042
        %v3044 = vpop.f32.mrf.mxu0
        %3045 = vmatprep.mubr.f32.mxu0 0.0
        %3046 = vmatmul.mubr.f32.gmra.mxu0 %v677
        %v3047 = vpop.f32.mrf.mxu0
        %v3048 = vadd.f32 %v2903, %v3047
        %v3049 = vpop.f32.mrf.mxu0
        %3050 = vmatprep.mubr.f32.mxu0 0.0
        %3051 = vmatmul.mubr.f32.gmra.mxu0 %v680
        %v3052 = vpop.f32.mrf.mxu0
        %v3053 = vadd.f32 %v2908, %v3052
        %v3054 = vpop.f32.mrf.mxu0
        %3055 = vmatprep.mubr.f32.mxu0 0.0
        %3056 = vmatmul.mubr.f32.gmra.mxu0 %v683
        %v3057 = vpop.f32.mrf.mxu0
        %v3058 = vadd.f32 %v2913, %v3057
        %v3059 = vpop.f32.mrf.mxu0
        %3060 = vmatprep.mubr.f32.mxu0 0.0
        %3061 = vmatmul.mubr.f32.gmra.mxu0 %v686
        %v3062 = vpop.f32.mrf.mxu0
        %v3063 = vadd.f32 %v2918, %v3062
        %v3064 = vpop.f32.mrf.mxu0
        %3065 = vmatprep.mubr.f32.mxu0 0.0
        %3066 = vmatmul.mubr.f32.gmra.mxu0 %v689
        %v3067 = vpop.f32.mrf.mxu0
        %v3068 = vadd.f32 %v2923, %v3067
        %v3069 = vpop.f32.mrf.mxu0
        %3070 = vmatprep.mubr.f32.mxu0 0.0
        %3071 = vmatmul.mubr.f32.gmra.mxu0 %v692
        %v3072 = vpop.f32.mrf.mxu0
        %v3073 = vadd.f32 %v2928, %v3072
        %v3074 = vpop.f32.mrf.mxu0
        %3075 = vmatprep.mubr.f32.mxu0 0.0
        %3076 = vmatmul.mubr.f32.gmra.mxu0 %v695
        %v3077 = vpop.f32.mrf.mxu0
        %v3078 = vadd.f32 %v2933, %v3077
        %v3079 = vpop.f32.mrf.mxu0
        %3080 = vmatprep.mubr.f32.mxu0 0.0
        %3081 = vmatmul.mubr.f32.gmra.mxu0 %v698
        %v3082 = vpop.f32.mrf.mxu0
        %v3083 = vadd.f32 %v2938, %v3082
        %v3084 = vpop.f32.mrf.mxu0
        %3085 = vmatprep.mubr.f32.mxu0 0.0
        %3086 = vmatmul.mubr.f32.gmra.mxu0 %v701
        %v3087 = vpop.f32.mrf.mxu0
        %v3088 = vadd.f32 %v2943, %v3087
        %v3089 = vpop.f32.mrf.mxu0
        %3090 = vmatprep.mubr.f32.mxu0 0.0
        %3091 = vmatmul.mubr.f32.gmra.mxu0 %v704
        %v3092 = vpop.f32.mrf.mxu0
        %v3093 = vadd.f32 %v2948, %v3092
        %v3094 = vpop.f32.mrf.mxu0
        %3095 = vmatprep.mubr.f32.mxu0 0.0
        %3096 = vmatmul.mubr.f32.gmra.mxu0 %v707
        %v3097 = vpop.f32.mrf.mxu0
        %v3098 = vadd.f32 %v2953, %v3097
        %v3099 = vpop.f32.mrf.mxu0
        %3100 = vmatprep.mubr.f32.mxu0 0.0
        %3101 = vmatmul.mubr.f32.gmra.mxu0 %v710
        %v3102 = vpop.f32.mrf.mxu0
        %v3103 = vadd.f32 %v2958, %v3102
        %v3104 = vpop.f32.mrf.mxu0
        %3105 = vdwg.mxu0
        %3106 = vst.msk [vmem:[#allocation2] sm:$0xff] %vm663, %v3028
        %3107 = vst.msk [vmem:[#allocation2 + $0x8] sm:$0xff] %vm663, %v3033
        %3108 = vst.msk [vmem:[#allocation2 + $0x10] sm:$0xff] %vm663, %v3038
        %3109 = vst.msk [vmem:[#allocation2 + $0x18] sm:$0xff] %vm663, %v3043
        %3110 = vst.msk [vmem:[#allocation2 + $0x20] sm:$0xff] %vm663, %v3048
        %3111 = vst.msk [vmem:[#allocation2 + $0x28] sm:$0xff] %vm663, %v3053
        %3112 = vst.msk [vmem:[#allocation2 + $0x30] sm:$0xff] %vm663, %v3058
        %3113 = vst.msk [vmem:[#allocation2 + $0x38] sm:$0xff] %vm663, %v3063
        %3114 = vst.msk [vmem:[#allocation2 + $0x40] sm:$0xff] %vm663, %v3068
        %3115 = vst.msk [vmem:[#allocation2 + $0x48] sm:$0xff] %vm663, %v3073
        %3116 = vst.msk [vmem:[#allocation2 + $0x50] sm:$0xff] %vm663, %v3078
        %3117 = vst.msk [vmem:[#allocation2 + $0x58] sm:$0xff] %vm663, %v3083
        %3118 = vst.msk [vmem:[#allocation2 + $0x60] sm:$0xff] %vm663, %v3088
        %3119 = vst.msk [vmem:[#allocation2 + $0x68] sm:$0xff] %vm663, %v3093
        %3120 = vst.msk [vmem:[#allocation2 + $0x70] sm:$0xff] %vm663, %v3098
        %3121 = vst.msk [vmem:[#allocation2 + $0x78] sm:$0xff] %vm663, %v3103
        // Predicated region
        $region109: #{tpu_custom_call.1} parent=79 // pred_check
          %p3122 = pneg %p596
        $region110: #{tpu_custom_call.1} parent=79 // pred_check_branch
          %3124 = sbr.rel (%p3122) target = $region112
        $region111: #{tpu_custom_call.1} parent=79 // pred_region
          %3125 = vst.msk [vmem:[%s594] sm:$0xff] %vm663, %v3028
          %3126 = vst.msk [vmem:[%s594 + $0x8] sm:$0xff] %vm663, %v3033
          %3127 = vst.msk [vmem:[%s594 + $0x10] sm:$0xff] %vm663, %v3038
          %3128 = vst.msk [vmem:[%s594 + $0x18] sm:$0xff] %vm663, %v3043
          %3129 = vst.msk [vmem:[%s594 + $0x20] sm:$0xff] %vm663, %v3048
          %3130 = vst.msk [vmem:[%s594 + $0x28] sm:$0xff] %vm663, %v3053
          %3131 = vst.msk [vmem:[%s594 + $0x30] sm:$0xff] %vm663, %v3058
          %3132 = vst.msk [vmem:[%s594 + $0x38] sm:$0xff] %vm663, %v3063
          %3133 = vst.msk [vmem:[%s594 + $0x40] sm:$0xff] %vm663, %v3068
          %3134 = vst.msk [vmem:[%s594 + $0x48] sm:$0xff] %vm663, %v3073
          %3135 = vst.msk [vmem:[%s594 + $0x50] sm:$0xff] %vm663, %v3078
          %3136 = vst.msk [vmem:[%s594 + $0x58] sm:$0xff] %vm663, %v3083
          %3137 = vst.msk [vmem:[%s594 + $0x60] sm:$0xff] %vm663, %v3088
          %3138 = vst.msk [vmem:[%s594 + $0x68] sm:$0xff] %vm663, %v3093
          %3139 = vst.msk [vmem:[%s594 + $0x70] sm:$0xff] %vm663, %v3098
          %3140 = vst.msk [vmem:[%s594 + $0x78] sm:$0xff] %vm663, %v3103
        $region112: #{tpu_custom_call.1} parent=79 // pred_fallthru
          _
        %s3141 = smul.u32 16, %s34
        %p3142 = scmp.lt.s32.totalorder %s3141, 31
        %s3143 = scalar_select %p3142, %s3141, 31
        %s3144 = smul.addr %s3143, 8
        %s3145 = scalar_lea.vmem %s15, %s3144
        // Predicated region
        $region113: #{tpu_custom_call.1} parent=79 // pred_check
          %p3146 = pneg %p380
        $region114: #{tpu_custom_call.1} parent=79 // pred_check_branch
          %3148 = sbr.rel (%p3146) target = $region116
        $region115: #{tpu_custom_call.1} parent=79 // pred_region
          %s3149 = smul.u32 16, %s34
        $region116: #{tpu_custom_call.1} parent=79 // pred_fallthru
          _
      $region80: #{tpu_custom_call.1} parent=5 // pred_fallthru
        _
      %p3150 = scmp.le.s32.totalorder 2, %s25
      // Predicated region
      $region117: #{tpu_custom_call.1} parent=5 // pred_check
        %p3151 = pneg %p3150
      $region118: #{tpu_custom_call.1} parent=5 // pred_check_branch
        %3153 = sbr.rel (%p3151) target = $region120
      $region119: #{tpu_custom_call.1} parent=5 // pred_region
        %s3154 = ssub.s32 %s25, 2
        // Predicated region
        $region121: #{tpu_custom_call.1} parent=119 // pred_check
          %p3155 = pneg %p386
        $region122: #{tpu_custom_call.1} parent=119 // pred_check_branch
          %3157 = sbr.rel (%p3155) target = $region124
        $region123: #{tpu_custom_call.1} parent=119 // pred_region
          %s3158 = smul.u32 16, %s36
          %p3159 = scmp.lt.s32.totalorder %s3158, 31
          %s3160 = scalar_select %p3159, %s3158, 31
          %s3161 = smul.addr %s3160, 8
          %s3162 = scalar_lea.vmem %s15, %s3161
        $region124: #{tpu_custom_call.1} parent=119 // pred_fallthru
          _
      $region120: #{tpu_custom_call.1} parent=5 // pred_fallthru
        _
    $region6: #{tpu_custom_call.1} parent=1 // loop_footer
      %s29 = sadd.s32 1, %s25
    $region7: #{tpu_custom_call.1} parent=1 // loop_footer_branch
      %24 = sbr.rel target = $region3
    $region8: #{tpu_custom_call.1} parent=1 // loop_exit
      _
    %3163 = vsyncpa [#allocation4], 1
    %s3164 = scalar_lea.sflag [#allocation4], 1
    %3165 = vsyncpa %s3164, 1
    %3166 = vsyncpa [#allocation6], 1
    %3167 = vsyncpa [#allocation9], 1
    %3168 = vsyncpa [#allocation12], 1

</llo_original>
